<compile_context>
chip_gen: v7x
topology: tpu7x:2x2x1
jax: 0.10.0
libtpu: 0.0.40
codegen_flags: <defaults>
</compile_context>

<pallas_src>
import math
import functools

import jax
import jax.numpy as jnp
from jax.experimental import pallas as pl
from jax.experimental.pallas import tpu as pltpu

# ---------------- model config (small, consistent with the module) -----------
BATCH = 4            # must be even (pairs for the contrastive loss)
SEQ = 8
HIDDEN = 32
NUM_HEADS = 4
HEAD_DIM = HIDDEN // NUM_HEADS
INTERMEDIATE = 64
NUM_LAYERS = 2
VOCAB = 100
TYPE_VOCAB = 2
MAX_POS = 16
LN_EPS = 1e-12

PAIR = 2                      # sequences per grid program (one contrastive pair)
ROWS = PAIR * SEQ             # activation rows handled per program

MATMUL_DTYPE = jnp.bfloat16   # MXU-native on v6e/v7x; also fine on v5e


# ---------------- the single fused Pallas kernel ------------------------------
def _fused_reranker_kernel(
        x_ref, mask_ref, emb_g_ref, emb_b_ref,
        wqkv_ref, bqkv_ref, wo_ref, bo_ref, ln1g_ref, ln1b_ref,
        w1_ref, b1_ref, w2_ref, b2_ref, ln2g_ref, ln2b_ref,
        pool_w_ref, pool_b_ref, cls_w_ref, cls_b_ref,
        logits_ref, loss_ref):
    """One program = one (positive, negative) sequence pair (ROWS x HIDDEN)."""
    scale = 1.0 / math.sqrt(HEAD_DIM)

    def layernorm(y, g, b):
        mu = jnp.mean(y, axis=-1, keepdims=True)
        var = jnp.mean(jnp.square(y - mu), axis=-1, keepdims=True)
        return (y - mu) * jax.lax.rsqrt(var + LN_EPS) * g + b

    def mm(a, w_bf16):
        # bf16 MXU matmul, f32 accumulation.
        return jnp.dot(a.astype(MATMUL_DTYPE), w_bf16,
                       preferred_element_type=jnp.float32)

    # --- embedding LayerNorm (embedding sum computed in XLA, passed in) ---
    x = layernorm(x_ref[...], emb_g_ref[...], emb_b_ref[...])        # (ROWS, H)

    # additive attention mask, broadcast over query rows: (PAIR, 1, S)
    add_mask = ((1.0 - mask_ref[0]) * -10000.0)[:, None, :]

    # --- transformer layers (static unroll; weights stay VMEM-resident) ---
    for l in range(NUM_LAYERS):
        qkv = mm(x, wqkv_ref[l]) + bqkv_ref[l]                       # (ROWS, 3H)

        ctx_heads = []
        for h in range(NUM_HEADS):
            q = qkv[:, h * HEAD_DIM:(h + 1) * HEAD_DIM]
            k = qkv[:, HIDDEN + h * HEAD_DIM:HIDDEN + (h + 1) * HEAD_DIM]
            v = qkv[:, 2 * HIDDEN + h * HEAD_DIM:2 * HIDDEN + (h + 1) * HEAD_DIM]
            qh = q.reshape(PAIR, SEQ, HEAD_DIM).astype(MATMUL_DTYPE)
            kh = k.reshape(PAIR, SEQ, HEAD_DIM).astype(MATMUL_DTYPE)
            vh = v.reshape(PAIR, SEQ, HEAD_DIM).astype(MATMUL_DTYPE)

            s = jnp.einsum("bqd,bkd->bqk", qh, kh,
                           preferred_element_type=jnp.float32)
            s = s * scale + add_mask
            s = s - jnp.max(s, axis=-1, keepdims=True)
            p = jnp.exp(s)
            p = p / jnp.sum(p, axis=-1, keepdims=True)
            ctx = jnp.einsum("bqk,bkd->bqd", p.astype(MATMUL_DTYPE), vh,
                             preferred_element_type=jnp.float32)
            ctx_heads.append(ctx.reshape(ROWS, HEAD_DIM))
        ctx = jnp.concatenate(ctx_heads, axis=-1)                    # (ROWS, H)

        attn_out = mm(ctx, wo_ref[l]) + bo_ref[l]
        x = layernorm(attn_out + x, ln1g_ref[l], ln1b_ref[l])

        # TODO(synk): jax.nn.gelu is the tanh approximation; HF BERT uses erf GELU.
        hmid = jax.nn.gelu(mm(x, w1_ref[l]) + b1_ref[l])
        ffn = mm(hmid, w2_ref[l]) + b2_ref[l]
        x = layernorm(ffn + x, ln2g_ref[l], ln2b_ref[l])

    # --- pooler + classifier ([CLS] rows) ---
    cls = x.reshape(PAIR, SEQ, HIDDEN)[:, 0, :]                      # (PAIR, H)
    pooled = jnp.tanh(mm(cls, pool_w_ref[...]) + pool_b_ref[...])    # (PAIR, H)
    logits = mm(pooled, cls_w_ref[...]) + cls_b_ref[...]             # (PAIR, 1)
    logits_ref[...] = logits.reshape(1, PAIR, 1).astype(logits_ref.dtype)

    # --- per-pair cross-entropy with label 0: lse(s_pos, s_neg) - s_pos ---
    s_pos = logits[0:1, :]
    s_neg = logits[1:2, :]
    m = jnp.maximum(s_pos, s_neg)
    lse = m + jnp.log(jnp.exp(s_pos - m) + jnp.exp(s_neg - m))
    loss_ref[...] = (lse - s_pos).reshape(1, 1, 1)


# ---------------- parameter construction (deterministic) ---------------------
def init_params(key):
    def normal(key, shape, std=0.02):
        return (std * jax.random.normal(key, shape)).astype(jnp.float32)

    keys = iter(jax.random.split(key, 64))
    p = {
        "word_emb": normal(next(keys), (VOCAB, HIDDEN)),
        "pos_emb": normal(next(keys), (MAX_POS, HIDDEN)),
        "type_emb": normal(next(keys), (TYPE_VOCAB, HIDDEN)),
        "emb_ln_g": jnp.ones((HIDDEN,), jnp.float32),
        "emb_ln_b": jnp.zeros((HIDDEN,), jnp.float32),
        "layers": [],
        "pool_w": normal(next(keys), (HIDDEN, HIDDEN)),
        "pool_b": jnp.zeros((HIDDEN,), jnp.float32),
        "cls_w": normal(next(keys), (HIDDEN, 1)),
        "cls_b": jnp.zeros((1,), jnp.float32),
    }
    for _ in range(NUM_LAYERS):
        layer = {
            "wq": normal(next(keys), (HIDDEN, HIDDEN)),
            "bq": jnp.zeros((HIDDEN,), jnp.float32),
            "wk": normal(next(keys), (HIDDEN, HIDDEN)),
            "bk": jnp.zeros((HIDDEN,), jnp.float32),
            "wv": normal(next(keys), (HIDDEN, HIDDEN)),
            "bv": jnp.zeros((HIDDEN,), jnp.float32),
            "wo": normal(next(keys), (HIDDEN, HIDDEN)),
            "bo": jnp.zeros((HIDDEN,), jnp.float32),
            "ln1_g": jnp.ones((HIDDEN,), jnp.float32),
            "ln1_b": jnp.zeros((HIDDEN,), jnp.float32),
            "w1": normal(next(keys), (HIDDEN, INTERMEDIATE)),
            "b1": jnp.zeros((INTERMEDIATE,), jnp.float32),
            "w2": normal(next(keys), (INTERMEDIATE, HIDDEN)),
            "b2": jnp.zeros((HIDDEN,), jnp.float32),
            "ln2_g": jnp.ones((HIDDEN,), jnp.float32),
            "ln2_b": jnp.zeros((HIDDEN,), jnp.float32),
        }
        p["layers"].append(layer)
    return p


def pack_params(raw):
    """Stack per-layer weights, pre-fuse QKV, cast matmul weights to bf16."""
    L = raw["layers"]

    def stack(name):
        return jnp.stack([lyr[name] for lyr in L], axis=0)

    packed = {
        "word_emb": raw["word_emb"],
        "pos_emb": raw["pos_emb"],
        "type_emb": raw["type_emb"],
        "emb_ln_g": raw["emb_ln_g"].reshape(1, HIDDEN),
        "emb_ln_b": raw["emb_ln_b"].reshape(1, HIDDEN),
        "wqkv": jnp.stack(
            [jnp.concatenate([l["wq"], l["wk"], l["wv"]], axis=1) for l in L]
        ).astype(MATMUL_DTYPE),                                  # (L, H, 3H)
        "bqkv": jnp.stack(
            [jnp.concatenate([l["bq"], l["bk"], l["bv"]], axis=0) for l in L]
        )[:, None, :],                                           # (L, 1, 3H)
        "wo": stack("wo").astype(MATMUL_DTYPE),
        "bo": stack("bo")[:, None, :],
        "ln1_g": stack("ln1_g")[:, None, :],
        "ln1_b": stack("ln1_b")[:, None, :],
        "w1": stack("w1").astype(MATMUL_DTYPE),
        "b1": stack("b1")[:, None, :],
        "w2": stack("w2").astype(MATMUL_DTYPE),
        "b2": stack("b2")[:, None, :],
        "ln2_g": stack("ln2_g")[:, None, :],
        "ln2_b": stack("ln2_b")[:, None, :],
        "pool_w": raw["pool_w"].astype(MATMUL_DTYPE),
        "pool_b": raw["pool_b"].reshape(1, HIDDEN),
        "cls_w": raw["cls_w"].astype(MATMUL_DTYPE),
        "cls_b": raw["cls_b"].reshape(1, 1),
    }
    return packed


# ---------------- forward pass ------------------------------------------------
def _fused_forward(pp, input_ids, token_type_ids, attention_mask):
    B, S = input_ids.shape
    assert B % 2 == 0 and S == SEQ

    # TODO(synk): embedding-table gathers stay in XLA (data-dependent gather;
    #             no clean BlockSpec equivalent worth a kernel at this scale).
    pos_ids = jnp.arange(S)
    emb = (jnp.take(pp["word_emb"], input_ids, axis=0)
           + jnp.take(pp["type_emb"], token_type_ids, axis=0)
           + jnp.take(pp["pos_emb"], pos_ids, axis=0)[None, :, :])
    x = emb.reshape(B * S, HIDDEN).astype(jnp.float32)
    mask_f = attention_mask.astype(jnp.float32).reshape(B // 2, PAIR, S)

    def whole(shape):
        nd = len(shape)
        return pl.BlockSpec(shape, lambda i, _nd=nd: (0,) * _nd)

    in_specs = [
        pl.BlockSpec((ROWS, HIDDEN), lambda i: (i, 0)),          # x: one pair
        pl.BlockSpec((1, PAIR, SEQ), lambda i: (i, 0, 0)),       # attention mask
        whole((1, HIDDEN)), whole((1, HIDDEN)),                  # emb LN g/b
        whole((NUM_LAYERS, HIDDEN, 3 * HIDDEN)),                 # wqkv
        whole((NUM_LAYERS, 1, 3 * HIDDEN)),                      # bqkv
        whole((NUM_LAYERS, HIDDEN, HIDDEN)),                     # wo
        whole((NUM_LAYERS, 1, HIDDEN)),                          # bo
        whole((NUM_LAYERS, 1, HIDDEN)),                          # ln1_g
        whole((NUM_LAYERS, 1, HIDDEN)),                          # ln1_b
        whole((NUM_LAYERS, HIDDEN, INTERMEDIATE)),               # w1
        whole((NUM_LAYERS, 1, INTERMEDIATE)),                    # b1
        whole((NUM_LAYERS, INTERMEDIATE, HIDDEN)),               # w2
        whole((NUM_LAYERS, 1, HIDDEN)),                          # b2
        whole((NUM_LAYERS, 1, HIDDEN)),                          # ln2_g
        whole((NUM_LAYERS, 1, HIDDEN)),                          # ln2_b
        whole((HIDDEN, HIDDEN)), whole((1, HIDDEN)),             # pooler
        whole((HIDDEN, 1)), whole((1, 1)),                       # classifier
    ]

    logits3, pair_loss = pl.pallas_call(
        _fused_reranker_kernel,
        out_shape=(jax.ShapeDtypeStruct((B // 2, PAIR, 1), jnp.float32),
                   jax.ShapeDtypeStruct((B // 2, 1, 1), jnp.float32)),
        grid=(B // 2,),
        in_specs=in_specs,
        out_specs=(pl.BlockSpec((1, PAIR, 1), lambda i: (i, 0, 0)),
                   pl.BlockSpec((1, 1, 1), lambda i: (i, 0, 0))),
        compiler_params=pltpu.CompilerParams(
            dimension_semantics=("parallel",)),   # batch-pair split (2 TCs on v7x)
    )(x, mask_f,
      pp["emb_ln_g"], pp["emb_ln_b"],
      pp["wqkv"], pp["bqkv"], pp["wo"], pp["bo"],
      pp["ln1_g"], pp["ln1_b"], pp["w1"], pp["b1"],
      pp["w2"], pp["b2"], pp["ln2_g"], pp["ln2_b"],
      pp["pool_w"], pp["pool_b"], pp["cls_w"], pp["cls_b"])

    return logits3.reshape(B, 1), pair_loss.reshape(B // 2)


@functools.partial(jax.jit, static_argnames=("is_training",))
def reranker_forward(params, input_ids, token_type_ids, attention_mask,
                     weight=None, is_training=True):
    B = input_ids.shape[0]
    logits, pair_loss = _fused_forward(params, input_ids, token_type_ids,
                                       attention_mask)
    output = logits
    if is_training:
        if weight is None:
            weight = jnp.ones((B // 2,), jnp.float32)
        # Final 2-element reductions stay in XLA so the kernel grid can run the
        # two pairs on separate TensorCores (v7x) without cross-core reduction.
        loss_origin = jnp.sum(pair_loss) / (B // 2)
        loss_weight = jnp.dot(weight, pair_loss) / (B // 2)
        output = (loss_origin, loss_weight, logits)
    return output


# ---------------- main --------------------------------------------------------
if __name__ == "__main__":
    key = jax.random.PRNGKey(0)
    pkey, ikey, tkey = jax.random.split(key, 3)

    params = pack_params(init_params(pkey))

    input_ids = jax.random.randint(ikey, (BATCH, SEQ), 0, VOCAB, dtype=jnp.int32)
    token_type_ids = jax.random.randint(tkey, (BATCH, SEQ), 0, TYPE_VOCAB,
                                        dtype=jnp.int32)
    attention_mask = jnp.ones((BATCH, SEQ), jnp.int32)

    loss_origin, loss_weight, logits = reranker_forward(
        params, input_ids, token_type_ids, attention_mask,
        weight=None, is_training=True)

    jax.block_until_ready((loss_origin, loss_weight, logits))
    assert logits.shape == (BATCH, 1)
    assert loss_origin.shape == () and loss_weight.shape == ()
    print("KERNEL_OK")
</pallas_src>

<mosaic_0001>
module attributes {stable_mosaic.version = 11 : i64} {
  func.func @_fused_reranker_kernel(%arg0: i32, %arg1: memref<16x32xf32, #tpu.memory_space<vmem>>, %arg2: memref<1x2x8xf32, #tpu.memory_space<vmem>>, %arg3: memref<1x32xf32, #tpu.memory_space<vmem>>, %arg4: memref<1x32xf32, #tpu.memory_space<vmem>>, %arg5: memref<2x32x96xbf16, #tpu.memory_space<vmem>>, %arg6: memref<2x1x96xf32, #tpu.memory_space<vmem>>, %arg7: memref<2x32x32xbf16, #tpu.memory_space<vmem>>, %arg8: memref<2x1x32xf32, #tpu.memory_space<vmem>>, %arg9: memref<2x1x32xf32, #tpu.memory_space<vmem>>, %arg10: memref<2x1x32xf32, #tpu.memory_space<vmem>>, %arg11: memref<2x32x64xbf16, #tpu.memory_space<vmem>>, %arg12: memref<2x1x64xf32, #tpu.memory_space<vmem>>, %arg13: memref<2x64x32xbf16, #tpu.memory_space<vmem>>, %arg14: memref<2x1x32xf32, #tpu.memory_space<vmem>>, %arg15: memref<2x1x32xf32, #tpu.memory_space<vmem>>, %arg16: memref<2x1x32xf32, #tpu.memory_space<vmem>>, %arg17: memref<32x32xbf16, #tpu.memory_space<vmem>>, %arg18: memref<1x32xf32, #tpu.memory_space<vmem>>, %arg19: memref<32x1xbf16, #tpu.memory_space<vmem>>, %arg20: memref<1x1xf32, #tpu.memory_space<vmem>>, %arg21: memref<1x2x1xf32, #tpu.memory_space<vmem>>, %arg22: memref<1x1x1xf32, #tpu.memory_space<vmem>>) attributes {dimension_semantics = [#tpu.dimension_semantics<parallel>], iteration_bounds = array<i64: 2>, scalar_prefetch = 0 : i64, scratch_operands = 0 : i64, tpu.core_type = #tpu.core_type<tc>, window_params = [{transform_indices = @transform_0, window_bounds = array<i64: 16, 32>}, {transform_indices = @transform_1, window_bounds = array<i64: 1, 2, 8>}, {pipeline_mode = #tpu.pipeline_mode<synchronous>, transform_indices = @transform_2, window_bounds = array<i64: 1, 32>}, {pipeline_mode = #tpu.pipeline_mode<synchronous>, transform_indices = @transform_3, window_bounds = array<i64: 1, 32>}, {pipeline_mode = #tpu.pipeline_mode<synchronous>, transform_indices = @transform_4, window_bounds = array<i64: 2, 32, 96>}, {pipeline_mode = #tpu.pipeline_mode<synchronous>, transform_indices = @transform_5, window_bounds = array<i64: 2, 1, 96>}, {pipeline_mode = #tpu.pipeline_mode<synchronous>, transform_indices = @transform_6, window_bounds = array<i64: 2, 32, 32>}, {pipeline_mode = #tpu.pipeline_mode<synchronous>, transform_indices = @transform_7, window_bounds = array<i64: 2, 1, 32>}, {pipeline_mode = #tpu.pipeline_mode<synchronous>, transform_indices = @transform_8, window_bounds = array<i64: 2, 1, 32>}, {pipeline_mode = #tpu.pipeline_mode<synchronous>, transform_indices = @transform_9, window_bounds = array<i64: 2, 1, 32>}, {pipeline_mode = #tpu.pipeline_mode<synchronous>, transform_indices = @transform_10, window_bounds = array<i64: 2, 32, 64>}, {pipeline_mode = #tpu.pipeline_mode<synchronous>, transform_indices = @transform_11, window_bounds = array<i64: 2, 1, 64>}, {pipeline_mode = #tpu.pipeline_mode<synchronous>, transform_indices = @transform_12, window_bounds = array<i64: 2, 64, 32>}, {pipeline_mode = #tpu.pipeline_mode<synchronous>, transform_indices = @transform_13, window_bounds = array<i64: 2, 1, 32>}, {pipeline_mode = #tpu.pipeline_mode<synchronous>, transform_indices = @transform_14, window_bounds = array<i64: 2, 1, 32>}, {pipeline_mode = #tpu.pipeline_mode<synchronous>, transform_indices = @transform_15, window_bounds = array<i64: 2, 1, 32>}, {pipeline_mode = #tpu.pipeline_mode<synchronous>, transform_indices = @transform_16, window_bounds = array<i64: 32, 32>}, {pipeline_mode = #tpu.pipeline_mode<synchronous>, transform_indices = @transform_17, window_bounds = array<i64: 1, 32>}, {pipeline_mode = #tpu.pipeline_mode<synchronous>, transform_indices = @transform_18, window_bounds = array<i64: 32, 1>}, {pipeline_mode = #tpu.pipeline_mode<synchronous>, transform_indices = @transform_19, window_bounds = array<i64: 1, 1>}, {transform_indices = @transform_20, window_bounds = array<i64: 1, 2, 1>}, {transform_indices = @transform_21, window_bounds = array<i64: 1, 1, 1>}]} {
    %c0 = arith.constant 0 : index
    %c0_0 = arith.constant 0 : index
    %0 = vector.load %arg1[%c0, %c0_0] : memref<16x32xf32, #tpu.memory_space<vmem>>, vector<16x32xf32>
    %c0_1 = arith.constant 0 : index
    %c0_2 = arith.constant 0 : index
    %1 = vector.load %arg3[%c0_1, %c0_2] : memref<1x32xf32, #tpu.memory_space<vmem>>, vector<1x32xf32>
    %c0_3 = arith.constant 0 : index
    %c0_4 = arith.constant 0 : index
    %2 = vector.load %arg4[%c0_3, %c0_4] : memref<1x32xf32, #tpu.memory_space<vmem>>, vector<1x32xf32>
    %cst = arith.constant dense<0.000000e+00> : vector<16xf32>
    %3 = vector.multi_reduction <add>, %0, %cst [1] : vector<16x32xf32> to vector<16xf32>
    %4 = vector.shape_cast %3 : vector<16xf32> to vector<16x1xf32>
    %cst_5 = arith.constant 3.200000e+01 : f32
    %5 = vector.broadcast %cst_5 : f32 to vector<16x1xf32>
    %6 = arith.divf %4, %5 : vector<16x1xf32>
    %7 = vector.broadcast %6 : vector<16x1xf32> to vector<16x32xf32>
    %8 = arith.subf %0, %7 : vector<16x32xf32>
    %9 = arith.mulf %8, %8 : vector<16x32xf32>
    %cst_6 = arith.constant dense<0.000000e+00> : vector<16xf32>
    %10 = vector.multi_reduction <add>, %9, %cst_6 [1] : vector<16x32xf32> to vector<16xf32>
    %11 = vector.shape_cast %10 : vector<16xf32> to vector<16x1xf32>
    %cst_7 = arith.constant 3.200000e+01 : f32
    %12 = vector.broadcast %cst_7 : f32 to vector<16x1xf32>
    %13 = arith.divf %11, %12 : vector<16x1xf32>
    %14 = vector.broadcast %6 : vector<16x1xf32> to vector<16x32xf32>
    %15 = arith.subf %0, %14 : vector<16x32xf32>
    %cst_8 = arith.constant 9.99999996E-13 : f32
    %16 = vector.broadcast %cst_8 : f32 to vector<16x1xf32>
    %17 = arith.addf %13, %16 : vector<16x1xf32>
    %18 = math.rsqrt %17 : vector<16x1xf32>
    %19 = vector.broadcast %18 : vector<16x1xf32> to vector<16x32xf32>
    %20 = arith.mulf %15, %19 : vector<16x32xf32>
    %21 = vector.broadcast %1 : vector<1x32xf32> to vector<16x32xf32>
    %22 = arith.mulf %20, %21 : vector<16x32xf32>
    %23 = vector.broadcast %2 : vector<1x32xf32> to vector<16x32xf32>
    %24 = arith.addf %22, %23 : vector<16x32xf32>
    %c0_9 = arith.constant 0 : index
    %c0_10 = arith.constant 0 : index
    %c0_11 = arith.constant 0 : index
    %25 = vector.load %arg2[%c0_9, %c0_10, %c0_11] : memref<1x2x8xf32, #tpu.memory_space<vmem>>, vector<1x2x8xf32>
    %26 = vector.shape_cast %25 : vector<1x2x8xf32> to vector<2x8xf32>
    %cst_12 = arith.constant 1.000000e+00 : f32
    %27 = vector.broadcast %cst_12 : f32 to vector<2x8xf32>
    %28 = arith.subf %27, %26 : vector<2x8xf32>
    %cst_13 = arith.constant -1.000000e+04 : f32
    %29 = vector.broadcast %cst_13 : f32 to vector<2x8xf32>
    %30 = arith.mulf %28, %29 : vector<2x8xf32>
    %31 = vector.shape_cast %30 : vector<2x8xf32> to vector<2x1x8xf32>
    %c0_14 = arith.constant 0 : index
    %c0_15 = arith.constant 0 : index
    %c0_16 = arith.constant 0 : index
    %32 = vector.load %arg5[%c0_14, %c0_15, %c0_16] : memref<2x32x96xbf16, #tpu.memory_space<vmem>>, vector<1x32x96xbf16>
    %33 = vector.shape_cast %32 : vector<1x32x96xbf16> to vector<32x96xbf16>
    %34 = arith.truncf %24 : vector<16x32xf32> to vector<16x32xbf16>
    %cst_17 = arith.constant dense<0.000000e+00> : vector<16x96xf32>
    %35 = tpu.matmul %34, %33, %cst_17 {dimension_numbers = #tpu.dot_dimension_numbers<[1], [0], [0], [1], [0, 0, 1, 1], [], []>} : vector<16x32xbf16>, vector<32x96xbf16>, vector<16x96xf32> -> vector<16x96xf32>
    %c0_18 = arith.constant 0 : index
    %c0_19 = arith.constant 0 : index
    %c0_20 = arith.constant 0 : index
    %36 = vector.load %arg6[%c0_18, %c0_19, %c0_20] : memref<2x1x96xf32, #tpu.memory_space<vmem>>, vector<1x1x96xf32>
    %37 = vector.shape_cast %36 : vector<1x1x96xf32> to vector<1x96xf32>
    %38 = vector.broadcast %37 : vector<1x96xf32> to vector<16x96xf32>
    %39 = arith.addf %35, %38 : vector<16x96xf32>
    %40 = vector.extract_strided_slice %39 {offsets = [0, 0], sizes = [16, 8], strides = [1, 1]} : vector<16x96xf32> to vector<16x8xf32>
    %41 = vector.extract_strided_slice %39 {offsets = [0, 32], sizes = [16, 8], strides = [1, 1]} : vector<16x96xf32> to vector<16x8xf32>
    %42 = vector.extract_strided_slice %39 {offsets = [0, 64], sizes = [16, 8], strides = [1, 1]} : vector<16x96xf32> to vector<16x8xf32>
    %43 = vector.shape_cast %40 : vector<16x8xf32> to vector<2x8x8xf32>
    %44 = arith.truncf %43 : vector<2x8x8xf32> to vector<2x8x8xbf16>
    %45 = vector.shape_cast %41 : vector<16x8xf32> to vector<2x8x8xf32>
    %46 = arith.truncf %45 : vector<2x8x8xf32> to vector<2x8x8xbf16>
    %47 = vector.shape_cast %42 : vector<16x8xf32> to vector<2x8x8xf32>
    %48 = arith.truncf %47 : vector<2x8x8xf32> to vector<2x8x8xbf16>
    "tpu.trace_start"() <{level = 10 : i32, message = "bqd,bkd->bqk"}> : () -> ()
    %cst_21 = arith.constant dense<0.000000e+00> : vector<2x8x8xf32>
    %49 = tpu.matmul %44, %46, %cst_21 {dimension_numbers = #tpu.dot_dimension_numbers<[2], [2], [1], [1], [0, 0, 0, 1, 1, 1], [0], [0]>} : vector<2x8x8xbf16>, vector<2x8x8xbf16>, vector<2x8x8xf32> -> vector<2x8x8xf32>
    "tpu.trace_stop"() : () -> ()
    %cst_22 = arith.constant 0.353553385 : f32
    %50 = vector.broadcast %cst_22 : f32 to vector<2x8x8xf32>
    %51 = arith.mulf %49, %50 : vector<2x8x8xf32>
    %52 = vector.broadcast %31 : vector<2x1x8xf32> to vector<2x8x8xf32>
    %53 = arith.addf %51, %52 : vector<2x8x8xf32>
    %cst_23 = arith.constant dense<0xFF800000> : vector<2x8xf32>
    %54 = vector.multi_reduction <maximumf>, %53, %cst_23 [2] : vector<2x8x8xf32> to vector<2x8xf32>
    %55 = vector.shape_cast %54 : vector<2x8xf32> to vector<2x8x1xf32>
    %56 = vector.broadcast %55 : vector<2x8x1xf32> to vector<2x8x8xf32>
    %57 = arith.subf %53, %56 : vector<2x8x8xf32>
    %58 = math.exp %57 : vector<2x8x8xf32>
    %cst_24 = arith.constant dense<0.000000e+00> : vector<2x8xf32>
    %59 = vector.multi_reduction <add>, %58, %cst_24 [2] : vector<2x8x8xf32> to vector<2x8xf32>
    %60 = vector.shape_cast %59 : vector<2x8xf32> to vector<2x8x1xf32>
    %61 = vector.broadcast %60 : vector<2x8x1xf32> to vector<2x8x8xf32>
    %62 = arith.divf %58, %61 : vector<2x8x8xf32>
    %63 = arith.truncf %62 : vector<2x8x8xf32> to vector<2x8x8xbf16>
    "tpu.trace_start"() <{level = 10 : i32, message = "bqk,bkd->bqd"}> : () -> ()
    %cst_25 = arith.constant dense<0.000000e+00> : vector<2x8x8xf32>
    %64 = tpu.matmul %63, %48, %cst_25 {dimension_numbers = #tpu.dot_dimension_numbers<[2], [1], [1], [2], [0, 0, 0, 1, 1, 2], [0], [0]>} : vector<2x8x8xbf16>, vector<2x8x8xbf16>, vector<2x8x8xf32> -> vector<2x8x8xf32>
    "tpu.trace_stop"() : () -> ()
    %65 = vector.shape_cast %64 : vector<2x8x8xf32> to vector<16x8xf32>
    %66 = vector.extract_strided_slice %39 {offsets = [0, 8], sizes = [16, 8], strides = [1, 1]} : vector<16x96xf32> to vector<16x8xf32>
    %67 = vector.extract_strided_slice %39 {offsets = [0, 40], sizes = [16, 8], strides = [1, 1]} : vector<16x96xf32> to vector<16x8xf32>
    %68 = vector.extract_strided_slice %39 {offsets = [0, 72], sizes = [16, 8], strides = [1, 1]} : vector<16x96xf32> to vector<16x8xf32>
    %69 = vector.shape_cast %66 : vector<16x8xf32> to vector<2x8x8xf32>
    %70 = arith.truncf %69 : vector<2x8x8xf32> to vector<2x8x8xbf16>
    %71 = vector.shape_cast %67 : vector<16x8xf32> to vector<2x8x8xf32>
    %72 = arith.truncf %71 : vector<2x8x8xf32> to vector<2x8x8xbf16>
    %73 = vector.shape_cast %68 : vector<16x8xf32> to vector<2x8x8xf32>
    %74 = arith.truncf %73 : vector<2x8x8xf32> to vector<2x8x8xbf16>
    "tpu.trace_start"() <{level = 10 : i32, message = "bqd,bkd->bqk"}> : () -> ()
    %cst_26 = arith.constant dense<0.000000e+00> : vector<2x8x8xf32>
    %75 = tpu.matmul %70, %72, %cst_26 {dimension_numbers = #tpu.dot_dimension_numbers<[2], [2], [1], [1], [0, 0, 0, 1, 1, 1], [0], [0]>} : vector<2x8x8xbf16>, vector<2x8x8xbf16>, vector<2x8x8xf32> -> vector<2x8x8xf32>
    "tpu.trace_stop"() : () -> ()
    %cst_27 = arith.constant 0.353553385 : f32
    %76 = vector.broadcast %cst_27 : f32 to vector<2x8x8xf32>
    %77 = arith.mulf %75, %76 : vector<2x8x8xf32>
    %78 = vector.broadcast %31 : vector<2x1x8xf32> to vector<2x8x8xf32>
    %79 = arith.addf %77, %78 : vector<2x8x8xf32>
    %cst_28 = arith.constant dense<0xFF800000> : vector<2x8xf32>
    %80 = vector.multi_reduction <maximumf>, %79, %cst_28 [2] : vector<2x8x8xf32> to vector<2x8xf32>
    %81 = vector.shape_cast %80 : vector<2x8xf32> to vector<2x8x1xf32>
    %82 = vector.broadcast %81 : vector<2x8x1xf32> to vector<2x8x8xf32>
    %83 = arith.subf %79, %82 : vector<2x8x8xf32>
    %84 = math.exp %83 : vector<2x8x8xf32>
    %cst_29 = arith.constant dense<0.000000e+00> : vector<2x8xf32>
    %85 = vector.multi_reduction <add>, %84, %cst_29 [2] : vector<2x8x8xf32> to vector<2x8xf32>
    %86 = vector.shape_cast %85 : vector<2x8xf32> to vector<2x8x1xf32>
    %87 = vector.broadcast %86 : vector<2x8x1xf32> to vector<2x8x8xf32>
    %88 = arith.divf %84, %87 : vector<2x8x8xf32>
    %89 = arith.truncf %88 : vector<2x8x8xf32> to vector<2x8x8xbf16>
    "tpu.trace_start"() <{level = 10 : i32, message = "bqk,bkd->bqd"}> : () -> ()
    %cst_30 = arith.constant dense<0.000000e+00> : vector<2x8x8xf32>
    %90 = tpu.matmul %89, %74, %cst_30 {dimension_numbers = #tpu.dot_dimension_numbers<[2], [1], [1], [2], [0, 0, 0, 1, 1, 2], [0], [0]>} : vector<2x8x8xbf16>, vector<2x8x8xbf16>, vector<2x8x8xf32> -> vector<2x8x8xf32>
    "tpu.trace_stop"() : () -> ()
    %91 = vector.shape_cast %90 : vector<2x8x8xf32> to vector<16x8xf32>
    %92 = vector.extract_strided_slice %39 {offsets = [0, 16], sizes = [16, 8], strides = [1, 1]} : vector<16x96xf32> to vector<16x8xf32>
    %93 = vector.extract_strided_slice %39 {offsets = [0, 48], sizes = [16, 8], strides = [1, 1]} : vector<16x96xf32> to vector<16x8xf32>
    %94 = vector.extract_strided_slice %39 {offsets = [0, 80], sizes = [16, 8], strides = [1, 1]} : vector<16x96xf32> to vector<16x8xf32>
    %95 = vector.shape_cast %92 : vector<16x8xf32> to vector<2x8x8xf32>
    %96 = arith.truncf %95 : vector<2x8x8xf32> to vector<2x8x8xbf16>
    %97 = vector.shape_cast %93 : vector<16x8xf32> to vector<2x8x8xf32>
    %98 = arith.truncf %97 : vector<2x8x8xf32> to vector<2x8x8xbf16>
    %99 = vector.shape_cast %94 : vector<16x8xf32> to vector<2x8x8xf32>
    %100 = arith.truncf %99 : vector<2x8x8xf32> to vector<2x8x8xbf16>
    "tpu.trace_start"() <{level = 10 : i32, message = "bqd,bkd->bqk"}> : () -> ()
    %cst_31 = arith.constant dense<0.000000e+00> : vector<2x8x8xf32>
    %101 = tpu.matmul %96, %98, %cst_31 {dimension_numbers = #tpu.dot_dimension_numbers<[2], [2], [1], [1], [0, 0, 0, 1, 1, 1], [0], [0]>} : vector<2x8x8xbf16>, vector<2x8x8xbf16>, vector<2x8x8xf32> -> vector<2x8x8xf32>
    "tpu.trace_stop"() : () -> ()
    %cst_32 = arith.constant 0.353553385 : f32
    %102 = vector.broadcast %cst_32 : f32 to vector<2x8x8xf32>
    %103 = arith.mulf %101, %102 : vector<2x8x8xf32>
    %104 = vector.broadcast %31 : vector<2x1x8xf32> to vector<2x8x8xf32>
    %105 = arith.addf %103, %104 : vector<2x8x8xf32>
    %cst_33 = arith.constant dense<0xFF800000> : vector<2x8xf32>
    %106 = vector.multi_reduction <maximumf>, %105, %cst_33 [2] : vector<2x8x8xf32> to vector<2x8xf32>
    %107 = vector.shape_cast %106 : vector<2x8xf32> to vector<2x8x1xf32>
    %108 = vector.broadcast %107 : vector<2x8x1xf32> to vector<2x8x8xf32>
    %109 = arith.subf %105, %108 : vector<2x8x8xf32>
    %110 = math.exp %109 : vector<2x8x8xf32>
    %cst_34 = arith.constant dense<0.000000e+00> : vector<2x8xf32>
    %111 = vector.multi_reduction <add>, %110, %cst_34 [2] : vector<2x8x8xf32> to vector<2x8xf32>
    %112 = vector.shape_cast %111 : vector<2x8xf32> to vector<2x8x1xf32>
    %113 = vector.broadcast %112 : vector<2x8x1xf32> to vector<2x8x8xf32>
    %114 = arith.divf %110, %113 : vector<2x8x8xf32>
    %115 = arith.truncf %114 : vector<2x8x8xf32> to vector<2x8x8xbf16>
    "tpu.trace_start"() <{level = 10 : i32, message = "bqk,bkd->bqd"}> : () -> ()
    %cst_35 = arith.constant dense<0.000000e+00> : vector<2x8x8xf32>
    %116 = tpu.matmul %115, %100, %cst_35 {dimension_numbers = #tpu.dot_dimension_numbers<[2], [1], [1], [2], [0, 0, 0, 1, 1, 2], [0], [0]>} : vector<2x8x8xbf16>, vector<2x8x8xbf16>, vector<2x8x8xf32> -> vector<2x8x8xf32>
    "tpu.trace_stop"() : () -> ()
    %117 = vector.shape_cast %116 : vector<2x8x8xf32> to vector<16x8xf32>
    %118 = vector.extract_strided_slice %39 {offsets = [0, 24], sizes = [16, 8], strides = [1, 1]} : vector<16x96xf32> to vector<16x8xf32>
    %119 = vector.extract_strided_slice %39 {offsets = [0, 56], sizes = [16, 8], strides = [1, 1]} : vector<16x96xf32> to vector<16x8xf32>
    %120 = vector.extract_strided_slice %39 {offsets = [0, 88], sizes = [16, 8], strides = [1, 1]} : vector<16x96xf32> to vector<16x8xf32>
    %121 = vector.shape_cast %118 : vector<16x8xf32> to vector<2x8x8xf32>
    %122 = arith.truncf %121 : vector<2x8x8xf32> to vector<2x8x8xbf16>
    %123 = vector.shape_cast %119 : vector<16x8xf32> to vector<2x8x8xf32>
    %124 = arith.truncf %123 : vector<2x8x8xf32> to vector<2x8x8xbf16>
    %125 = vector.shape_cast %120 : vector<16x8xf32> to vector<2x8x8xf32>
    %126 = arith.truncf %125 : vector<2x8x8xf32> to vector<2x8x8xbf16>
    "tpu.trace_start"() <{level = 10 : i32, message = "bqd,bkd->bqk"}> : () -> ()
    %cst_36 = arith.constant dense<0.000000e+00> : vector<2x8x8xf32>
    %127 = tpu.matmul %122, %124, %cst_36 {dimension_numbers = #tpu.dot_dimension_numbers<[2], [2], [1], [1], [0, 0, 0, 1, 1, 1], [0], [0]>} : vector<2x8x8xbf16>, vector<2x8x8xbf16>, vector<2x8x8xf32> -> vector<2x8x8xf32>
    "tpu.trace_stop"() : () -> ()
    %cst_37 = arith.constant 0.353553385 : f32
    %128 = vector.broadcast %cst_37 : f32 to vector<2x8x8xf32>
    %129 = arith.mulf %127, %128 : vector<2x8x8xf32>
    %130 = vector.broadcast %31 : vector<2x1x8xf32> to vector<2x8x8xf32>
    %131 = arith.addf %129, %130 : vector<2x8x8xf32>
    %cst_38 = arith.constant dense<0xFF800000> : vector<2x8xf32>
    %132 = vector.multi_reduction <maximumf>, %131, %cst_38 [2] : vector<2x8x8xf32> to vector<2x8xf32>
    %133 = vector.shape_cast %132 : vector<2x8xf32> to vector<2x8x1xf32>
    %134 = vector.broadcast %133 : vector<2x8x1xf32> to vector<2x8x8xf32>
    %135 = arith.subf %131, %134 : vector<2x8x8xf32>
    %136 = math.exp %135 : vector<2x8x8xf32>
    %cst_39 = arith.constant dense<0.000000e+00> : vector<2x8xf32>
    %137 = vector.multi_reduction <add>, %136, %cst_39 [2] : vector<2x8x8xf32> to vector<2x8xf32>
    %138 = vector.shape_cast %137 : vector<2x8xf32> to vector<2x8x1xf32>
    %139 = vector.broadcast %138 : vector<2x8x1xf32> to vector<2x8x8xf32>
    %140 = arith.divf %136, %139 : vector<2x8x8xf32>
    %141 = arith.truncf %140 : vector<2x8x8xf32> to vector<2x8x8xbf16>
    "tpu.trace_start"() <{level = 10 : i32, message = "bqk,bkd->bqd"}> : () -> ()
    %cst_40 = arith.constant dense<0.000000e+00> : vector<2x8x8xf32>
    %142 = tpu.matmul %141, %126, %cst_40 {dimension_numbers = #tpu.dot_dimension_numbers<[2], [1], [1], [2], [0, 0, 0, 1, 1, 2], [0], [0]>} : vector<2x8x8xbf16>, vector<2x8x8xbf16>, vector<2x8x8xf32> -> vector<2x8x8xf32>
    "tpu.trace_stop"() : () -> ()
    %143 = vector.shape_cast %142 : vector<2x8x8xf32> to vector<16x8xf32>
    %144 = tpu.concatenate %65, %91, %117, %143 in 1 : vector<16x8xf32>, vector<16x8xf32>, vector<16x8xf32>, vector<16x8xf32> -> vector<16x32xf32>
    %c0_41 = arith.constant 0 : index
    %c0_42 = arith.constant 0 : index
    %c0_43 = arith.constant 0 : index
    %145 = vector.load %arg7[%c0_41, %c0_42, %c0_43] : memref<2x32x32xbf16, #tpu.memory_space<vmem>>, vector<1x32x32xbf16>
    %146 = vector.shape_cast %145 : vector<1x32x32xbf16> to vector<32x32xbf16>
    %147 = arith.truncf %144 : vector<16x32xf32> to vector<16x32xbf16>
    %cst_44 = arith.constant dense<0.000000e+00> : vector<16x32xf32>
    %148 = tpu.matmul %147, %146, %cst_44 {dimension_numbers = #tpu.dot_dimension_numbers<[1], [0], [0], [1], [0, 0, 1, 1], [], []>} : vector<16x32xbf16>, vector<32x32xbf16>, vector<16x32xf32> -> vector<16x32xf32>
    %c0_45 = arith.constant 0 : index
    %c0_46 = arith.constant 0 : index
    %c0_47 = arith.constant 0 : index
    %149 = vector.load %arg8[%c0_45, %c0_46, %c0_47] : memref<2x1x32xf32, #tpu.memory_space<vmem>>, vector<1x1x32xf32>
    %150 = vector.shape_cast %149 : vector<1x1x32xf32> to vector<1x32xf32>
    %151 = vector.broadcast %150 : vector<1x32xf32> to vector<16x32xf32>
    %152 = arith.addf %148, %151 : vector<16x32xf32>
    %153 = arith.addf %152, %24 : vector<16x32xf32>
    %c0_48 = arith.constant 0 : index
    %c0_49 = arith.constant 0 : index
    %c0_50 = arith.constant 0 : index
    %154 = vector.load %arg9[%c0_48, %c0_49, %c0_50] : memref<2x1x32xf32, #tpu.memory_space<vmem>>, vector<1x1x32xf32>
    %155 = vector.shape_cast %154 : vector<1x1x32xf32> to vector<1x32xf32>
    %c0_51 = arith.constant 0 : index
    %c0_52 = arith.constant 0 : index
    %c0_53 = arith.constant 0 : index
    %156 = vector.load %arg10[%c0_51, %c0_52, %c0_53] : memref<2x1x32xf32, #tpu.memory_space<vmem>>, vector<1x1x32xf32>
    %157 = vector.shape_cast %156 : vector<1x1x32xf32> to vector<1x32xf32>
    %cst_54 = arith.constant dense<0.000000e+00> : vector<16xf32>
    %158 = vector.multi_reduction <add>, %153, %cst_54 [1] : vector<16x32xf32> to vector<16xf32>
    %159 = vector.shape_cast %158 : vector<16xf32> to vector<16x1xf32>
    %cst_55 = arith.constant 3.200000e+01 : f32
    %160 = vector.broadcast %cst_55 : f32 to vector<16x1xf32>
    %161 = arith.divf %159, %160 : vector<16x1xf32>
    %162 = vector.broadcast %161 : vector<16x1xf32> to vector<16x32xf32>
    %163 = arith.subf %153, %162 : vector<16x32xf32>
    %164 = arith.mulf %163, %163 : vector<16x32xf32>
    %cst_56 = arith.constant dense<0.000000e+00> : vector<16xf32>
    %165 = vector.multi_reduction <add>, %164, %cst_56 [1] : vector<16x32xf32> to vector<16xf32>
    %166 = vector.shape_cast %165 : vector<16xf32> to vector<16x1xf32>
    %cst_57 = arith.constant 3.200000e+01 : f32
    %167 = vector.broadcast %cst_57 : f32 to vector<16x1xf32>
    %168 = arith.divf %166, %167 : vector<16x1xf32>
    %169 = vector.broadcast %161 : vector<16x1xf32> to vector<16x32xf32>
    %170 = arith.subf %153, %169 : vector<16x32xf32>
    %cst_58 = arith.constant 9.99999996E-13 : f32
    %171 = vector.broadcast %cst_58 : f32 to vector<16x1xf32>
    %172 = arith.addf %168, %171 : vector<16x1xf32>
    %173 = math.rsqrt %172 : vector<16x1xf32>
    %174 = vector.broadcast %173 : vector<16x1xf32> to vector<16x32xf32>
    %175 = arith.mulf %170, %174 : vector<16x32xf32>
    %176 = vector.broadcast %155 : vector<1x32xf32> to vector<16x32xf32>
    %177 = arith.mulf %175, %176 : vector<16x32xf32>
    %178 = vector.broadcast %157 : vector<1x32xf32> to vector<16x32xf32>
    %179 = arith.addf %177, %178 : vector<16x32xf32>
    %c0_59 = arith.constant 0 : index
    %c0_60 = arith.constant 0 : index
    %c0_61 = arith.constant 0 : index
    %180 = vector.load %arg11[%c0_59, %c0_60, %c0_61] : memref<2x32x64xbf16, #tpu.memory_space<vmem>>, vector<1x32x64xbf16>
    %181 = vector.shape_cast %180 : vector<1x32x64xbf16> to vector<32x64xbf16>
    %182 = arith.truncf %179 : vector<16x32xf32> to vector<16x32xbf16>
    %cst_62 = arith.constant dense<0.000000e+00> : vector<16x64xf32>
    %183 = tpu.matmul %182, %181, %cst_62 {dimension_numbers = #tpu.dot_dimension_numbers<[1], [0], [0], [1], [0, 0, 1, 1], [], []>} : vector<16x32xbf16>, vector<32x64xbf16>, vector<16x64xf32> -> vector<16x64xf32>
    %c0_63 = arith.constant 0 : index
    %c0_64 = arith.constant 0 : index
    %c0_65 = arith.constant 0 : index
    %184 = vector.load %arg12[%c0_63, %c0_64, %c0_65] : memref<2x1x64xf32, #tpu.memory_space<vmem>>, vector<1x1x64xf32>
    %185 = vector.shape_cast %184 : vector<1x1x64xf32> to vector<1x64xf32>
    %186 = vector.broadcast %185 : vector<1x64xf32> to vector<16x64xf32>
    %187 = arith.addf %183, %186 : vector<16x64xf32>
    %188 = arith.mulf %187, %187 : vector<16x64xf32>
    %189 = arith.mulf %187, %188 : vector<16x64xf32>
    %cst_66 = arith.constant 4.471500e-02 : f32
    %190 = vector.broadcast %cst_66 : f32 to vector<16x64xf32>
    %191 = arith.mulf %190, %189 : vector<16x64xf32>
    %192 = arith.addf %187, %191 : vector<16x64xf32>
    %cst_67 = arith.constant 0.797884583 : f32
    %193 = vector.broadcast %cst_67 : f32 to vector<16x64xf32>
    %194 = arith.mulf %193, %192 : vector<16x64xf32>
    %195 = math.tanh %194 : vector<16x64xf32>
    %cst_68 = arith.constant 1.000000e+00 : f32
    %196 = vector.broadcast %cst_68 : f32 to vector<16x64xf32>
    %197 = arith.addf %196, %195 : vector<16x64xf32>
    %cst_69 = arith.constant 5.000000e-01 : f32
    %198 = vector.broadcast %cst_69 : f32 to vector<16x64xf32>
    %199 = arith.mulf %198, %197 : vector<16x64xf32>
    %200 = arith.mulf %187, %199 : vector<16x64xf32>
    %c0_70 = arith.constant 0 : index
    %c0_71 = arith.constant 0 : index
    %c0_72 = arith.constant 0 : index
    %201 = vector.load %arg13[%c0_70, %c0_71, %c0_72] : memref<2x64x32xbf16, #tpu.memory_space<vmem>>, vector<1x64x32xbf16>
    %202 = vector.shape_cast %201 : vector<1x64x32xbf16> to vector<64x32xbf16>
    %203 = arith.truncf %200 : vector<16x64xf32> to vector<16x64xbf16>
    %cst_73 = arith.constant dense<0.000000e+00> : vector<16x32xf32>
    %204 = tpu.matmul %203, %202, %cst_73 {dimension_numbers = #tpu.dot_dimension_numbers<[1], [0], [0], [1], [0, 0, 1, 1], [], []>} : vector<16x64xbf16>, vector<64x32xbf16>, vector<16x32xf32> -> vector<16x32xf32>
    %c0_74 = arith.constant 0 : index
    %c0_75 = arith.constant 0 : index
    %c0_76 = arith.constant 0 : index
    %205 = vector.load %arg14[%c0_74, %c0_75, %c0_76] : memref<2x1x32xf32, #tpu.memory_space<vmem>>, vector<1x1x32xf32>
    %206 = vector.shape_cast %205 : vector<1x1x32xf32> to vector<1x32xf32>
    %207 = vector.broadcast %206 : vector<1x32xf32> to vector<16x32xf32>
    %208 = arith.addf %204, %207 : vector<16x32xf32>
    %209 = arith.addf %208, %179 : vector<16x32xf32>
    %c0_77 = arith.constant 0 : index
    %c0_78 = arith.constant 0 : index
    %c0_79 = arith.constant 0 : index
    %210 = vector.load %arg15[%c0_77, %c0_78, %c0_79] : memref<2x1x32xf32, #tpu.memory_space<vmem>>, vector<1x1x32xf32>
    %211 = vector.shape_cast %210 : vector<1x1x32xf32> to vector<1x32xf32>
    %c0_80 = arith.constant 0 : index
    %c0_81 = arith.constant 0 : index
    %c0_82 = arith.constant 0 : index
    %212 = vector.load %arg16[%c0_80, %c0_81, %c0_82] : memref<2x1x32xf32, #tpu.memory_space<vmem>>, vector<1x1x32xf32>
    %213 = vector.shape_cast %212 : vector<1x1x32xf32> to vector<1x32xf32>
    %cst_83 = arith.constant dense<0.000000e+00> : vector<16xf32>
    %214 = vector.multi_reduction <add>, %209, %cst_83 [1] : vector<16x32xf32> to vector<16xf32>
    %215 = vector.shape_cast %214 : vector<16xf32> to vector<16x1xf32>
    %cst_84 = arith.constant 3.200000e+01 : f32
    %216 = vector.broadcast %cst_84 : f32 to vector<16x1xf32>
    %217 = arith.divf %215, %216 : vector<16x1xf32>
    %218 = vector.broadcast %217 : vector<16x1xf32> to vector<16x32xf32>
    %219 = arith.subf %209, %218 : vector<16x32xf32>
    %220 = arith.mulf %219, %219 : vector<16x32xf32>
    %cst_85 = arith.constant dense<0.000000e+00> : vector<16xf32>
    %221 = vector.multi_reduction <add>, %220, %cst_85 [1] : vector<16x32xf32> to vector<16xf32>
    %222 = vector.shape_cast %221 : vector<16xf32> to vector<16x1xf32>
    %cst_86 = arith.constant 3.200000e+01 : f32
    %223 = vector.broadcast %cst_86 : f32 to vector<16x1xf32>
    %224 = arith.divf %222, %223 : vector<16x1xf32>
    %225 = vector.broadcast %217 : vector<16x1xf32> to vector<16x32xf32>
    %226 = arith.subf %209, %225 : vector<16x32xf32>
    %cst_87 = arith.constant 9.99999996E-13 : f32
    %227 = vector.broadcast %cst_87 : f32 to vector<16x1xf32>
    %228 = arith.addf %224, %227 : vector<16x1xf32>
    %229 = math.rsqrt %228 : vector<16x1xf32>
    %230 = vector.broadcast %229 : vector<16x1xf32> to vector<16x32xf32>
    %231 = arith.mulf %226, %230 : vector<16x32xf32>
    %232 = vector.broadcast %211 : vector<1x32xf32> to vector<16x32xf32>
    %233 = arith.mulf %231, %232 : vector<16x32xf32>
    %234 = vector.broadcast %213 : vector<1x32xf32> to vector<16x32xf32>
    %235 = arith.addf %233, %234 : vector<16x32xf32>
    %c1 = arith.constant 1 : index
    %c0_88 = arith.constant 0 : index
    %c0_89 = arith.constant 0 : index
    %236 = vector.load %arg5[%c1, %c0_88, %c0_89] : memref<2x32x96xbf16, #tpu.memory_space<vmem>>, vector<1x32x96xbf16>
    %237 = vector.shape_cast %236 : vector<1x32x96xbf16> to vector<32x96xbf16>
    %238 = arith.truncf %235 : vector<16x32xf32> to vector<16x32xbf16>
    %cst_90 = arith.constant dense<0.000000e+00> : vector<16x96xf32>
    %239 = tpu.matmul %238, %237, %cst_90 {dimension_numbers = #tpu.dot_dimension_numbers<[1], [0], [0], [1], [0, 0, 1, 1], [], []>} : vector<16x32xbf16>, vector<32x96xbf16>, vector<16x96xf32> -> vector<16x96xf32>
    %c1_91 = arith.constant 1 : index
    %c0_92 = arith.constant 0 : index
    %c0_93 = arith.constant 0 : index
    %240 = vector.load %arg6[%c1_91, %c0_92, %c0_93] : memref<2x1x96xf32, #tpu.memory_space<vmem>>, vector<1x1x96xf32>
    %241 = vector.shape_cast %240 : vector<1x1x96xf32> to vector<1x96xf32>
    %242 = vector.broadcast %241 : vector<1x96xf32> to vector<16x96xf32>
    %243 = arith.addf %239, %242 : vector<16x96xf32>
    %244 = vector.extract_strided_slice %243 {offsets = [0, 0], sizes = [16, 8], strides = [1, 1]} : vector<16x96xf32> to vector<16x8xf32>
    %245 = vector.extract_strided_slice %243 {offsets = [0, 32], sizes = [16, 8], strides = [1, 1]} : vector<16x96xf32> to vector<16x8xf32>
    %246 = vector.extract_strided_slice %243 {offsets = [0, 64], sizes = [16, 8], strides = [1, 1]} : vector<16x96xf32> to vector<16x8xf32>
    %247 = vector.shape_cast %244 : vector<16x8xf32> to vector<2x8x8xf32>
    %248 = arith.truncf %247 : vector<2x8x8xf32> to vector<2x8x8xbf16>
    %249 = vector.shape_cast %245 : vector<16x8xf32> to vector<2x8x8xf32>
    %250 = arith.truncf %249 : vector<2x8x8xf32> to vector<2x8x8xbf16>
    %251 = vector.shape_cast %246 : vector<16x8xf32> to vector<2x8x8xf32>
    %252 = arith.truncf %251 : vector<2x8x8xf32> to vector<2x8x8xbf16>
    "tpu.trace_start"() <{level = 10 : i32, message = "bqd,bkd->bqk"}> : () -> ()
    %cst_94 = arith.constant dense<0.000000e+00> : vector<2x8x8xf32>
    %253 = tpu.matmul %248, %250, %cst_94 {dimension_numbers = #tpu.dot_dimension_numbers<[2], [2], [1], [1], [0, 0, 0, 1, 1, 1], [0], [0]>} : vector<2x8x8xbf16>, vector<2x8x8xbf16>, vector<2x8x8xf32> -> vector<2x8x8xf32>
    "tpu.trace_stop"() : () -> ()
    %cst_95 = arith.constant 0.353553385 : f32
    %254 = vector.broadcast %cst_95 : f32 to vector<2x8x8xf32>
    %255 = arith.mulf %253, %254 : vector<2x8x8xf32>
    %256 = vector.broadcast %31 : vector<2x1x8xf32> to vector<2x8x8xf32>
    %257 = arith.addf %255, %256 : vector<2x8x8xf32>
    %cst_96 = arith.constant dense<0xFF800000> : vector<2x8xf32>
    %258 = vector.multi_reduction <maximumf>, %257, %cst_96 [2] : vector<2x8x8xf32> to vector<2x8xf32>
    %259 = vector.shape_cast %258 : vector<2x8xf32> to vector<2x8x1xf32>
    %260 = vector.broadcast %259 : vector<2x8x1xf32> to vector<2x8x8xf32>
    %261 = arith.subf %257, %260 : vector<2x8x8xf32>
    %262 = math.exp %261 : vector<2x8x8xf32>
    %cst_97 = arith.constant dense<0.000000e+00> : vector<2x8xf32>
    %263 = vector.multi_reduction <add>, %262, %cst_97 [2] : vector<2x8x8xf32> to vector<2x8xf32>
    %264 = vector.shape_cast %263 : vector<2x8xf32> to vector<2x8x1xf32>
    %265 = vector.broadcast %264 : vector<2x8x1xf32> to vector<2x8x8xf32>
    %266 = arith.divf %262, %265 : vector<2x8x8xf32>
    %267 = arith.truncf %266 : vector<2x8x8xf32> to vector<2x8x8xbf16>
    "tpu.trace_start"() <{level = 10 : i32, message = "bqk,bkd->bqd"}> : () -> ()
    %cst_98 = arith.constant dense<0.000000e+00> : vector<2x8x8xf32>
    %268 = tpu.matmul %267, %252, %cst_98 {dimension_numbers = #tpu.dot_dimension_numbers<[2], [1], [1], [2], [0, 0, 0, 1, 1, 2], [0], [0]>} : vector<2x8x8xbf16>, vector<2x8x8xbf16>, vector<2x8x8xf32> -> vector<2x8x8xf32>
    "tpu.trace_stop"() : () -> ()
    %269 = vector.shape_cast %268 : vector<2x8x8xf32> to vector<16x8xf32>
    %270 = vector.extract_strided_slice %243 {offsets = [0, 8], sizes = [16, 8], strides = [1, 1]} : vector<16x96xf32> to vector<16x8xf32>
    %271 = vector.extract_strided_slice %243 {offsets = [0, 40], sizes = [16, 8], strides = [1, 1]} : vector<16x96xf32> to vector<16x8xf32>
    %272 = vector.extract_strided_slice %243 {offsets = [0, 72], sizes = [16, 8], strides = [1, 1]} : vector<16x96xf32> to vector<16x8xf32>
    %273 = vector.shape_cast %270 : vector<16x8xf32> to vector<2x8x8xf32>
    %274 = arith.truncf %273 : vector<2x8x8xf32> to vector<2x8x8xbf16>
    %275 = vector.shape_cast %271 : vector<16x8xf32> to vector<2x8x8xf32>
    %276 = arith.truncf %275 : vector<2x8x8xf32> to vector<2x8x8xbf16>
    %277 = vector.shape_cast %272 : vector<16x8xf32> to vector<2x8x8xf32>
    %278 = arith.truncf %277 : vector<2x8x8xf32> to vector<2x8x8xbf16>
    "tpu.trace_start"() <{level = 10 : i32, message = "bqd,bkd->bqk"}> : () -> ()
    %cst_99 = arith.constant dense<0.000000e+00> : vector<2x8x8xf32>
    %279 = tpu.matmul %274, %276, %cst_99 {dimension_numbers = #tpu.dot_dimension_numbers<[2], [2], [1], [1], [0, 0, 0, 1, 1, 1], [0], [0]>} : vector<2x8x8xbf16>, vector<2x8x8xbf16>, vector<2x8x8xf32> -> vector<2x8x8xf32>
    "tpu.trace_stop"() : () -> ()
    %cst_100 = arith.constant 0.353553385 : f32
    %280 = vector.broadcast %cst_100 : f32 to vector<2x8x8xf32>
    %281 = arith.mulf %279, %280 : vector<2x8x8xf32>
    %282 = vector.broadcast %31 : vector<2x1x8xf32> to vector<2x8x8xf32>
    %283 = arith.addf %281, %282 : vector<2x8x8xf32>
    %cst_101 = arith.constant dense<0xFF800000> : vector<2x8xf32>
    %284 = vector.multi_reduction <maximumf>, %283, %cst_101 [2] : vector<2x8x8xf32> to vector<2x8xf32>
    %285 = vector.shape_cast %284 : vector<2x8xf32> to vector<2x8x1xf32>
    %286 = vector.broadcast %285 : vector<2x8x1xf32> to vector<2x8x8xf32>
    %287 = arith.subf %283, %286 : vector<2x8x8xf32>
    %288 = math.exp %287 : vector<2x8x8xf32>
    %cst_102 = arith.constant dense<0.000000e+00> : vector<2x8xf32>
    %289 = vector.multi_reduction <add>, %288, %cst_102 [2] : vector<2x8x8xf32> to vector<2x8xf32>
    %290 = vector.shape_cast %289 : vector<2x8xf32> to vector<2x8x1xf32>
    %291 = vector.broadcast %290 : vector<2x8x1xf32> to vector<2x8x8xf32>
    %292 = arith.divf %288, %291 : vector<2x8x8xf32>
    %293 = arith.truncf %292 : vector<2x8x8xf32> to vector<2x8x8xbf16>
    "tpu.trace_start"() <{level = 10 : i32, message = "bqk,bkd->bqd"}> : () -> ()
    %cst_103 = arith.constant dense<0.000000e+00> : vector<2x8x8xf32>
    %294 = tpu.matmul %293, %278, %cst_103 {dimension_numbers = #tpu.dot_dimension_numbers<[2], [1], [1], [2], [0, 0, 0, 1, 1, 2], [0], [0]>} : vector<2x8x8xbf16>, vector<2x8x8xbf16>, vector<2x8x8xf32> -> vector<2x8x8xf32>
    "tpu.trace_stop"() : () -> ()
    %295 = vector.shape_cast %294 : vector<2x8x8xf32> to vector<16x8xf32>
    %296 = vector.extract_strided_slice %243 {offsets = [0, 16], sizes = [16, 8], strides = [1, 1]} : vector<16x96xf32> to vector<16x8xf32>
    %297 = vector.extract_strided_slice %243 {offsets = [0, 48], sizes = [16, 8], strides = [1, 1]} : vector<16x96xf32> to vector<16x8xf32>
    %298 = vector.extract_strided_slice %243 {offsets = [0, 80], sizes = [16, 8], strides = [1, 1]} : vector<16x96xf32> to vector<16x8xf32>
    %299 = vector.shape_cast %296 : vector<16x8xf32> to vector<2x8x8xf32>
    %300 = arith.truncf %299 : vector<2x8x8xf32> to vector<2x8x8xbf16>
    %301 = vector.shape_cast %297 : vector<16x8xf32> to vector<2x8x8xf32>
    %302 = arith.truncf %301 : vector<2x8x8xf32> to vector<2x8x8xbf16>
    %303 = vector.shape_cast %298 : vector<16x8xf32> to vector<2x8x8xf32>
    %304 = arith.truncf %303 : vector<2x8x8xf32> to vector<2x8x8xbf16>
    "tpu.trace_start"() <{level = 10 : i32, message = "bqd,bkd->bqk"}> : () -> ()
    %cst_104 = arith.constant dense<0.000000e+00> : vector<2x8x8xf32>
    %305 = tpu.matmul %300, %302, %cst_104 {dimension_numbers = #tpu.dot_dimension_numbers<[2], [2], [1], [1], [0, 0, 0, 1, 1, 1], [0], [0]>} : vector<2x8x8xbf16>, vector<2x8x8xbf16>, vector<2x8x8xf32> -> vector<2x8x8xf32>
    "tpu.trace_stop"() : () -> ()
    %cst_105 = arith.constant 0.353553385 : f32
    %306 = vector.broadcast %cst_105 : f32 to vector<2x8x8xf32>
    %307 = arith.mulf %305, %306 : vector<2x8x8xf32>
    %308 = vector.broadcast %31 : vector<2x1x8xf32> to vector<2x8x8xf32>
    %309 = arith.addf %307, %308 : vector<2x8x8xf32>
    %cst_106 = arith.constant dense<0xFF800000> : vector<2x8xf32>
    %310 = vector.multi_reduction <maximumf>, %309, %cst_106 [2] : vector<2x8x8xf32> to vector<2x8xf32>
    %311 = vector.shape_cast %310 : vector<2x8xf32> to vector<2x8x1xf32>
    %312 = vector.broadcast %311 : vector<2x8x1xf32> to vector<2x8x8xf32>
    %313 = arith.subf %309, %312 : vector<2x8x8xf32>
    %314 = math.exp %313 : vector<2x8x8xf32>
    %cst_107 = arith.constant dense<0.000000e+00> : vector<2x8xf32>
    %315 = vector.multi_reduction <add>, %314, %cst_107 [2] : vector<2x8x8xf32> to vector<2x8xf32>
    %316 = vector.shape_cast %315 : vector<2x8xf32> to vector<2x8x1xf32>
    %317 = vector.broadcast %316 : vector<2x8x1xf32> to vector<2x8x8xf32>
    %318 = arith.divf %314, %317 : vector<2x8x8xf32>
    %319 = arith.truncf %318 : vector<2x8x8xf32> to vector<2x8x8xbf16>
    "tpu.trace_start"() <{level = 10 : i32, message = "bqk,bkd->bqd"}> : () -> ()
    %cst_108 = arith.constant dense<0.000000e+00> : vector<2x8x8xf32>
    %320 = tpu.matmul %319, %304, %cst_108 {dimension_numbers = #tpu.dot_dimension_numbers<[2], [1], [1], [2], [0, 0, 0, 1, 1, 2], [0], [0]>} : vector<2x8x8xbf16>, vector<2x8x8xbf16>, vector<2x8x8xf32> -> vector<2x8x8xf32>
    "tpu.trace_stop"() : () -> ()
    %321 = vector.shape_cast %320 : vector<2x8x8xf32> to vector<16x8xf32>
    %322 = vector.extract_strided_slice %243 {offsets = [0, 24], sizes = [16, 8], strides = [1, 1]} : vector<16x96xf32> to vector<16x8xf32>
    %323 = vector.extract_strided_slice %243 {offsets = [0, 56], sizes = [16, 8], strides = [1, 1]} : vector<16x96xf32> to vector<16x8xf32>
    %324 = vector.extract_strided_slice %243 {offsets = [0, 88], sizes = [16, 8], strides = [1, 1]} : vector<16x96xf32> to vector<16x8xf32>
    %325 = vector.shape_cast %322 : vector<16x8xf32> to vector<2x8x8xf32>
    %326 = arith.truncf %325 : vector<2x8x8xf32> to vector<2x8x8xbf16>
    %327 = vector.shape_cast %323 : vector<16x8xf32> to vector<2x8x8xf32>
    %328 = arith.truncf %327 : vector<2x8x8xf32> to vector<2x8x8xbf16>
    %329 = vector.shape_cast %324 : vector<16x8xf32> to vector<2x8x8xf32>
    %330 = arith.truncf %329 : vector<2x8x8xf32> to vector<2x8x8xbf16>
    "tpu.trace_start"() <{level = 10 : i32, message = "bqd,bkd->bqk"}> : () -> ()
    %cst_109 = arith.constant dense<0.000000e+00> : vector<2x8x8xf32>
    %331 = tpu.matmul %326, %328, %cst_109 {dimension_numbers = #tpu.dot_dimension_numbers<[2], [2], [1], [1], [0, 0, 0, 1, 1, 1], [0], [0]>} : vector<2x8x8xbf16>, vector<2x8x8xbf16>, vector<2x8x8xf32> -> vector<2x8x8xf32>
    "tpu.trace_stop"() : () -> ()
    %cst_110 = arith.constant 0.353553385 : f32
    %332 = vector.broadcast %cst_110 : f32 to vector<2x8x8xf32>
    %333 = arith.mulf %331, %332 : vector<2x8x8xf32>
    %334 = vector.broadcast %31 : vector<2x1x8xf32> to vector<2x8x8xf32>
    %335 = arith.addf %333, %334 : vector<2x8x8xf32>
    %cst_111 = arith.constant dense<0xFF800000> : vector<2x8xf32>
    %336 = vector.multi_reduction <maximumf>, %335, %cst_111 [2] : vector<2x8x8xf32> to vector<2x8xf32>
    %337 = vector.shape_cast %336 : vector<2x8xf32> to vector<2x8x1xf32>
    %338 = vector.broadcast %337 : vector<2x8x1xf32> to vector<2x8x8xf32>
    %339 = arith.subf %335, %338 : vector<2x8x8xf32>
    %340 = math.exp %339 : vector<2x8x8xf32>
    %cst_112 = arith.constant dense<0.000000e+00> : vector<2x8xf32>
    %341 = vector.multi_reduction <add>, %340, %cst_112 [2] : vector<2x8x8xf32> to vector<2x8xf32>
    %342 = vector.shape_cast %341 : vector<2x8xf32> to vector<2x8x1xf32>
    %343 = vector.broadcast %342 : vector<2x8x1xf32> to vector<2x8x8xf32>
    %344 = arith.divf %340, %343 : vector<2x8x8xf32>
    %345 = arith.truncf %344 : vector<2x8x8xf32> to vector<2x8x8xbf16>
    "tpu.trace_start"() <{level = 10 : i32, message = "bqk,bkd->bqd"}> : () -> ()
    %cst_113 = arith.constant dense<0.000000e+00> : vector<2x8x8xf32>
    %346 = tpu.matmul %345, %330, %cst_113 {dimension_numbers = #tpu.dot_dimension_numbers<[2], [1], [1], [2], [0, 0, 0, 1, 1, 2], [0], [0]>} : vector<2x8x8xbf16>, vector<2x8x8xbf16>, vector<2x8x8xf32> -> vector<2x8x8xf32>
    "tpu.trace_stop"() : () -> ()
    %347 = vector.shape_cast %346 : vector<2x8x8xf32> to vector<16x8xf32>
    %348 = tpu.concatenate %269, %295, %321, %347 in 1 : vector<16x8xf32>, vector<16x8xf32>, vector<16x8xf32>, vector<16x8xf32> -> vector<16x32xf32>
    %c1_114 = arith.constant 1 : index
    %c0_115 = arith.constant 0 : index
    %c0_116 = arith.constant 0 : index
    %349 = vector.load %arg7[%c1_114, %c0_115, %c0_116] : memref<2x32x32xbf16, #tpu.memory_space<vmem>>, vector<1x32x32xbf16>
    %350 = vector.shape_cast %349 : vector<1x32x32xbf16> to vector<32x32xbf16>
    %351 = arith.truncf %348 : vector<16x32xf32> to vector<16x32xbf16>
    %cst_117 = arith.constant dense<0.000000e+00> : vector<16x32xf32>
    %352 = tpu.matmul %351, %350, %cst_117 {dimension_numbers = #tpu.dot_dimension_numbers<[1], [0], [0], [1], [0, 0, 1, 1], [], []>} : vector<16x32xbf16>, vector<32x32xbf16>, vector<16x32xf32> -> vector<16x32xf32>
    %c1_118 = arith.constant 1 : index
    %c0_119 = arith.constant 0 : index
    %c0_120 = arith.constant 0 : index
    %353 = vector.load %arg8[%c1_118, %c0_119, %c0_120] : memref<2x1x32xf32, #tpu.memory_space<vmem>>, vector<1x1x32xf32>
    %354 = vector.shape_cast %353 : vector<1x1x32xf32> to vector<1x32xf32>
    %355 = vector.broadcast %354 : vector<1x32xf32> to vector<16x32xf32>
    %356 = arith.addf %352, %355 : vector<16x32xf32>
    %357 = arith.addf %356, %235 : vector<16x32xf32>
    %c1_121 = arith.constant 1 : index
    %c0_122 = arith.constant 0 : index
    %c0_123 = arith.constant 0 : index
    %358 = vector.load %arg9[%c1_121, %c0_122, %c0_123] : memref<2x1x32xf32, #tpu.memory_space<vmem>>, vector<1x1x32xf32>
    %359 = vector.shape_cast %358 : vector<1x1x32xf32> to vector<1x32xf32>
    %c1_124 = arith.constant 1 : index
    %c0_125 = arith.constant 0 : index
    %c0_126 = arith.constant 0 : index
    %360 = vector.load %arg10[%c1_124, %c0_125, %c0_126] : memref<2x1x32xf32, #tpu.memory_space<vmem>>, vector<1x1x32xf32>
    %361 = vector.shape_cast %360 : vector<1x1x32xf32> to vector<1x32xf32>
    %cst_127 = arith.constant dense<0.000000e+00> : vector<16xf32>
    %362 = vector.multi_reduction <add>, %357, %cst_127 [1] : vector<16x32xf32> to vector<16xf32>
    %363 = vector.shape_cast %362 : vector<16xf32> to vector<16x1xf32>
    %cst_128 = arith.constant 3.200000e+01 : f32
    %364 = vector.broadcast %cst_128 : f32 to vector<16x1xf32>
    %365 = arith.divf %363, %364 : vector<16x1xf32>
    %366 = vector.broadcast %365 : vector<16x1xf32> to vector<16x32xf32>
    %367 = arith.subf %357, %366 : vector<16x32xf32>
    %368 = arith.mulf %367, %367 : vector<16x32xf32>
    %cst_129 = arith.constant dense<0.000000e+00> : vector<16xf32>
    %369 = vector.multi_reduction <add>, %368, %cst_129 [1] : vector<16x32xf32> to vector<16xf32>
    %370 = vector.shape_cast %369 : vector<16xf32> to vector<16x1xf32>
    %cst_130 = arith.constant 3.200000e+01 : f32
    %371 = vector.broadcast %cst_130 : f32 to vector<16x1xf32>
    %372 = arith.divf %370, %371 : vector<16x1xf32>
    %373 = vector.broadcast %365 : vector<16x1xf32> to vector<16x32xf32>
    %374 = arith.subf %357, %373 : vector<16x32xf32>
    %cst_131 = arith.constant 9.99999996E-13 : f32
    %375 = vector.broadcast %cst_131 : f32 to vector<16x1xf32>
    %376 = arith.addf %372, %375 : vector<16x1xf32>
    %377 = math.rsqrt %376 : vector<16x1xf32>
    %378 = vector.broadcast %377 : vector<16x1xf32> to vector<16x32xf32>
    %379 = arith.mulf %374, %378 : vector<16x32xf32>
    %380 = vector.broadcast %359 : vector<1x32xf32> to vector<16x32xf32>
    %381 = arith.mulf %379, %380 : vector<16x32xf32>
    %382 = vector.broadcast %361 : vector<1x32xf32> to vector<16x32xf32>
    %383 = arith.addf %381, %382 : vector<16x32xf32>
    %c1_132 = arith.constant 1 : index
    %c0_133 = arith.constant 0 : index
    %c0_134 = arith.constant 0 : index
    %384 = vector.load %arg11[%c1_132, %c0_133, %c0_134] : memref<2x32x64xbf16, #tpu.memory_space<vmem>>, vector<1x32x64xbf16>
    %385 = vector.shape_cast %384 : vector<1x32x64xbf16> to vector<32x64xbf16>
    %386 = arith.truncf %383 : vector<16x32xf32> to vector<16x32xbf16>
    %cst_135 = arith.constant dense<0.000000e+00> : vector<16x64xf32>
    %387 = tpu.matmul %386, %385, %cst_135 {dimension_numbers = #tpu.dot_dimension_numbers<[1], [0], [0], [1], [0, 0, 1, 1], [], []>} : vector<16x32xbf16>, vector<32x64xbf16>, vector<16x64xf32> -> vector<16x64xf32>
    %c1_136 = arith.constant 1 : index
    %c0_137 = arith.constant 0 : index
    %c0_138 = arith.constant 0 : index
    %388 = vector.load %arg12[%c1_136, %c0_137, %c0_138] : memref<2x1x64xf32, #tpu.memory_space<vmem>>, vector<1x1x64xf32>
    %389 = vector.shape_cast %388 : vector<1x1x64xf32> to vector<1x64xf32>
    %390 = vector.broadcast %389 : vector<1x64xf32> to vector<16x64xf32>
    %391 = arith.addf %387, %390 : vector<16x64xf32>
    %392 = arith.mulf %391, %391 : vector<16x64xf32>
    %393 = arith.mulf %391, %392 : vector<16x64xf32>
    %cst_139 = arith.constant 4.471500e-02 : f32
    %394 = vector.broadcast %cst_139 : f32 to vector<16x64xf32>
    %395 = arith.mulf %394, %393 : vector<16x64xf32>
    %396 = arith.addf %391, %395 : vector<16x64xf32>
    %cst_140 = arith.constant 0.797884583 : f32
    %397 = vector.broadcast %cst_140 : f32 to vector<16x64xf32>
    %398 = arith.mulf %397, %396 : vector<16x64xf32>
    %399 = math.tanh %398 : vector<16x64xf32>
    %cst_141 = arith.constant 1.000000e+00 : f32
    %400 = vector.broadcast %cst_141 : f32 to vector<16x64xf32>
    %401 = arith.addf %400, %399 : vector<16x64xf32>
    %cst_142 = arith.constant 5.000000e-01 : f32
    %402 = vector.broadcast %cst_142 : f32 to vector<16x64xf32>
    %403 = arith.mulf %402, %401 : vector<16x64xf32>
    %404 = arith.mulf %391, %403 : vector<16x64xf32>
    %c1_143 = arith.constant 1 : index
    %c0_144 = arith.constant 0 : index
    %c0_145 = arith.constant 0 : index
    %405 = vector.load %arg13[%c1_143, %c0_144, %c0_145] : memref<2x64x32xbf16, #tpu.memory_space<vmem>>, vector<1x64x32xbf16>
    %406 = vector.shape_cast %405 : vector<1x64x32xbf16> to vector<64x32xbf16>
    %407 = arith.truncf %404 : vector<16x64xf32> to vector<16x64xbf16>
    %cst_146 = arith.constant dense<0.000000e+00> : vector<16x32xf32>
    %408 = tpu.matmul %407, %406, %cst_146 {dimension_numbers = #tpu.dot_dimension_numbers<[1], [0], [0], [1], [0, 0, 1, 1], [], []>} : vector<16x64xbf16>, vector<64x32xbf16>, vector<16x32xf32> -> vector<16x32xf32>
    %c1_147 = arith.constant 1 : index
    %c0_148 = arith.constant 0 : index
    %c0_149 = arith.constant 0 : index
    %409 = vector.load %arg14[%c1_147, %c0_148, %c0_149] : memref<2x1x32xf32, #tpu.memory_space<vmem>>, vector<1x1x32xf32>
    %410 = vector.shape_cast %409 : vector<1x1x32xf32> to vector<1x32xf32>
    %411 = vector.broadcast %410 : vector<1x32xf32> to vector<16x32xf32>
    %412 = arith.addf %408, %411 : vector<16x32xf32>
    %413 = arith.addf %412, %383 : vector<16x32xf32>
    %c1_150 = arith.constant 1 : index
    %c0_151 = arith.constant 0 : index
    %c0_152 = arith.constant 0 : index
    %414 = vector.load %arg15[%c1_150, %c0_151, %c0_152] : memref<2x1x32xf32, #tpu.memory_space<vmem>>, vector<1x1x32xf32>
    %415 = vector.shape_cast %414 : vector<1x1x32xf32> to vector<1x32xf32>
    %c1_153 = arith.constant 1 : index
    %c0_154 = arith.constant 0 : index
    %c0_155 = arith.constant 0 : index
    %416 = vector.load %arg16[%c1_153, %c0_154, %c0_155] : memref<2x1x32xf32, #tpu.memory_space<vmem>>, vector<1x1x32xf32>
    %417 = vector.shape_cast %416 : vector<1x1x32xf32> to vector<1x32xf32>
    %cst_156 = arith.constant dense<0.000000e+00> : vector<16xf32>
    %418 = vector.multi_reduction <add>, %413, %cst_156 [1] : vector<16x32xf32> to vector<16xf32>
    %419 = vector.shape_cast %418 : vector<16xf32> to vector<16x1xf32>
    %cst_157 = arith.constant 3.200000e+01 : f32
    %420 = vector.broadcast %cst_157 : f32 to vector<16x1xf32>
    %421 = arith.divf %419, %420 : vector<16x1xf32>
    %422 = vector.broadcast %421 : vector<16x1xf32> to vector<16x32xf32>
    %423 = arith.subf %413, %422 : vector<16x32xf32>
    %424 = arith.mulf %423, %423 : vector<16x32xf32>
    %cst_158 = arith.constant dense<0.000000e+00> : vector<16xf32>
    %425 = vector.multi_reduction <add>, %424, %cst_158 [1] : vector<16x32xf32> to vector<16xf32>
    %426 = vector.shape_cast %425 : vector<16xf32> to vector<16x1xf32>
    %cst_159 = arith.constant 3.200000e+01 : f32
    %427 = vector.broadcast %cst_159 : f32 to vector<16x1xf32>
    %428 = arith.divf %426, %427 : vector<16x1xf32>
    %429 = vector.broadcast %421 : vector<16x1xf32> to vector<16x32xf32>
    %430 = arith.subf %413, %429 : vector<16x32xf32>
    %cst_160 = arith.constant 9.99999996E-13 : f32
    %431 = vector.broadcast %cst_160 : f32 to vector<16x1xf32>
    %432 = arith.addf %428, %431 : vector<16x1xf32>
    %433 = math.rsqrt %432 : vector<16x1xf32>
    %434 = vector.broadcast %433 : vector<16x1xf32> to vector<16x32xf32>
    %435 = arith.mulf %430, %434 : vector<16x32xf32>
    %436 = vector.broadcast %415 : vector<1x32xf32> to vector<16x32xf32>
    %437 = arith.mulf %435, %436 : vector<16x32xf32>
    %438 = vector.broadcast %417 : vector<1x32xf32> to vector<16x32xf32>
    %439 = arith.addf %437, %438 : vector<16x32xf32>
    %440 = vector.shape_cast %439 : vector<16x32xf32> to vector<2x8x32xf32>
    %441 = vector.extract_strided_slice %440 {offsets = [0, 0, 0], sizes = [2, 1, 32], strides = [1, 1, 1]} : vector<2x8x32xf32> to vector<2x1x32xf32>
    %442 = vector.shape_cast %441 : vector<2x1x32xf32> to vector<2x32xf32>
    %c0_161 = arith.constant 0 : index
    %c0_162 = arith.constant 0 : index
    %443 = vector.load %arg17[%c0_161, %c0_162] : memref<32x32xbf16, #tpu.memory_space<vmem>>, vector<32x32xbf16>
    %444 = arith.truncf %442 : vector<2x32xf32> to vector<2x32xbf16>
    %cst_163 = arith.constant dense<0.000000e+00> : vector<2x32xf32>
    %445 = tpu.matmul %444, %443, %cst_163 {dimension_numbers = #tpu.dot_dimension_numbers<[1], [0], [0], [1], [0, 0, 1, 1], [], []>} : vector<2x32xbf16>, vector<32x32xbf16>, vector<2x32xf32> -> vector<2x32xf32>
    %c0_164 = arith.constant 0 : index
    %c0_165 = arith.constant 0 : index
    %446 = vector.load %arg18[%c0_164, %c0_165] : memref<1x32xf32, #tpu.memory_space<vmem>>, vector<1x32xf32>
    %447 = vector.broadcast %446 : vector<1x32xf32> to vector<2x32xf32>
    %448 = arith.addf %445, %447 : vector<2x32xf32>
    %449 = math.tanh %448 : vector<2x32xf32>
    %c0_166 = arith.constant 0 : index
    %c0_167 = arith.constant 0 : index
    %450 = vector.load %arg19[%c0_166, %c0_167] : memref<32x1xbf16, #tpu.memory_space<vmem>>, vector<32x1xbf16>
    %451 = arith.truncf %449 : vector<2x32xf32> to vector<2x32xbf16>
    %cst_168 = arith.constant dense<0.000000e+00> : vector<2x1xf32>
    %452 = tpu.matmul %451, %450, %cst_168 {dimension_numbers = #tpu.dot_dimension_numbers<[1], [0], [0], [1], [0, 0, 1, 1], [], []>} : vector<2x32xbf16>, vector<32x1xbf16>, vector<2x1xf32> -> vector<2x1xf32>
    %c0_169 = arith.constant 0 : index
    %c0_170 = arith.constant 0 : index
    %453 = vector.load %arg20[%c0_169, %c0_170] : memref<1x1xf32, #tpu.memory_space<vmem>>, vector<1x1xf32>
    %454 = vector.broadcast %453 : vector<1x1xf32> to vector<2x1xf32>
    %455 = arith.addf %452, %454 : vector<2x1xf32>
    %456 = vector.shape_cast %455 : vector<2x1xf32> to vector<1x2x1xf32>
    %c0_171 = arith.constant 0 : index
    %c0_172 = arith.constant 0 : index
    %c0_173 = arith.constant 0 : index
    %457 = vector.load %arg21[%c0_171, %c0_172, %c0_173] : memref<1x2x1xf32, #tpu.memory_space<vmem>>, vector<1x2x1xf32>
    tpu.vector_store %arg21[%c0_171, %c0_172, %c0_173], %456 {strides = array<i32>} : memref<1x2x1xf32, #tpu.memory_space<vmem>>, vector<1x2x1xf32>,
    %458 = vector.extract_strided_slice %455 {offsets = [0, 0], sizes = [1, 1], strides = [1, 1]} : vector<2x1xf32> to vector<1x1xf32>
    %459 = vector.extract_strided_slice %455 {offsets = [1, 0], sizes = [1, 1], strides = [1, 1]} : vector<2x1xf32> to vector<1x1xf32>
    %460 = arith.maximumf %458, %459 : vector<1x1xf32>
    %461 = arith.subf %458, %460 : vector<1x1xf32>
    %462 = math.exp %461 : vector<1x1xf32>
    %463 = arith.subf %459, %460 : vector<1x1xf32>
    %464 = math.exp %463 : vector<1x1xf32>
    %465 = arith.addf %462, %464 : vector<1x1xf32>
    %466 = math.log %465 : vector<1x1xf32>
    %467 = arith.addf %460, %466 : vector<1x1xf32>
    %468 = arith.subf %467, %458 : vector<1x1xf32>
    %469 = vector.shape_cast %468 : vector<1x1xf32> to vector<1x1x1xf32>
    %c0_174 = arith.constant 0 : index
    %c0_175 = arith.constant 0 : index
    %c0_176 = arith.constant 0 : index
    %470 = vector.load %arg22[%c0_174, %c0_175, %c0_176] : memref<1x1x1xf32, #tpu.memory_space<vmem>>, vector<1x1x1xf32>
    tpu.vector_store %arg22[%c0_174, %c0_175, %c0_176], %469 {strides = array<i32>} : memref<1x1x1xf32, #tpu.memory_space<vmem>>, vector<1x1x1xf32>,
    return
  }
  func.func @transform_0(%arg0: i32) -> (i32, i32) {
    %c0_i32 = arith.constant 0 : i32
    %c0_i32_0 = arith.constant 0 : i32
    return %arg0, %c0_i32 : i32, i32
  }
  func.func @transform_1(%arg0: i32) -> (i32, i32, i32) {
    %c0_i32 = arith.constant 0 : i32
    %c0_i32_0 = arith.constant 0 : i32
    %c0_i32_1 = arith.constant 0 : i32
    return %arg0, %c0_i32, %c0_i32_0 : i32, i32, i32
  }
  func.func @transform_2(%arg0: i32) -> (i32, i32) {
    %c0_i32 = arith.constant 0 : i32
    %c0_i32_0 = arith.constant 0 : i32
    %c0_i32_1 = arith.constant 0 : i32
    return %c0_i32, %c0_i32_0 : i32, i32
  }
  func.func @transform_3(%arg0: i32) -> (i32, i32) {
    %c0_i32 = arith.constant 0 : i32
    %c0_i32_0 = arith.constant 0 : i32
    %c0_i32_1 = arith.constant 0 : i32
    return %c0_i32, %c0_i32_0 : i32, i32
  }
  func.func @transform_4(%arg0: i32) -> (i32, i32, i32) {
    %c0_i32 = arith.constant 0 : i32
    %c0_i32_0 = arith.constant 0 : i32
    %c0_i32_1 = arith.constant 0 : i32
    %c0_i32_2 = arith.constant 0 : i32
    return %c0_i32, %c0_i32_0, %c0_i32_1 : i32, i32, i32
  }
  func.func @transform_5(%arg0: i32) -> (i32, i32, i32) {
    %c0_i32 = arith.constant 0 : i32
    %c0_i32_0 = arith.constant 0 : i32
    %c0_i32_1 = arith.constant 0 : i32
    %c0_i32_2 = arith.constant 0 : i32
    return %c0_i32, %c0_i32_0, %c0_i32_1 : i32, i32, i32
  }
  func.func @transform_6(%arg0: i32) -> (i32, i32, i32) {
    %c0_i32 = arith.constant 0 : i32
    %c0_i32_0 = arith.constant 0 : i32
    %c0_i32_1 = arith.constant 0 : i32
    %c0_i32_2 = arith.constant 0 : i32
    return %c0_i32, %c0_i32_0, %c0_i32_1 : i32, i32, i32
  }
  func.func @transform_7(%arg0: i32) -> (i32, i32, i32) {
    %c0_i32 = arith.constant 0 : i32
    %c0_i32_0 = arith.constant 0 : i32
    %c0_i32_1 = arith.constant 0 : i32
    %c0_i32_2 = arith.constant 0 : i32
    return %c0_i32, %c0_i32_0, %c0_i32_1 : i32, i32, i32
  }
  func.func @transform_8(%arg0: i32) -> (i32, i32, i32) {
    %c0_i32 = arith.constant 0 : i32
    %c0_i32_0 = arith.constant 0 : i32
    %c0_i32_1 = arith.constant 0 : i32
    %c0_i32_2 = arith.constant 0 : i32
    return %c0_i32, %c0_i32_0, %c0_i32_1 : i32, i32, i32
  }
  func.func @transform_9(%arg0: i32) -> (i32, i32, i32) {
    %c0_i32 = arith.constant 0 : i32
    %c0_i32_0 = arith.constant 0 : i32
    %c0_i32_1 = arith.constant 0 : i32
    %c0_i32_2 = arith.constant 0 : i32
    return %c0_i32, %c0_i32_0, %c0_i32_1 : i32, i32, i32
  }
  func.func @transform_10(%arg0: i32) -> (i32, i32, i32) {
    %c0_i32 = arith.constant 0 : i32
    %c0_i32_0 = arith.constant 0 : i32
    %c0_i32_1 = arith.constant 0 : i32
    %c0_i32_2 = arith.constant 0 : i32
    return %c0_i32, %c0_i32_0, %c0_i32_1 : i32, i32, i32
  }
  func.func @transform_11(%arg0: i32) -> (i32, i32, i32) {
    %c0_i32 = arith.constant 0 : i32
    %c0_i32_0 = arith.constant 0 : i32
    %c0_i32_1 = arith.constant 0 : i32
    %c0_i32_2 = arith.constant 0 : i32
    return %c0_i32, %c0_i32_0, %c0_i32_1 : i32, i32, i32
  }
  func.func @transform_12(%arg0: i32) -> (i32, i32, i32) {
    %c0_i32 = arith.constant 0 : i32
    %c0_i32_0 = arith.constant 0 : i32
    %c0_i32_1 = arith.constant 0 : i32
    %c0_i32_2 = arith.constant 0 : i32
    return %c0_i32, %c0_i32_0, %c0_i32_1 : i32, i32, i32
  }
  func.func @transform_13(%arg0: i32) -> (i32, i32, i32) {
    %c0_i32 = arith.constant 0 : i32
    %c0_i32_0 = arith.constant 0 : i32
    %c0_i32_1 = arith.constant 0 : i32
    %c0_i32_2 = arith.constant 0 : i32
    return %c0_i32, %c0_i32_0, %c0_i32_1 : i32, i32, i32
  }
  func.func @transform_14(%arg0: i32) -> (i32, i32, i32) {
    %c0_i32 = arith.constant 0 : i32
    %c0_i32_0 = arith.constant 0 : i32
    %c0_i32_1 = arith.constant 0 : i32
    %c0_i32_2 = arith.constant 0 : i32
    return %c0_i32, %c0_i32_0, %c0_i32_1 : i32, i32, i32
  }
  func.func @transform_15(%arg0: i32) -> (i32, i32, i32) {
    %c0_i32 = arith.constant 0 : i32
    %c0_i32_0 = arith.constant 0 : i32
    %c0_i32_1 = arith.constant 0 : i32
    %c0_i32_2 = arith.constant 0 : i32
    return %c0_i32, %c0_i32_0, %c0_i32_1 : i32, i32, i32
  }
  func.func @transform_16(%arg0: i32) -> (i32, i32) {
    %c0_i32 = arith.constant 0 : i32
    %c0_i32_0 = arith.constant 0 : i32
    %c0_i32_1 = arith.constant 0 : i32
    return %c0_i32, %c0_i32_0 : i32, i32
  }
  func.func @transform_17(%arg0: i32) -> (i32, i32) {
    %c0_i32 = arith.constant 0 : i32
    %c0_i32_0 = arith.constant 0 : i32
    %c0_i32_1 = arith.constant 0 : i32
    return %c0_i32, %c0_i32_0 : i32, i32
  }
  func.func @transform_18(%arg0: i32) -> (i32, i32) {
    %c0_i32 = arith.constant 0 : i32
    %c0_i32_0 = arith.constant 0 : i32
    %c0_i32_1 = arith.constant 0 : i32
    return %c0_i32, %c0_i32_0 : i32, i32
  }
  func.func @transform_19(%arg0: i32) -> (i32, i32) {
    %c0_i32 = arith.constant 0 : i32
    %c0_i32_0 = arith.constant 0 : i32
    %c0_i32_1 = arith.constant 0 : i32
    return %c0_i32, %c0_i32_0 : i32, i32
  }
  func.func @transform_20(%arg0: i32) -> (i32, i32, i32) {
    %c0_i32 = arith.constant 0 : i32
    %c0_i32_0 = arith.constant 0 : i32
    %c0_i32_1 = arith.constant 0 : i32
    return %arg0, %c0_i32, %c0_i32_0 : i32, i32, i32
  }
  func.func @transform_21(%arg0: i32) -> (i32, i32, i32) {
    %c0_i32 = arith.constant 0 : i32
    %c0_i32_0 = arith.constant 0 : i32
    %c0_i32_1 = arith.constant 0 : i32
    return %arg0, %c0_i32, %c0_i32_0 : i32, i32, i32
  }
}

</mosaic_0001>

<llo_original>
// kernel: reranker_forward.1
$region0: #{reranker_forward.1}
  #allocation0 [shape = 'u32[]', space=smem, size = 0x4, offset = 0x4, fixed_abs, tag = 'smem constant byte address 0x4 - core index']
  #allocation1 [shape = 'u32[144,128]{1,0:T(1,128)}', space=vmem, size = 0x12000, scoped, tag = 'internal scratch']
  #allocation2 [shape = 'f32[1,1]{1,0:T(1,128)S(1)}', space=vmem, size = 0x200, scoped, tag = 'scoped memory for reranker_forward.1']
  %s0 = inlined_call_operand.vmem [shape: f32[32,32], index: 0, kind: input, shape index: {}]
  %s1 = inlined_call_operand.vmem [shape: f32[2,2,8], index: 1, kind: input, shape index: {}]
  %s2 = inlined_call_operand.vmem [shape: f32[1,32], index: 2, kind: input, shape index: {}]
  %s3 = inlined_call_operand.vmem [shape: f32[1,32], index: 3, kind: input, shape index: {}]
  %s4 = inlined_call_operand.vmem [shape: bf16[2,32,96], index: 4, kind: input, shape index: {}]
  %s5 = inlined_call_operand.vmem [shape: f32[2,1,96], index: 5, kind: input, shape index: {}]
  %s6 = inlined_call_operand.vmem [shape: bf16[2,32,32], index: 6, kind: input, shape index: {}]
  %s7 = inlined_call_operand.vmem [shape: f32[2,1,32], index: 7, kind: input, shape index: {}]
  %s8 = inlined_call_operand.vmem [shape: f32[2,1,32], index: 8, kind: input, shape index: {}]
  %s9 = inlined_call_operand.vmem [shape: f32[2,1,32], index: 9, kind: input, shape index: {}]
  %s10 = inlined_call_operand.vmem [shape: bf16[2,32,64], index: 10, kind: input, shape index: {}]
  %s11 = inlined_call_operand.vmem [shape: f32[2,1,64], index: 11, kind: input, shape index: {}]
  %s12 = inlined_call_operand.vmem [shape: bf16[2,64,32], index: 12, kind: input, shape index: {}]
  %s13 = inlined_call_operand.vmem [shape: f32[2,1,32], index: 13, kind: input, shape index: {}]
  %s14 = inlined_call_operand.vmem [shape: f32[2,1,32], index: 14, kind: input, shape index: {}]
  %s15 = inlined_call_operand.vmem [shape: f32[2,1,32], index: 15, kind: input, shape index: {}]
  %s16 = inlined_call_operand.vmem [shape: bf16[32,32], index: 16, kind: input, shape index: {}]
  %s17 = inlined_call_operand.vmem [shape: f32[1,32], index: 17, kind: input, shape index: {}]
  %s18 = inlined_call_operand.vmem [shape: bf16[32,1], index: 18, kind: input, shape index: {}]
  %s19 = inlined_call_operand.<no memory space> [shape: f32[1,1], index: 19, kind: input, shape index: {}]
  %s20 = inlined_call_operand.vmem [shape: f32[2,2,1], index: 20, kind: output, shape index: {0}]
  %s21 = inlined_call_operand.vmem [shape: f32[2,1,1], index: 21, kind: output, shape index: {1}]
  %22 = xla_tuple %s20, %s21
  %s23 = sld [smem:[#allocation0]]
  $region121: #{reranker_forward.1} parent=0
    _
  %s25 = ssub.s32 1, %s23
  %s26 = scalar_select 0, %s25, %s23
  %v27 = vstv %s19
  %28 = vst [vmem:[#allocation2] sm:$0x1] %v27
  loop: start=0, step=1, limit=4
  $region2: #{reranker_forward.1} parent=0 // loop_pre_header
    _
  $region3: #{reranker_forward.1} parent=0 // loop_header
    %s30 = sphi 0, %s34
    %p31 = scmp.ge.s32.totalorder %s30, 4
    %s40 = sphi 0, %s42
    %s43 = sphi 0, %s40
    %s44 = sphi 0, %s43
    %s60 = sphi 0, %s44
    %s66 = sphi 0, %s68
    %s69 = sphi 0, %s66
    %s70 = sphi 0, %s69
    %s86 = sphi 0, %s70
    %s90 = sphi 0, %s90
    %s92 = sphi 0, %s90
    %s93 = sphi 0, %s92
    %s107 = sphi 0, %s93
    %s111 = sphi 0, %s111
    %s113 = sphi 0, %s111
    %s114 = sphi 0, %s113
    %s128 = sphi 0, %s114
    %s132 = sphi 0, %s132
    %s134 = sphi 0, %s132
    %s135 = sphi 0, %s134
    %s149 = sphi 0, %s135
    %s153 = sphi 0, %s153
    %s155 = sphi 0, %s153
    %s156 = sphi 0, %s155
    %s170 = sphi 0, %s156
    %s174 = sphi 0, %s174
    %s176 = sphi 0, %s174
    %s177 = sphi 0, %s176
    %s191 = sphi 0, %s177
    %s195 = sphi 0, %s195
    %s197 = sphi 0, %s195
    %s198 = sphi 0, %s197
    %s212 = sphi 0, %s198
    %s216 = sphi 0, %s216
    %s218 = sphi 0, %s216
    %s219 = sphi 0, %s218
    %s233 = sphi 0, %s219
    %s237 = sphi 0, %s237
    %s239 = sphi 0, %s237
    %s240 = sphi 0, %s239
    %s254 = sphi 0, %s240
    %s258 = sphi 0, %s258
    %s260 = sphi 0, %s258
    %s261 = sphi 0, %s260
    %s275 = sphi 0, %s261
    %s279 = sphi 0, %s279
    %s281 = sphi 0, %s279
    %s282 = sphi 0, %s281
    %s296 = sphi 0, %s282
    %s300 = sphi 0, %s300
    %s302 = sphi 0, %s300
    %s303 = sphi 0, %s302
    %s317 = sphi 0, %s303
    %s321 = sphi 0, %s321
    %s323 = sphi 0, %s321
    %s324 = sphi 0, %s323
    %s338 = sphi 0, %s324
    %s342 = sphi 0, %s342
    %s344 = sphi 0, %s342
    %s345 = sphi 0, %s344
    %s359 = sphi 0, %s345
    %s363 = sphi 0, %s363
    %s365 = sphi 0, %s363
    %s366 = sphi 0, %s365
    %s380 = sphi 0, %s366
    %s384 = sphi 0, %s384
    %s386 = sphi 0, %s384
    %s387 = sphi 0, %s386
    %s401 = sphi 0, %s387
    %s405 = sphi 0, %s405
    %s407 = sphi 0, %s405
    %s408 = sphi 0, %s407
    %s422 = sphi 0, %s408
    %s426 = sphi 0, %s426
    %s428 = sphi 0, %s426
    %s429 = sphi 0, %s428
    %s443 = sphi 0, %s429
    %s447 = sphi 0, %s447
    %s449 = sphi 0, %s447
    %s450 = sphi 0, %s449
    %s464 = sphi 0, %s450
    %s470 = sphi 0, %s472
    %s473 = sphi 0, %s470
    %s474 = sphi 0, %s473
    %s490 = sphi 0, %s474
    %s496 = sphi 0, %s498
    %s499 = sphi 0, %s496
    %s500 = sphi 0, %s499
    %s516 = sphi 0, %s500
  $region4: #{reranker_forward.1} parent=0 // loop_header_branch
    %33 = sbr.rel (%p31) target = $region8
  $region5: #{reranker_forward.1} parent=0 // loop_body
    %s35 = ssub.s32 %s30, 1
    %s36 = ssub.s32 %s30, 2
    %s37 = sadd.s32 %s30, 1
    %s38 = ssub.s32 %s30, %s37
    %p39 = scmp.eq.s32.totalorder %s38, 0
    %s41 = sadd.s32 %s40, 1
    %s42 = scalar_select %p39, %s40, %s41
    %p45 = pneg %p39
    %p46 = scmp.eq.s32.totalorder %s30, 1
    %p47 = por %p45, %p46
    %p48 = scmp.ne.s32.totalorder %s40, %s43
    %p49 = scmp.eq.s32.totalorder %s30, 0
    %p50 = por %p48, %p49
    %p51 = scmp.ne.s32.totalorder %s40, %s43
    %p52 = scmp.eq.s32.totalorder %s35, 1
    %p53 = por %p51, %p52
    %p54 = scmp.ne.s32.totalorder %s43, %s44
    %p55 = scmp.eq.s32.totalorder %s35, 0
    %p56 = por %p54, %p55
    %p57 = scmp.ne.s32.totalorder %s43, %s44
    %p58 = scmp.eq.s32.totalorder %s36, 1
    %p59 = por %p57, %p58
    %p61 = scmp.ne.s32.totalorder %s44, %s60
    %p62 = scmp.eq.s32.totalorder %s36, 0
    %p63 = por %p61, %p62
    %s64 = ssub.s32 %s30, %s37
    %p65 = scmp.eq.s32.totalorder %s64, 0
    %s67 = sadd.s32 %s66, 1
    %s68 = scalar_select %p65, %s66, %s67
    %p71 = pneg %p65
    %p72 = scmp.eq.s32.totalorder %s30, 1
    %p73 = por %p71, %p72
    %p74 = scmp.ne.s32.totalorder %s66, %s69
    %p75 = scmp.eq.s32.totalorder %s30, 0
    %p76 = por %p74, %p75
    %p77 = scmp.ne.s32.totalorder %s66, %s69
    %p78 = scmp.eq.s32.totalorder %s35, 1
    %p79 = por %p77, %p78
    %p80 = scmp.ne.s32.totalorder %s69, %s70
    %p81 = scmp.eq.s32.totalorder %s35, 0
    %p82 = por %p80, %p81
    %p83 = scmp.ne.s32.totalorder %s69, %s70
    %p84 = scmp.eq.s32.totalorder %s36, 1
    %p85 = por %p83, %p84
    %p87 = scmp.ne.s32.totalorder %s70, %s86
    %p88 = scmp.eq.s32.totalorder %s36, 0
    %p89 = por %p87, %p88
    %s91 = sadd.s32 %s90, 1
    %p94 = scmp.eq.s32.totalorder %s30, 1
    %p95 = scmp.ne.s32.totalorder %s90, %s92
    %p96 = scmp.eq.s32.totalorder %s30, 0
    %p97 = por %p95, %p96
    %p98 = scmp.ne.s32.totalorder %s90, %s92
    %p99 = scmp.eq.s32.totalorder %s35, 1
    %p100 = por %p98, %p99
    %p101 = scmp.ne.s32.totalorder %s92, %s93
    %p102 = scmp.eq.s32.totalorder %s35, 0
    %p103 = por %p101, %p102
    %p104 = scmp.ne.s32.totalorder %s92, %s93
    %p105 = scmp.eq.s32.totalorder %s36, 1
    %p106 = por %p104, %p105
    %p108 = scmp.ne.s32.totalorder %s93, %s107
    %p109 = scmp.eq.s32.totalorder %s36, 0
    %p110 = por %p108, %p109
    %s112 = sadd.s32 %s111, 1
    %p115 = scmp.eq.s32.totalorder %s30, 1
    %p116 = scmp.ne.s32.totalorder %s111, %s113
    %p117 = scmp.eq.s32.totalorder %s30, 0
    %p118 = por %p116, %p117
    %p119 = scmp.ne.s32.totalorder %s111, %s113
    %p120 = scmp.eq.s32.totalorder %s35, 1
    %p121 = por %p119, %p120
    %p122 = scmp.ne.s32.totalorder %s113, %s114
    %p123 = scmp.eq.s32.totalorder %s35, 0
    %p124 = por %p122, %p123
    %p125 = scmp.ne.s32.totalorder %s113, %s114
    %p126 = scmp.eq.s32.totalorder %s36, 1
    %p127 = por %p125, %p126
    %p129 = scmp.ne.s32.totalorder %s114, %s128
    %p130 = scmp.eq.s32.totalorder %s36, 0
    %p131 = por %p129, %p130
    %s133 = sadd.s32 %s132, 1
    %p136 = scmp.eq.s32.totalorder %s30, 1
    %p137 = scmp.ne.s32.totalorder %s132, %s134
    %p138 = scmp.eq.s32.totalorder %s30, 0
    %p139 = por %p137, %p138
    %p140 = scmp.ne.s32.totalorder %s132, %s134
    %p141 = scmp.eq.s32.totalorder %s35, 1
    %p142 = por %p140, %p141
    %p143 = scmp.ne.s32.totalorder %s134, %s135
    %p144 = scmp.eq.s32.totalorder %s35, 0
    %p145 = por %p143, %p144
    %p146 = scmp.ne.s32.totalorder %s134, %s135
    %p147 = scmp.eq.s32.totalorder %s36, 1
    %p148 = por %p146, %p147
    %p150 = scmp.ne.s32.totalorder %s135, %s149
    %p151 = scmp.eq.s32.totalorder %s36, 0
    %p152 = por %p150, %p151
    %s154 = sadd.s32 %s153, 1
    %p157 = scmp.eq.s32.totalorder %s30, 1
    %p158 = scmp.ne.s32.totalorder %s153, %s155
    %p159 = scmp.eq.s32.totalorder %s30, 0
    %p160 = por %p158, %p159
    %p161 = scmp.ne.s32.totalorder %s153, %s155
    %p162 = scmp.eq.s32.totalorder %s35, 1
    %p163 = por %p161, %p162
    %p164 = scmp.ne.s32.totalorder %s155, %s156
    %p165 = scmp.eq.s32.totalorder %s35, 0
    %p166 = por %p164, %p165
    %p167 = scmp.ne.s32.totalorder %s155, %s156
    %p168 = scmp.eq.s32.totalorder %s36, 1
    %p169 = por %p167, %p168
    %p171 = scmp.ne.s32.totalorder %s156, %s170
    %p172 = scmp.eq.s32.totalorder %s36, 0
    %p173 = por %p171, %p172
    %s175 = sadd.s32 %s174, 1
    %p178 = scmp.eq.s32.totalorder %s30, 1
    %p179 = scmp.ne.s32.totalorder %s174, %s176
    %p180 = scmp.eq.s32.totalorder %s30, 0
    %p181 = por %p179, %p180
    %p182 = scmp.ne.s32.totalorder %s174, %s176
    %p183 = scmp.eq.s32.totalorder %s35, 1
    %p184 = por %p182, %p183
    %p185 = scmp.ne.s32.totalorder %s176, %s177
    %p186 = scmp.eq.s32.totalorder %s35, 0
    %p187 = por %p185, %p186
    %p188 = scmp.ne.s32.totalorder %s176, %s177
    %p189 = scmp.eq.s32.totalorder %s36, 1
    %p190 = por %p188, %p189
    %p192 = scmp.ne.s32.totalorder %s177, %s191
    %p193 = scmp.eq.s32.totalorder %s36, 0
    %p194 = por %p192, %p193
    %s196 = sadd.s32 %s195, 1
    %p199 = scmp.eq.s32.totalorder %s30, 1
    %p200 = scmp.ne.s32.totalorder %s195, %s197
    %p201 = scmp.eq.s32.totalorder %s30, 0
    %p202 = por %p200, %p201
    %p203 = scmp.ne.s32.totalorder %s195, %s197
    %p204 = scmp.eq.s32.totalorder %s35, 1
    %p205 = por %p203, %p204
    %p206 = scmp.ne.s32.totalorder %s197, %s198
    %p207 = scmp.eq.s32.totalorder %s35, 0
    %p208 = por %p206, %p207
    %p209 = scmp.ne.s32.totalorder %s197, %s198
    %p210 = scmp.eq.s32.totalorder %s36, 1
    %p211 = por %p209, %p210
    %p213 = scmp.ne.s32.totalorder %s198, %s212
    %p214 = scmp.eq.s32.totalorder %s36, 0
    %p215 = por %p213, %p214
    %s217 = sadd.s32 %s216, 1
    %p220 = scmp.eq.s32.totalorder %s30, 1
    %p221 = scmp.ne.s32.totalorder %s216, %s218
    %p222 = scmp.eq.s32.totalorder %s30, 0
    %p223 = por %p221, %p222
    %p224 = scmp.ne.s32.totalorder %s216, %s218
    %p225 = scmp.eq.s32.totalorder %s35, 1
    %p226 = por %p224, %p225
    %p227 = scmp.ne.s32.totalorder %s218, %s219
    %p228 = scmp.eq.s32.totalorder %s35, 0
    %p229 = por %p227, %p228
    %p230 = scmp.ne.s32.totalorder %s218, %s219
    %p231 = scmp.eq.s32.totalorder %s36, 1
    %p232 = por %p230, %p231
    %p234 = scmp.ne.s32.totalorder %s219, %s233
    %p235 = scmp.eq.s32.totalorder %s36, 0
    %p236 = por %p234, %p235
    %s238 = sadd.s32 %s237, 1
    %p241 = scmp.eq.s32.totalorder %s30, 1
    %p242 = scmp.ne.s32.totalorder %s237, %s239
    %p243 = scmp.eq.s32.totalorder %s30, 0
    %p244 = por %p242, %p243
    %p245 = scmp.ne.s32.totalorder %s237, %s239
    %p246 = scmp.eq.s32.totalorder %s35, 1
    %p247 = por %p245, %p246
    %p248 = scmp.ne.s32.totalorder %s239, %s240
    %p249 = scmp.eq.s32.totalorder %s35, 0
    %p250 = por %p248, %p249
    %p251 = scmp.ne.s32.totalorder %s239, %s240
    %p252 = scmp.eq.s32.totalorder %s36, 1
    %p253 = por %p251, %p252
    %p255 = scmp.ne.s32.totalorder %s240, %s254
    %p256 = scmp.eq.s32.totalorder %s36, 0
    %p257 = por %p255, %p256
    %s259 = sadd.s32 %s258, 1
    %p262 = scmp.eq.s32.totalorder %s30, 1
    %p263 = scmp.ne.s32.totalorder %s258, %s260
    %p264 = scmp.eq.s32.totalorder %s30, 0
    %p265 = por %p263, %p264
    %p266 = scmp.ne.s32.totalorder %s258, %s260
    %p267 = scmp.eq.s32.totalorder %s35, 1
    %p268 = por %p266, %p267
    %p269 = scmp.ne.s32.totalorder %s260, %s261
    %p270 = scmp.eq.s32.totalorder %s35, 0
    %p271 = por %p269, %p270
    %p272 = scmp.ne.s32.totalorder %s260, %s261
    %p273 = scmp.eq.s32.totalorder %s36, 1
    %p274 = por %p272, %p273
    %p276 = scmp.ne.s32.totalorder %s261, %s275
    %p277 = scmp.eq.s32.totalorder %s36, 0
    %p278 = por %p276, %p277
    %s280 = sadd.s32 %s279, 1
    %p283 = scmp.eq.s32.totalorder %s30, 1
    %p284 = scmp.ne.s32.totalorder %s279, %s281
    %p285 = scmp.eq.s32.totalorder %s30, 0
    %p286 = por %p284, %p285
    %p287 = scmp.ne.s32.totalorder %s279, %s281
    %p288 = scmp.eq.s32.totalorder %s35, 1
    %p289 = por %p287, %p288
    %p290 = scmp.ne.s32.totalorder %s281, %s282
    %p291 = scmp.eq.s32.totalorder %s35, 0
    %p292 = por %p290, %p291
    %p293 = scmp.ne.s32.totalorder %s281, %s282
    %p294 = scmp.eq.s32.totalorder %s36, 1
    %p295 = por %p293, %p294
    %p297 = scmp.ne.s32.totalorder %s282, %s296
    %p298 = scmp.eq.s32.totalorder %s36, 0
    %p299 = por %p297, %p298
    %s301 = sadd.s32 %s300, 1
    %p304 = scmp.eq.s32.totalorder %s30, 1
    %p305 = scmp.ne.s32.totalorder %s300, %s302
    %p306 = scmp.eq.s32.totalorder %s30, 0
    %p307 = por %p305, %p306
    %p308 = scmp.ne.s32.totalorder %s300, %s302
    %p309 = scmp.eq.s32.totalorder %s35, 1
    %p310 = por %p308, %p309
    %p311 = scmp.ne.s32.totalorder %s302, %s303
    %p312 = scmp.eq.s32.totalorder %s35, 0
    %p313 = por %p311, %p312
    %p314 = scmp.ne.s32.totalorder %s302, %s303
    %p315 = scmp.eq.s32.totalorder %s36, 1
    %p316 = por %p314, %p315
    %p318 = scmp.ne.s32.totalorder %s303, %s317
    %p319 = scmp.eq.s32.totalorder %s36, 0
    %p320 = por %p318, %p319
    %s322 = sadd.s32 %s321, 1
    %p325 = scmp.eq.s32.totalorder %s30, 1
    %p326 = scmp.ne.s32.totalorder %s321, %s323
    %p327 = scmp.eq.s32.totalorder %s30, 0
    %p328 = por %p326, %p327
    %p329 = scmp.ne.s32.totalorder %s321, %s323
    %p330 = scmp.eq.s32.totalorder %s35, 1
    %p331 = por %p329, %p330
    %p332 = scmp.ne.s32.totalorder %s323, %s324
    %p333 = scmp.eq.s32.totalorder %s35, 0
    %p334 = por %p332, %p333
    %p335 = scmp.ne.s32.totalorder %s323, %s324
    %p336 = scmp.eq.s32.totalorder %s36, 1
    %p337 = por %p335, %p336
    %p339 = scmp.ne.s32.totalorder %s324, %s338
    %p340 = scmp.eq.s32.totalorder %s36, 0
    %p341 = por %p339, %p340
    %s343 = sadd.s32 %s342, 1
    %p346 = scmp.eq.s32.totalorder %s30, 1
    %p347 = scmp.ne.s32.totalorder %s342, %s344
    %p348 = scmp.eq.s32.totalorder %s30, 0
    %p349 = por %p347, %p348
    %p350 = scmp.ne.s32.totalorder %s342, %s344
    %p351 = scmp.eq.s32.totalorder %s35, 1
    %p352 = por %p350, %p351
    %p353 = scmp.ne.s32.totalorder %s344, %s345
    %p354 = scmp.eq.s32.totalorder %s35, 0
    %p355 = por %p353, %p354
    %p356 = scmp.ne.s32.totalorder %s344, %s345
    %p357 = scmp.eq.s32.totalorder %s36, 1
    %p358 = por %p356, %p357
    %p360 = scmp.ne.s32.totalorder %s345, %s359
    %p361 = scmp.eq.s32.totalorder %s36, 0
    %p362 = por %p360, %p361
    %s364 = sadd.s32 %s363, 1
    %p367 = scmp.eq.s32.totalorder %s30, 1
    %p368 = scmp.ne.s32.totalorder %s363, %s365
    %p369 = scmp.eq.s32.totalorder %s30, 0
    %p370 = por %p368, %p369
    %p371 = scmp.ne.s32.totalorder %s363, %s365
    %p372 = scmp.eq.s32.totalorder %s35, 1
    %p373 = por %p371, %p372
    %p374 = scmp.ne.s32.totalorder %s365, %s366
    %p375 = scmp.eq.s32.totalorder %s35, 0
    %p376 = por %p374, %p375
    %p377 = scmp.ne.s32.totalorder %s365, %s366
    %p378 = scmp.eq.s32.totalorder %s36, 1
    %p379 = por %p377, %p378
    %p381 = scmp.ne.s32.totalorder %s366, %s380
    %p382 = scmp.eq.s32.totalorder %s36, 0
    %p383 = por %p381, %p382
    %s385 = sadd.s32 %s384, 1
    %p388 = scmp.eq.s32.totalorder %s30, 1
    %p389 = scmp.ne.s32.totalorder %s384, %s386
    %p390 = scmp.eq.s32.totalorder %s30, 0
    %p391 = por %p389, %p390
    %p392 = scmp.ne.s32.totalorder %s384, %s386
    %p393 = scmp.eq.s32.totalorder %s35, 1
    %p394 = por %p392, %p393
    %p395 = scmp.ne.s32.totalorder %s386, %s387
    %p396 = scmp.eq.s32.totalorder %s35, 0
    %p397 = por %p395, %p396
    %p398 = scmp.ne.s32.totalorder %s386, %s387
    %p399 = scmp.eq.s32.totalorder %s36, 1
    %p400 = por %p398, %p399
    %p402 = scmp.ne.s32.totalorder %s387, %s401
    %p403 = scmp.eq.s32.totalorder %s36, 0
    %p404 = por %p402, %p403
    %s406 = sadd.s32 %s405, 1
    %p409 = scmp.eq.s32.totalorder %s30, 1
    %p410 = scmp.ne.s32.totalorder %s405, %s407
    %p411 = scmp.eq.s32.totalorder %s30, 0
    %p412 = por %p410, %p411
    %p413 = scmp.ne.s32.totalorder %s405, %s407
    %p414 = scmp.eq.s32.totalorder %s35, 1
    %p415 = por %p413, %p414
    %p416 = scmp.ne.s32.totalorder %s407, %s408
    %p417 = scmp.eq.s32.totalorder %s35, 0
    %p418 = por %p416, %p417
    %p419 = scmp.ne.s32.totalorder %s407, %s408
    %p420 = scmp.eq.s32.totalorder %s36, 1
    %p421 = por %p419, %p420
    %p423 = scmp.ne.s32.totalorder %s408, %s422
    %p424 = scmp.eq.s32.totalorder %s36, 0
    %p425 = por %p423, %p424
    %s427 = sadd.s32 %s426, 1
    %p430 = scmp.eq.s32.totalorder %s30, 1
    %p431 = scmp.ne.s32.totalorder %s426, %s428
    %p432 = scmp.eq.s32.totalorder %s30, 0
    %p433 = por %p431, %p432
    %p434 = scmp.ne.s32.totalorder %s426, %s428
    %p435 = scmp.eq.s32.totalorder %s35, 1
    %p436 = por %p434, %p435
    %p437 = scmp.ne.s32.totalorder %s428, %s429
    %p438 = scmp.eq.s32.totalorder %s35, 0
    %p439 = por %p437, %p438
    %p440 = scmp.ne.s32.totalorder %s428, %s429
    %p441 = scmp.eq.s32.totalorder %s36, 1
    %p442 = por %p440, %p441
    %p444 = scmp.ne.s32.totalorder %s429, %s443
    %p445 = scmp.eq.s32.totalorder %s36, 0
    %p446 = por %p444, %p445
    %s448 = sadd.s32 %s447, 1
    %p451 = scmp.eq.s32.totalorder %s30, 1
    %p452 = scmp.ne.s32.totalorder %s447, %s449
    %p453 = scmp.eq.s32.totalorder %s30, 0
    %p454 = por %p452, %p453
    %p455 = scmp.ne.s32.totalorder %s447, %s449
    %p456 = scmp.eq.s32.totalorder %s35, 1
    %p457 = por %p455, %p456
    %p458 = scmp.ne.s32.totalorder %s449, %s450
    %p459 = scmp.eq.s32.totalorder %s35, 0
    %p460 = por %p458, %p459
    %p461 = scmp.ne.s32.totalorder %s449, %s450
    %p462 = scmp.eq.s32.totalorder %s36, 1
    %p463 = por %p461, %p462
    %p465 = scmp.ne.s32.totalorder %s450, %s464
    %p466 = scmp.eq.s32.totalorder %s36, 0
    %p467 = por %p465, %p466
    %s468 = ssub.s32 %s30, %s37
    %p469 = scmp.eq.s32.totalorder %s468, 0
    %s471 = sadd.s32 %s470, 1
    %s472 = scalar_select %p469, %s470, %s471
    %p475 = pneg %p469
    %p476 = scmp.eq.s32.totalorder %s30, 1
    %p477 = por %p475, %p476
    %p478 = scmp.ne.s32.totalorder %s470, %s473
    %p479 = scmp.eq.s32.totalorder %s30, 0
    %p480 = por %p478, %p479
    %p481 = scmp.ne.s32.totalorder %s470, %s473
    %p482 = scmp.eq.s32.totalorder %s35, 1
    %p483 = por %p481, %p482
    %p484 = scmp.ne.s32.totalorder %s473, %s474
    %p485 = scmp.eq.s32.totalorder %s35, 0
    %p486 = por %p484, %p485
    %p487 = scmp.ne.s32.totalorder %s473, %s474
    %p488 = scmp.eq.s32.totalorder %s36, 1
    %p489 = por %p487, %p488
    %p491 = scmp.ne.s32.totalorder %s474, %s490
    %p492 = scmp.eq.s32.totalorder %s36, 0
    %p493 = por %p491, %p492
    %s494 = ssub.s32 %s30, %s37
    %p495 = scmp.eq.s32.totalorder %s494, 0
    %s497 = sadd.s32 %s496, 1
    %s498 = scalar_select %p495, %s496, %s497
    %p501 = pneg %p495
    %p502 = scmp.eq.s32.totalorder %s30, 1
    %p503 = por %p501, %p502
    %p504 = scmp.ne.s32.totalorder %s496, %s499
    %p505 = scmp.eq.s32.totalorder %s30, 0
    %p506 = por %p504, %p505
    %p507 = scmp.ne.s32.totalorder %s496, %s499
    %p508 = scmp.eq.s32.totalorder %s35, 1
    %p509 = por %p507, %p508
    %p510 = scmp.ne.s32.totalorder %s499, %s500
    %p511 = scmp.eq.s32.totalorder %s35, 0
    %p512 = por %p510, %p511
    %p513 = scmp.ne.s32.totalorder %s499, %s500
    %p514 = scmp.eq.s32.totalorder %s36, 1
    %p515 = por %p513, %p514
    %p517 = scmp.ne.s32.totalorder %s500, %s516
    %p518 = scmp.eq.s32.totalorder %s36, 0
    %p519 = por %p517, %p518
    %p520 = scmp.le.s32.totalorder 1, %s30
    %p521 = scmp.lt.s32.totalorder %s30, 3
    %p522 = pnand %p520, %p521
    %p523 = pneg %p522
    // Predicated region
    $region9: #{reranker_forward.1} parent=5 // pred_check
      _
    $region10: #{reranker_forward.1} parent=5 // pred_check_branch
      %525 = sbr.rel (%p522) target = $region12
    $region11: #{reranker_forward.1} parent=5 // pred_region
      %s526 = ssub.s32 %s30, 1
      // Predicated region
      $region13: #{reranker_forward.1} parent=11 // pred_check
        %p527 = pneg %p103
      $region14: #{reranker_forward.1} parent=11 // pred_check_branch
        %529 = sbr.rel (%p527) target = $region16
      $region15: #{reranker_forward.1} parent=11 // pred_region
        _
      $region16: #{reranker_forward.1} parent=11 // pred_fallthru
        _
      // Predicated region
      $region17: #{reranker_forward.1} parent=11 // pred_check
        %p530 = pneg %p124
      $region18: #{reranker_forward.1} parent=11 // pred_check_branch
        %532 = sbr.rel (%p530) target = $region20
      $region19: #{reranker_forward.1} parent=11 // pred_region
        _
      $region20: #{reranker_forward.1} parent=11 // pred_fallthru
        _
      // Predicated region
      $region21: #{reranker_forward.1} parent=11 // pred_check
        %p533 = pneg %p145
      $region22: #{reranker_forward.1} parent=11 // pred_check_branch
        %535 = sbr.rel (%p533) target = $region24
      $region23: #{reranker_forward.1} parent=11 // pred_region
        _
      $region24: #{reranker_forward.1} parent=11 // pred_fallthru
        _
      // Predicated region
      $region25: #{reranker_forward.1} parent=11 // pred_check
        %p536 = pneg %p166
      $region26: #{reranker_forward.1} parent=11 // pred_check_branch
        %538 = sbr.rel (%p536) target = $region28
      $region27: #{reranker_forward.1} parent=11 // pred_region
        _
      $region28: #{reranker_forward.1} parent=11 // pred_fallthru
        _
      // Predicated region
      $region29: #{reranker_forward.1} parent=11 // pred_check
        %p539 = pneg %p187
      $region30: #{reranker_forward.1} parent=11 // pred_check_branch
        %541 = sbr.rel (%p539) target = $region32
      $region31: #{reranker_forward.1} parent=11 // pred_region
        _
      $region32: #{reranker_forward.1} parent=11 // pred_fallthru
        _
      // Predicated region
      $region33: #{reranker_forward.1} parent=11 // pred_check
        %p542 = pneg %p208
      $region34: #{reranker_forward.1} parent=11 // pred_check_branch
        %544 = sbr.rel (%p542) target = $region36
      $region35: #{reranker_forward.1} parent=11 // pred_region
        _
      $region36: #{reranker_forward.1} parent=11 // pred_fallthru
        _
      // Predicated region
      $region37: #{reranker_forward.1} parent=11 // pred_check
        %p545 = pneg %p229
      $region38: #{reranker_forward.1} parent=11 // pred_check_branch
        %547 = sbr.rel (%p545) target = $region40
      $region39: #{reranker_forward.1} parent=11 // pred_region
        _
      $region40: #{reranker_forward.1} parent=11 // pred_fallthru
        _
      // Predicated region
      $region41: #{reranker_forward.1} parent=11 // pred_check
        %p548 = pneg %p250
      $region42: #{reranker_forward.1} parent=11 // pred_check_branch
        %550 = sbr.rel (%p548) target = $region44
      $region43: #{reranker_forward.1} parent=11 // pred_region
        _
      $region44: #{reranker_forward.1} parent=11 // pred_fallthru
        _
      // Predicated region
      $region45: #{reranker_forward.1} parent=11 // pred_check
        %p551 = pneg %p271
      $region46: #{reranker_forward.1} parent=11 // pred_check_branch
        %553 = sbr.rel (%p551) target = $region48
      $region47: #{reranker_forward.1} parent=11 // pred_region
        _
      $region48: #{reranker_forward.1} parent=11 // pred_fallthru
        _
      // Predicated region
      $region49: #{reranker_forward.1} parent=11 // pred_check
        %p554 = pneg %p292
      $region50: #{reranker_forward.1} parent=11 // pred_check_branch
        %556 = sbr.rel (%p554) target = $region52
      $region51: #{reranker_forward.1} parent=11 // pred_region
        _
      $region52: #{reranker_forward.1} parent=11 // pred_fallthru
        _
      // Predicated region
      $region53: #{reranker_forward.1} parent=11 // pred_check
        %p557 = pneg %p313
      $region54: #{reranker_forward.1} parent=11 // pred_check_branch
        %559 = sbr.rel (%p557) target = $region56
      $region55: #{reranker_forward.1} parent=11 // pred_region
        _
      $region56: #{reranker_forward.1} parent=11 // pred_fallthru
        _
      // Predicated region
      $region57: #{reranker_forward.1} parent=11 // pred_check
        %p560 = pneg %p334
      $region58: #{reranker_forward.1} parent=11 // pred_check_branch
        %562 = sbr.rel (%p560) target = $region60
      $region59: #{reranker_forward.1} parent=11 // pred_region
        _
      $region60: #{reranker_forward.1} parent=11 // pred_fallthru
        _
      // Predicated region
      $region61: #{reranker_forward.1} parent=11 // pred_check
        %p563 = pneg %p355
      $region62: #{reranker_forward.1} parent=11 // pred_check_branch
        %565 = sbr.rel (%p563) target = $region64
      $region63: #{reranker_forward.1} parent=11 // pred_region
        _
      $region64: #{reranker_forward.1} parent=11 // pred_fallthru
        _
      // Predicated region
      $region65: #{reranker_forward.1} parent=11 // pred_check
        %p566 = pneg %p376
      $region66: #{reranker_forward.1} parent=11 // pred_check_branch
        %568 = sbr.rel (%p566) target = $region68
      $region67: #{reranker_forward.1} parent=11 // pred_region
        _
      $region68: #{reranker_forward.1} parent=11 // pred_fallthru
        _
      // Predicated region
      $region69: #{reranker_forward.1} parent=11 // pred_check
        %p569 = pneg %p397
      $region70: #{reranker_forward.1} parent=11 // pred_check_branch
        %571 = sbr.rel (%p569) target = $region72
      $region71: #{reranker_forward.1} parent=11 // pred_region
        _
      $region72: #{reranker_forward.1} parent=11 // pred_fallthru
        _
      // Predicated region
      $region73: #{reranker_forward.1} parent=11 // pred_check
        %p572 = pneg %p418
      $region74: #{reranker_forward.1} parent=11 // pred_check_branch
        %574 = sbr.rel (%p572) target = $region76
      $region75: #{reranker_forward.1} parent=11 // pred_region
        _
      $region76: #{reranker_forward.1} parent=11 // pred_fallthru
        _
      // Predicated region
      $region77: #{reranker_forward.1} parent=11 // pred_check
        %p575 = pneg %p439
      $region78: #{reranker_forward.1} parent=11 // pred_check_branch
        %577 = sbr.rel (%p575) target = $region80
      $region79: #{reranker_forward.1} parent=11 // pred_region
        _
      $region80: #{reranker_forward.1} parent=11 // pred_fallthru
        _
      // Predicated region
      $region81: #{reranker_forward.1} parent=11 // pred_check
        %p578 = pneg %p460
      $region82: #{reranker_forward.1} parent=11 // pred_check_branch
        %580 = sbr.rel (%p578) target = $region84
      $region83: #{reranker_forward.1} parent=11 // pred_region
        _
      $region84: #{reranker_forward.1} parent=11 // pred_fallthru
        _
    $region12: #{reranker_forward.1} parent=5 // pred_fallthru
      _
    %p581 = scmp.lt.s32.totalorder %s30, 2
    // Predicated region
    $region85: #{reranker_forward.1} parent=5 // pred_check
      %p582 = pneg %p581
    $region86: #{reranker_forward.1} parent=5 // pred_check_branch
      %584 = sbr.rel (%p582) target = $region88
    $region87: #{reranker_forward.1} parent=5 // pred_region
      // Predicated region
      $region89: #{reranker_forward.1} parent=87 // pred_check
        %p585 = pneg %p50
      $region90: #{reranker_forward.1} parent=87 // pred_check_branch
        %587 = sbr.rel (%p585) target = $region92
      $region91: #{reranker_forward.1} parent=87 // pred_region
        %s588 = smul.u32 2, %s30
        %p589 = scmp.lt.s32.totalorder %s588, 3
        %s590 = scalar_select %p589, %s588, 3
        %s591 = smul.addr %s590, 8
        %s592 = scalar_lea.vmem %s0, %s591
        %s593 = smul.u32 2, %s30
      $region92: #{reranker_forward.1} parent=87 // pred_fallthru
        _
      // Predicated region
      $region93: #{reranker_forward.1} parent=87 // pred_check
        %p594 = pneg %p76
      $region94: #{reranker_forward.1} parent=87 // pred_check_branch
        %596 = sbr.rel (%p594) target = $region96
      $region95: #{reranker_forward.1} parent=87 // pred_region
        %p597 = scmp.lt.s32.totalorder %s30, 1
        %s598 = scalar_select %p597, %s30, 1
        %s599 = smul.addr %s598, 2
        %s600 = scalar_lea.vmem %s1, %s599
      $region96: #{reranker_forward.1} parent=87 // pred_fallthru
        _
    $region88: #{reranker_forward.1} parent=5 // pred_fallthru
      _
    %p601 = scmp.le.s32.totalorder 1, %s30
    %p602 = scmp.lt.s32.totalorder %s30, 3
    %p603 = pnand %p601, %p602
    %p604 = pneg %p603
    // Predicated region
    $region97: #{reranker_forward.1} parent=5 // pred_check
      _
    $region98: #{reranker_forward.1} parent=5 // pred_check_branch
      %606 = sbr.rel (%p603) target = $region100
    $region99: #{reranker_forward.1} parent=5 // pred_region
      %s607 = ssub.s32 %s30, 1
      %s608 = smul.u32 2, %s35
      %p609 = scmp.lt.s32.totalorder %s608, 3
      %s610 = scalar_select %p609, %s608, 3
      %s611 = smul.addr %s610, 8
      %s612 = scalar_lea.vmem %s0, %s611
      %p613 = pneg %p56
      %p614 = pneg %p53
      %p615 = scmp.lt.s32.totalorder %s35, 1
      %s616 = scalar_select %p615, %s35, 1
      %s617 = smul.addr %s616, 2
      %s618 = scalar_lea.vmem %s1, %s617
      %p619 = pneg %p82
      %p620 = pneg %p79
      %p621 = pneg %p103
      %p622 = pneg %p100
      %p623 = pneg %p124
      %p624 = pneg %p121
      %p625 = pneg %p145
      %p626 = pneg %p142
      %p627 = pneg %p166
      %p628 = pneg %p163
      %p629 = pneg %p187
      %p630 = pneg %p184
      %p631 = pneg %p208
      %p632 = pneg %p205
      %p633 = pneg %p229
      %p634 = pneg %p226
      %p635 = pneg %p250
      %p636 = pneg %p247
      %p637 = pneg %p271
      %p638 = pneg %p268
      %p639 = pneg %p292
      %p640 = pneg %p289
      %p641 = pneg %p313
      %p642 = pneg %p310
      %p643 = pneg %p334
      %p644 = pneg %p331
      %p645 = pneg %p355
      %p646 = pneg %p352
      %p647 = pneg %p376
      %p648 = pneg %p373
      %p649 = pneg %p397
      %p650 = pneg %p394
      %p651 = pneg %p418
      %p652 = pneg %p415
      %p653 = pneg %p439
      %p654 = pneg %p436
      %p655 = pneg %p460
      %p656 = pneg %p457
      %p657 = pneg %p486
      %p658 = pneg %p483
      %p659 = scmp.lt.s32.totalorder %s35, 1
      %s660 = scalar_select %p659, %s35, 1
      %s661 = smul.addr %s660, 2
      %s662 = scalar_lea.vmem %s20, %s661
      %p663 = pneg %p512
      %p664 = pneg %p509
      %p665 = scmp.lt.s32.totalorder %s35, 1
      %s666 = scalar_select %p665, %s35, 1
      %s667 = scalar_lea.vmem %s21, %s666
      %s668 = smul.u32 2, %s35
      %p669 = scmp.lt.s32.totalorder %s668, 3
      %s670 = scalar_select %p669, %s668, 3
      %s671 = smul.addr %s670, 8
      %s672 = scalar_lea.vmem %s0, %s671
      %s673 = smul.u32 2, %s35
      %p674 = scmp.lt.s32.totalorder %s35, 1
      %s675 = scalar_select %p674, %s35, 1
      %s676 = smul.addr %s675, 2
      %s677 = scalar_lea.vmem %s1, %s676
      %p678 = scmp.lt.s32.totalorder %s35, 1
      %s679 = scalar_select %p678, %s35, 1
      %s680 = smul.addr %s679, 2
      %s681 = scalar_lea.vmem %s20, %s680
      %p682 = scmp.lt.s32.totalorder %s35, 1
      %s683 = scalar_select %p682, %s35, 1
      %s684 = scalar_lea.vmem %s21, %s683
      %v686 = vld [vmem:[%s672] sm:$0xff]
      %v687 = vld [vmem:[%s672 + $0x8] sm:$0xff]
      %v688 = vld [vmem:[%s2] sm:$0x1]
      %v689 = vld [vmem:[%s3] sm:$0x1]
      %vm690 = vcmask 261120
      %v691 = vsel %vm690, %v686, 0.0
      %692 = vadd.xlane.f32.xlu0 %v691
      %v693 = vpop.xlane.xlu0 %692
      %v694 = vsel %vm690, %v687, 0.0
      %695 = vadd.xlane.f32.xlu0 %v694
      %v696 = vpop.xlane.xlu0 %695
      %v697 = vrcp.pop 32.0
      %v698 = vmul.f32 %v693, %v697
      %v699 = vmul.f32 %v696, %v697
      %v700 = vsub.f32 %v686, %v698
      %v701 = vsub.f32 %v687, %v699
      %v702 = vmul.f32 %v700, %v700
      %v703 = vmul.f32 %v701, %v701
      %v704 = vsel %vm690, %v702, 0.0
      %705 = vadd.xlane.f32.xlu0 %v704
      %v706 = vpop.xlane.xlu0 %705
      %v707 = vsel %vm690, %v703, 0.0
      %708 = vadd.xlane.f32.xlu0 %v707
      %v709 = vpop.xlane.xlu0 %708
      %v710 = vmul.f32 %v706, %v697
      %v711 = vmul.f32 %v709, %v697
      %v712 = vadd.f32 %v710, 1e-12
      %v713 = vadd.f32 %v711, 1e-12
      %v714 = vrsqrt.pop %v712
      %v715 = vrsqrt.pop %v713
      %v716 = vmul.f32 %v700, %v714
      %v717 = vmul.f32 %v701, %v715
      %v719 = vlaneseq
      %v720 = vshrl.u32 %v719, 7
      %v721 = vsub.s32 0, %v720
      %v722 = vrot.slane %v688, %v721
      %v724 = vmul.f32 %v716, %v722
      %v725 = vmul.f32 %v717, %v722
      %v727 = vlaneseq
      %v728 = vshrl.u32 %v727, 7
      %v729 = vsub.s32 0, %v728
      %v730 = vrot.slane %v689, %v729
      %v732 = vadd.f32 %v724, %v730
      %v733 = vadd.f32 %v725, %v730
      %v734 = vld [vmem:[%s677] sm:$0x3]
      %v735 = vsub.f32 1.0, %v734
      %v736 = vmul.f32 %v735, -10000.0
      %v739 = vunpack.c.l.s4 1966171168
      %v740 = vunpack.c.0.s8 %v739
      %v741 = vlaneseq
      %v742 = vshrl.u32 %v741, 7
      %v743 = vsub.s32 %v740, %v742
      %v744 = vrot.slane %v736, %v743
      %v745 = vcombine.high %v744, %v744
      %v747 = vunpack.c.l.s4 1966171168
      %v748 = vunpack.c.0.s8 %v747
      %v749 = vlaneseq
      %v750 = vshrl.u32 %v749, 7
      %v751 = vsub.s32 %v748, %v750
      %v752 = vrot.slane %v744, %v751
      %v754 = vunpack.c.l.s4 1966171168
      %v755 = vunpack.c.0.s8 %v754
      %v756 = vlaneseq
      %v757 = vshrl.u32 %v756, 7
      %v758 = vsub.s32 %v755, %v757
      %v759 = vrot.slane %v745, %v758
      %v760 = vld [vmem:[%s4] sm:$0xf]
      %v761 = vld [vmem:[%s4 + $0x4] sm:$0xf]
      %v762 = vld [vmem:[%s4 + $0x8] sm:$0xf]
      %v763 = vld [vmem:[%s4 + $0xc] sm:$0xf]
      %v764 = vpack.c.bf16 %v733, %v732
      %v765 = vld [vmem:[%s5] sm:$0x1]
      %v767 = vlaneseq
      %v768 = vshrl.u32 %v767, 7
      %v769 = vsub.s32 0, %v768
      %v770 = vrot.slane %v765, %v769
      %v776 = vunpack.c.l.b16 %v760
      %v777 = vunpack.c.l.b16 %v761
      %v778 = vunpack.c.l.b16 %v762
      %v779 = vunpack.c.l.b16 %v763
      %v780 = vpack.c.b16 %v777, %v776
      %v781 = vpack.c.b16 %v779, %v778
      %v785 = vsel %vm690, %v764, 0
      %787 = vmatprep.subr.bf16.mxu0 0
      %788 = vmatpush1.bf16.msra.mxu0 %v780
      %789 = vmatprep.subr.bf16.mxu0 0
      %790 = vmatpush1.bf16.msra.mxu0 %v781
      %791 = vmatprep.subr.bf16.mxu0 0
      %792 = vmatpush1.bf16.msra.mxu0 0
      %793 = vmatprep.subr.bf16.mxu0 0
      %794 = vmatpush1.bf16.msra.mxu0 0
      %795 = vmatprep.subr.bf16.mxu0 0
      %796 = vmatpush1.bf16.msra.mxu0 0
      %797 = vmatprep.subr.bf16.mxu0 0
      %798 = vmatpush1.bf16.msra.mxu0 0
      %799 = vmatprep.subr.bf16.mxu0 0
      %800 = vmatpush1.bf16.msra.mxu0 0
      %801 = vmatprep.subr.bf16.mxu0 0
      %802 = vmatpush1.bf16.msra.mxu0 0
      %803 = vmatprep.subr.bf16.mxu0 0
      %804 = vmatpush1.bf16.msra.mxu0 0
      %805 = vmatprep.subr.bf16.mxu0 0
      %806 = vmatpush1.bf16.msra.mxu0 0
      %807 = vmatprep.subr.bf16.mxu0 0
      %808 = vmatpush1.bf16.msra.mxu0 0
      %809 = vmatprep.subr.bf16.mxu0 0
      %810 = vmatpush1.bf16.msra.mxu0 0
      %811 = vmatprep.subr.bf16.mxu0 0
      %812 = vmatpush1.bf16.msra.mxu0 0
      %813 = vmatprep.subr.bf16.mxu0 0
      %814 = vmatpush1.bf16.msra.mxu0 0
      %815 = vmatprep.subr.bf16.mxu0 0
      %816 = vmatpush1.bf16.msra.mxu0 0
      %817 = vmatprep.subr.bf16.mxu0 0
      %818 = vmatpush1.bf16.msra.mxu0 0
      %819 = vmatprep.mubr.bf16.mxu0 0
      %820 = vmatmul.mubr.bf16.gmra.mrb[0].mxu0 %v785
      %v821 = vpop.f32.mrb[0].mxu0
      %v822 = vadd.f32 %v770, %v821
      %v823 = vpop.f32.mrb[0].mxu0
      %v824 = vpop.f32.mrb[0].mxu0
      %v825 = vadd.f32 %v770, %v824
      %v826 = vpop.f32.mrb[0].mxu0
      %827 = vdwg.mxu0
      %v828 = vpack.c.bf16 %v822, %v822
      %v829 = vpack.c.bf16 %v825, %v825
      %831 = vrot.lane.b32.xlu0 %v828, 96
      %v832 = vpop.permute.xlu0 %831
      %vm833 = vcmask 64512
      %v835 = vsel %vm833, %v828, 0
      %v838 = vsel %vm833, %v832, 0
      %840 = vmatprep.subr.bf16.mxu0 0
      %841 = vmatpush1.bf16.xpose.msra.mxu0 %v838
      %842 = vmatprep.subr.bf16.mxu0 0
      %843 = vmatpush1.bf16.xpose.msra.mxu0 0
      %844 = vmatprep.subr.bf16.mxu0 0
      %845 = vmatpush1.bf16.xpose.msra.mxu0 0
      %846 = vmatprep.subr.bf16.mxu0 0
      %847 = vmatpush1.bf16.xpose.msra.mxu0 0
      %848 = vmatprep.subr.bf16.mxu0 0
      %849 = vmatpush1.bf16.xpose.msra.mxu0 0
      %850 = vmatprep.subr.bf16.mxu0 0
      %851 = vmatpush1.bf16.xpose.msra.mxu0 0
      %852 = vmatprep.subr.bf16.mxu0 0
      %853 = vmatpush1.bf16.xpose.msra.mxu0 0
      %854 = vmatprep.subr.bf16.mxu0 0
      %855 = vmatpush1.bf16.xpose.msra.mxu0 0
      %856 = vmatprep.subr.bf16.mxu0 0
      %857 = vmatpush1.bf16.xpose.msra.mxu0 0
      %858 = vmatprep.subr.bf16.mxu0 0
      %859 = vmatpush1.bf16.xpose.msra.mxu0 0
      %860 = vmatprep.subr.bf16.mxu0 0
      %861 = vmatpush1.bf16.xpose.msra.mxu0 0
      %862 = vmatprep.subr.bf16.mxu0 0
      %863 = vmatpush1.bf16.xpose.msra.mxu0 0
      %864 = vmatprep.subr.bf16.mxu0 0
      %865 = vmatpush1.bf16.xpose.msra.mxu0 0
      %866 = vmatprep.subr.bf16.mxu0 0
      %867 = vmatpush1.bf16.xpose.msra.mxu0 0
      %868 = vmatprep.subr.bf16.mxu0 0
      %869 = vmatpush1.bf16.xpose.msra.mxu0 0
      %870 = vmatprep.subr.bf16.mxu0 0
      %871 = vmatpush1.bf16.xpose.msra.mxu0 0
      %872 = vmatprep.mubr.bf16.mxu0 0
      %873 = vmatmul.mubr.bf16.gmra.mrb[0].mxu0 %v835
      %v874 = vpop.f32.mrb[0].mxu0
      %v875 = vadd.f32 0.0, %v874
      %v876 = vpop.f32.mrb[0].mxu0
      %v877 = vpop.f32.mrb[0].mxu0
      %v878 = vpop.f32.mrb[0].mxu0
      %879 = vdwg.mxu0
      %881 = vrot.lane.b32.xlu0 %v829, 96
      %v882 = vpop.permute.xlu0 %881
      %v884 = vsel %vm833, %v829, 0
      %v887 = vsel %vm833, %v882, 0
      %889 = vmatprep.subr.bf16.mxu0 0
      %890 = vmatpush1.bf16.xpose.msra.mxu0 %v887
      %891 = vmatprep.subr.bf16.mxu0 0
      %892 = vmatpush1.bf16.xpose.msra.mxu0 0
      %893 = vmatprep.subr.bf16.mxu0 0
      %894 = vmatpush1.bf16.xpose.msra.mxu0 0
      %895 = vmatprep.subr.bf16.mxu0 0
      %896 = vmatpush1.bf16.xpose.msra.mxu0 0
      %897 = vmatprep.subr.bf16.mxu0 0
      %898 = vmatpush1.bf16.xpose.msra.mxu0 0
      %899 = vmatprep.subr.bf16.mxu0 0
      %900 = vmatpush1.bf16.xpose.msra.mxu0 0
      %901 = vmatprep.subr.bf16.mxu0 0
      %902 = vmatpush1.bf16.xpose.msra.mxu0 0
      %903 = vmatprep.subr.bf16.mxu0 0
      %904 = vmatpush1.bf16.xpose.msra.mxu0 0
      %905 = vmatprep.subr.bf16.mxu0 0
      %906 = vmatpush1.bf16.xpose.msra.mxu0 0
      %907 = vmatprep.subr.bf16.mxu0 0
      %908 = vmatpush1.bf16.xpose.msra.mxu0 0
      %909 = vmatprep.subr.bf16.mxu0 0
      %910 = vmatpush1.bf16.xpose.msra.mxu0 0
      %911 = vmatprep.subr.bf16.mxu0 0
      %912 = vmatpush1.bf16.xpose.msra.mxu0 0
      %913 = vmatprep.subr.bf16.mxu0 0
      %914 = vmatpush1.bf16.xpose.msra.mxu0 0
      %915 = vmatprep.subr.bf16.mxu0 0
      %916 = vmatpush1.bf16.xpose.msra.mxu0 0
      %917 = vmatprep.subr.bf16.mxu0 0
      %918 = vmatpush1.bf16.xpose.msra.mxu0 0
      %919 = vmatprep.subr.bf16.mxu0 0
      %920 = vmatpush1.bf16.xpose.msra.mxu0 0
      %921 = vmatprep.mubr.bf16.mxu0 0
      %922 = vmatmul.mubr.bf16.gmra.mrb[0].mxu0 %v884
      %v923 = vpop.f32.mrb[0].mxu0
      %v924 = vadd.f32 0.0, %v923
      %v925 = vpop.f32.mrb[0].mxu0
      %v926 = vpop.f32.mrb[0].mxu0
      %v927 = vpop.f32.mrb[0].mxu0
      %928 = vdwg.mxu0
      %v929 = vmul.f32 %v875, 0.35355338
      %v930 = vmul.f32 %v924, 0.35355338
      %v931 = vlaneseq
      %v932 = vshrl.u32 %v931, 7
      %v933 = vsub.s32 0, %v932
      %v934 = vrot.slane %v752, %v933
      %v935 = vlaneseq
      %v936 = vshrl.u32 %v935, 7
      %v937 = vsub.s32 0, %v936
      %v938 = vrot.slane %v759, %v937
      %v941 = vadd.f32 %v929, %v934
      %v942 = vadd.f32 %v930, %v938
      %v943 = vsel %vm833, %v941, -inf
      %944 = vmax.xlane.f32.xlu0 %v943
      %v945 = vpop.xlane.xlu0 %944
      %v946 = vsel %vm833, %v942, -inf
      %947 = vmax.xlane.f32.xlu0 %v946
      %v948 = vpop.xlane.xlu0 %947
      %v949 = vsub.f32 %v941, %v945
      %v950 = vsub.f32 %v942, %v948
      %v951 = vmul.f32 %v949, 1.442695
      %v952 = vpow.pop %v951
      %v953 = vmul.f32 %v950, 1.442695
      %v954 = vpow.pop %v953
      %v955 = vsel %vm833, %v952, 0.0
      %956 = vadd.xlane.f32.xlu0 %v955
      %v957 = vpop.xlane.xlu0 %956
      %v958 = vsel %vm833, %v954, 0.0
      %959 = vadd.xlane.f32.xlu0 %v958
      %v960 = vpop.xlane.xlu0 %959
      %v961 = vrcp.pop %v957
      %v962 = vmul.f32 %v952, %v961
      %v963 = vrcp.pop %v960
      %v964 = vmul.f32 %v954, %v963
      %v965 = vpack.c.bf16 %v962, %v962
      %v966 = vpack.c.bf16 %v964, %v964
      %967 = vrot.lane.b32.xlu0 %v828, 64
      %v968 = vpop.permute.xlu0 %967
      %v970 = vsel %vm833, %v965, 0
      %vm972 = vcmask 1043456
      %v974 = vsel %vm972, %v968, 0
      %976 = vmatprep.subr.bf16.mxu0 0
      %977 = vmatpush1.bf16.msra.mxu0 %v974
      %978 = vmatprep.subr.bf16.mxu0 0
      %979 = vmatpush1.bf16.msra.mxu0 0
      %980 = vmatprep.subr.bf16.mxu0 0
      %981 = vmatpush1.bf16.msra.mxu0 0
      %982 = vmatprep.subr.bf16.mxu0 0
      %983 = vmatpush1.bf16.msra.mxu0 0
      %984 = vmatprep.subr.bf16.mxu0 0
      %985 = vmatpush1.bf16.msra.mxu0 0
      %986 = vmatprep.subr.bf16.mxu0 0
      %987 = vmatpush1.bf16.msra.mxu0 0
      %988 = vmatprep.subr.bf16.mxu0 0
      %989 = vmatpush1.bf16.msra.mxu0 0
      %990 = vmatprep.subr.bf16.mxu0 0
      %991 = vmatpush1.bf16.msra.mxu0 0
      %992 = vmatprep.subr.bf16.mxu0 0
      %993 = vmatpush1.bf16.msra.mxu0 0
      %994 = vmatprep.subr.bf16.mxu0 0
      %995 = vmatpush1.bf16.msra.mxu0 0
      %996 = vmatprep.subr.bf16.mxu0 0
      %997 = vmatpush1.bf16.msra.mxu0 0
      %998 = vmatprep.subr.bf16.mxu0 0
      %999 = vmatpush1.bf16.msra.mxu0 0
      %1000 = vmatprep.subr.bf16.mxu0 0
      %1001 = vmatpush1.bf16.msra.mxu0 0
      %1002 = vmatprep.subr.bf16.mxu0 0
      %1003 = vmatpush1.bf16.msra.mxu0 0
      %1004 = vmatprep.subr.bf16.mxu0 0
      %1005 = vmatpush1.bf16.msra.mxu0 0
      %1006 = vmatprep.subr.bf16.mxu0 0
      %1007 = vmatpush1.bf16.msra.mxu0 0
      %1008 = vmatprep.mubr.bf16.mxu0 0
      %1009 = vmatmul.mubr.bf16.gmra.mrb[0].mxu0 %v970
      %v1010 = vpop.f32.mrb[0].mxu0
      %v1011 = vadd.f32 0.0, %v1010
      %v1012 = vpop.f32.mrb[0].mxu0
      %v1013 = vpop.f32.mrb[0].mxu0
      %v1014 = vpop.f32.mrb[0].mxu0
      %1015 = vdwg.mxu0
      %1016 = vrot.lane.b32.xlu0 %v829, 64
      %v1017 = vpop.permute.xlu0 %1016
      %v1019 = vsel %vm833, %v966, 0
      %v1022 = vsel %vm972, %v1017, 0
      %1024 = vmatprep.subr.bf16.mxu0 0
      %1025 = vmatpush1.bf16.msra.mxu0 %v1022
      %1026 = vmatprep.subr.bf16.mxu0 0
      %1027 = vmatpush1.bf16.msra.mxu0 0
      %1028 = vmatprep.subr.bf16.mxu0 0
      %1029 = vmatpush1.bf16.msra.mxu0 0
      %1030 = vmatprep.subr.bf16.mxu0 0
      %1031 = vmatpush1.bf16.msra.mxu0 0
      %1032 = vmatprep.subr.bf16.mxu0 0
      %1033 = vmatpush1.bf16.msra.mxu0 0
      %1034 = vmatprep.subr.bf16.mxu0 0
      %1035 = vmatpush1.bf16.msra.mxu0 0
      %1036 = vmatprep.subr.bf16.mxu0 0
      %1037 = vmatpush1.bf16.msra.mxu0 0
      %1038 = vmatprep.subr.bf16.mxu0 0
      %1039 = vmatpush1.bf16.msra.mxu0 0
      %1040 = vmatprep.subr.bf16.mxu0 0
      %1041 = vmatpush1.bf16.msra.mxu0 0
      %1042 = vmatprep.subr.bf16.mxu0 0
      %1043 = vmatpush1.bf16.msra.mxu0 0
      %1044 = vmatprep.subr.bf16.mxu0 0
      %1045 = vmatpush1.bf16.msra.mxu0 0
      %1046 = vmatprep.subr.bf16.mxu0 0
      %1047 = vmatpush1.bf16.msra.mxu0 0
      %1048 = vmatprep.subr.bf16.mxu0 0
      %1049 = vmatpush1.bf16.msra.mxu0 0
      %1050 = vmatprep.subr.bf16.mxu0 0
      %1051 = vmatpush1.bf16.msra.mxu0 0
      %1052 = vmatprep.subr.bf16.mxu0 0
      %1053 = vmatpush1.bf16.msra.mxu0 0
      %1054 = vmatprep.subr.bf16.mxu0 0
      %1055 = vmatpush1.bf16.msra.mxu0 0
      %1056 = vmatprep.mubr.bf16.mxu0 0
      %1057 = vmatmul.mubr.bf16.gmra.mrb[0].mxu0 %v1019
      %v1058 = vpop.f32.mrb[0].mxu0
      %v1059 = vadd.f32 0.0, %v1058
      %v1060 = vpop.f32.mrb[0].mxu0
      %v1061 = vpop.f32.mrb[0].mxu0
      %v1062 = vpop.f32.mrb[0].mxu0
      %1063 = vdwg.mxu0
      %1064 = vrot.lane.b32.xlu0 %v828, 120
      %v1065 = vpop.permute.xlu0 %1064
      %1066 = vrot.lane.b32.xlu0 %v828, 88
      %v1067 = vpop.permute.xlu0 %1066
      %v1069 = vsel %vm833, %v1065, 0
      %v1072 = vsel %vm833, %v1067, 0
      %1074 = vmatprep.subr.bf16.mxu0 0
      %1075 = vmatpush1.bf16.xpose.msra.mxu0 %v1072
      %1076 = vmatprep.subr.bf16.mxu0 0
      %1077 = vmatpush1.bf16.xpose.msra.mxu0 0
      %1078 = vmatprep.subr.bf16.mxu0 0
      %1079 = vmatpush1.bf16.xpose.msra.mxu0 0
      %1080 = vmatprep.subr.bf16.mxu0 0
      %1081 = vmatpush1.bf16.xpose.msra.mxu0 0
      %1082 = vmatprep.subr.bf16.mxu0 0
      %1083 = vmatpush1.bf16.xpose.msra.mxu0 0
      %1084 = vmatprep.subr.bf16.mxu0 0
      %1085 = vmatpush1.bf16.xpose.msra.mxu0 0
      %1086 = vmatprep.subr.bf16.mxu0 0
      %1087 = vmatpush1.bf16.xpose.msra.mxu0 0
      %1088 = vmatprep.subr.bf16.mxu0 0
      %1089 = vmatpush1.bf16.xpose.msra.mxu0 0
      %1090 = vmatprep.subr.bf16.mxu0 0
      %1091 = vmatpush1.bf16.xpose.msra.mxu0 0
      %1092 = vmatprep.subr.bf16.mxu0 0
      %1093 = vmatpush1.bf16.xpose.msra.mxu0 0
      %1094 = vmatprep.subr.bf16.mxu0 0
      %1095 = vmatpush1.bf16.xpose.msra.mxu0 0
      %1096 = vmatprep.subr.bf16.mxu0 0
      %1097 = vmatpush1.bf16.xpose.msra.mxu0 0
      %1098 = vmatprep.subr.bf16.mxu0 0
      %1099 = vmatpush1.bf16.xpose.msra.mxu0 0
      %1100 = vmatprep.subr.bf16.mxu0 0
      %1101 = vmatpush1.bf16.xpose.msra.mxu0 0
      %1102 = vmatprep.subr.bf16.mxu0 0
      %1103 = vmatpush1.bf16.xpose.msra.mxu0 0
      %1104 = vmatprep.subr.bf16.mxu0 0
      %1105 = vmatpush1.bf16.xpose.msra.mxu0 0
      %1106 = vmatprep.mubr.bf16.mxu0 0
      %1107 = vmatmul.mubr.bf16.gmra.mrb[0].mxu0 %v1069
      %v1108 = vpop.f32.mrb[0].mxu0
      %v1109 = vadd.f32 0.0, %v1108
      %v1110 = vpop.f32.mrb[0].mxu0
      %v1111 = vpop.f32.mrb[0].mxu0
      %v1112 = vpop.f32.mrb[0].mxu0
      %1113 = vdwg.mxu0
      %1114 = vrot.lane.b32.xlu0 %v829, 120
      %v1115 = vpop.permute.xlu0 %1114
      %1116 = vrot.lane.b32.xlu0 %v829, 88
      %v1117 = vpop.permute.xlu0 %1116
      %v1119 = vsel %vm833, %v1115, 0
      %v1122 = vsel %vm833, %v1117, 0
      %1124 = vmatprep.subr.bf16.mxu0 0
      %1125 = vmatpush1.bf16.xpose.msra.mxu0 %v1122
      %1126 = vmatprep.subr.bf16.mxu0 0
      %1127 = vmatpush1.bf16.xpose.msra.mxu0 0
      %1128 = vmatprep.subr.bf16.mxu0 0
      %1129 = vmatpush1.bf16.xpose.msra.mxu0 0
      %1130 = vmatprep.subr.bf16.mxu0 0
      %1131 = vmatpush1.bf16.xpose.msra.mxu0 0
      %1132 = vmatprep.subr.bf16.mxu0 0
      %1133 = vmatpush1.bf16.xpose.msra.mxu0 0
      %1134 = vmatprep.subr.bf16.mxu0 0
      %1135 = vmatpush1.bf16.xpose.msra.mxu0 0
      %1136 = vmatprep.subr.bf16.mxu0 0
      %1137 = vmatpush1.bf16.xpose.msra.mxu0 0
      %1138 = vmatprep.subr.bf16.mxu0 0
      %1139 = vmatpush1.bf16.xpose.msra.mxu0 0
      %1140 = vmatprep.subr.bf16.mxu0 0
      %1141 = vmatpush1.bf16.xpose.msra.mxu0 0
      %1142 = vmatprep.subr.bf16.mxu0 0
      %1143 = vmatpush1.bf16.xpose.msra.mxu0 0
      %1144 = vmatprep.subr.bf16.mxu0 0
      %1145 = vmatpush1.bf16.xpose.msra.mxu0 0
      %1146 = vmatprep.subr.bf16.mxu0 0
      %1147 = vmatpush1.bf16.xpose.msra.mxu0 0
      %1148 = vmatprep.subr.bf16.mxu0 0
      %1149 = vmatpush1.bf16.xpose.msra.mxu0 0
      %1150 = vmatprep.subr.bf16.mxu0 0
      %1151 = vmatpush1.bf16.xpose.msra.mxu0 0
      %1152 = vmatprep.subr.bf16.mxu0 0
      %1153 = vmatpush1.bf16.xpose.msra.mxu0 0
      %1154 = vmatprep.subr.bf16.mxu0 0
      %1155 = vmatpush1.bf16.xpose.msra.mxu0 0
      %1156 = vmatprep.mubr.bf16.mxu0 0
      %1157 = vmatmul.mubr.bf16.gmra.mrb[0].mxu0 %v1119
      %v1158 = vpop.f32.mrb[0].mxu0
      %v1159 = vadd.f32 0.0, %v1158
      %v1160 = vpop.f32.mrb[0].mxu0
      %v1161 = vpop.f32.mrb[0].mxu0
      %v1162 = vpop.f32.mrb[0].mxu0
      %1163 = vdwg.mxu0
      %v1164 = vmul.f32 %v1109, 0.35355338
      %v1165 = vmul.f32 %v1159, 0.35355338
      %v1166 = vadd.f32 %v1164, %v934
      %v1167 = vadd.f32 %v1165, %v938
      %v1168 = vsel %vm833, %v1166, -inf
      %1169 = vmax.xlane.f32.xlu0 %v1168
      %v1170 = vpop.xlane.xlu0 %1169
      %v1171 = vsel %vm833, %v1167, -inf
      %1172 = vmax.xlane.f32.xlu0 %v1171
      %v1173 = vpop.xlane.xlu0 %1172
      %v1174 = vsub.f32 %v1166, %v1170
      %v1175 = vsub.f32 %v1167, %v1173
      %v1176 = vmul.f32 %v1174, 1.442695
      %v1177 = vpow.pop %v1176
      %v1178 = vmul.f32 %v1175, 1.442695
      %v1179 = vpow.pop %v1178
      %v1180 = vsel %vm833, %v1177, 0.0
      %1181 = vadd.xlane.f32.xlu0 %v1180
      %v1182 = vpop.xlane.xlu0 %1181
      %v1183 = vsel %vm833, %v1179, 0.0
      %1184 = vadd.xlane.f32.xlu0 %v1183
      %v1185 = vpop.xlane.xlu0 %1184
      %v1186 = vrcp.pop %v1182
      %v1187 = vmul.f32 %v1177, %v1186
      %v1188 = vrcp.pop %v1185
      %v1189 = vmul.f32 %v1179, %v1188
      %v1190 = vpack.c.bf16 %v1187, %v1187
      %v1191 = vpack.c.bf16 %v1189, %v1189
      %1192 = vrot.lane.b32.xlu0 %v828, 56
      %v1193 = vpop.permute.xlu0 %1192
      %v1195 = vsel %vm833, %v1190, 0
      %v1198 = vsel %vm972, %v1193, 0
      %1200 = vmatprep.subr.bf16.mxu0 0
      %1201 = vmatpush1.bf16.msra.mxu0 %v1198
      %1202 = vmatprep.subr.bf16.mxu0 0
      %1203 = vmatpush1.bf16.msra.mxu0 0
      %1204 = vmatprep.subr.bf16.mxu0 0
      %1205 = vmatpush1.bf16.msra.mxu0 0
      %1206 = vmatprep.subr.bf16.mxu0 0
      %1207 = vmatpush1.bf16.msra.mxu0 0
      %1208 = vmatprep.subr.bf16.mxu0 0
      %1209 = vmatpush1.bf16.msra.mxu0 0
      %1210 = vmatprep.subr.bf16.mxu0 0
      %1211 = vmatpush1.bf16.msra.mxu0 0
      %1212 = vmatprep.subr.bf16.mxu0 0
      %1213 = vmatpush1.bf16.msra.mxu0 0
      %1214 = vmatprep.subr.bf16.mxu0 0
      %1215 = vmatpush1.bf16.msra.mxu0 0
      %1216 = vmatprep.subr.bf16.mxu0 0
      %1217 = vmatpush1.bf16.msra.mxu0 0
      %1218 = vmatprep.subr.bf16.mxu0 0
      %1219 = vmatpush1.bf16.msra.mxu0 0
      %1220 = vmatprep.subr.bf16.mxu0 0
      %1221 = vmatpush1.bf16.msra.mxu0 0
      %1222 = vmatprep.subr.bf16.mxu0 0
      %1223 = vmatpush1.bf16.msra.mxu0 0
      %1224 = vmatprep.subr.bf16.mxu0 0
      %1225 = vmatpush1.bf16.msra.mxu0 0
      %1226 = vmatprep.subr.bf16.mxu0 0
      %1227 = vmatpush1.bf16.msra.mxu0 0
      %1228 = vmatprep.subr.bf16.mxu0 0
      %1229 = vmatpush1.bf16.msra.mxu0 0
      %1230 = vmatprep.subr.bf16.mxu0 0
      %1231 = vmatpush1.bf16.msra.mxu0 0
      %1232 = vmatprep.mubr.bf16.mxu0 0
      %1233 = vmatmul.mubr.bf16.gmra.mrb[0].mxu0 %v1195
      %v1234 = vpop.f32.mrb[0].mxu0
      %v1235 = vadd.f32 0.0, %v1234
      %v1236 = vpop.f32.mrb[0].mxu0
      %v1237 = vpop.f32.mrb[0].mxu0
      %v1238 = vpop.f32.mrb[0].mxu0
      %1239 = vdwg.mxu0
      %1240 = vrot.lane.b32.xlu0 %v829, 56
      %v1241 = vpop.permute.xlu0 %1240
      %v1243 = vsel %vm833, %v1191, 0
      %v1246 = vsel %vm972, %v1241, 0
      %1248 = vmatprep.subr.bf16.mxu0 0
      %1249 = vmatpush1.bf16.msra.mxu0 %v1246
      %1250 = vmatprep.subr.bf16.mxu0 0
      %1251 = vmatpush1.bf16.msra.mxu0 0
      %1252 = vmatprep.subr.bf16.mxu0 0
      %1253 = vmatpush1.bf16.msra.mxu0 0
      %1254 = vmatprep.subr.bf16.mxu0 0
      %1255 = vmatpush1.bf16.msra.mxu0 0
      %1256 = vmatprep.subr.bf16.mxu0 0
      %1257 = vmatpush1.bf16.msra.mxu0 0
      %1258 = vmatprep.subr.bf16.mxu0 0
      %1259 = vmatpush1.bf16.msra.mxu0 0
      %1260 = vmatprep.subr.bf16.mxu0 0
      %1261 = vmatpush1.bf16.msra.mxu0 0
      %1262 = vmatprep.subr.bf16.mxu0 0
      %1263 = vmatpush1.bf16.msra.mxu0 0
      %1264 = vmatprep.subr.bf16.mxu0 0
      %1265 = vmatpush1.bf16.msra.mxu0 0
      %1266 = vmatprep.subr.bf16.mxu0 0
      %1267 = vmatpush1.bf16.msra.mxu0 0
      %1268 = vmatprep.subr.bf16.mxu0 0
      %1269 = vmatpush1.bf16.msra.mxu0 0
      %1270 = vmatprep.subr.bf16.mxu0 0
      %1271 = vmatpush1.bf16.msra.mxu0 0
      %1272 = vmatprep.subr.bf16.mxu0 0
      %1273 = vmatpush1.bf16.msra.mxu0 0
      %1274 = vmatprep.subr.bf16.mxu0 0
      %1275 = vmatpush1.bf16.msra.mxu0 0
      %1276 = vmatprep.subr.bf16.mxu0 0
      %1277 = vmatpush1.bf16.msra.mxu0 0
      %1278 = vmatprep.subr.bf16.mxu0 0
      %1279 = vmatpush1.bf16.msra.mxu0 0
      %1280 = vmatprep.mubr.bf16.mxu0 0
      %1281 = vmatmul.mubr.bf16.gmra.mrb[0].mxu0 %v1243
      %v1282 = vpop.f32.mrb[0].mxu0
      %v1283 = vadd.f32 0.0, %v1282
      %v1284 = vpop.f32.mrb[0].mxu0
      %v1285 = vpop.f32.mrb[0].mxu0
      %v1286 = vpop.f32.mrb[0].mxu0
      %1287 = vdwg.mxu0
      %1288 = vrot.lane.b32.xlu0 %v828, 112
      %v1289 = vpop.permute.xlu0 %1288
      %1290 = vrot.lane.b32.xlu0 %v828, 80
      %v1291 = vpop.permute.xlu0 %1290
      %v1293 = vsel %vm833, %v1289, 0
      %v1296 = vsel %vm833, %v1291, 0
      %1298 = vmatprep.subr.bf16.mxu0 0
      %1299 = vmatpush1.bf16.xpose.msra.mxu0 %v1296
      %1300 = vmatprep.subr.bf16.mxu0 0
      %1301 = vmatpush1.bf16.xpose.msra.mxu0 0
      %1302 = vmatprep.subr.bf16.mxu0 0
      %1303 = vmatpush1.bf16.xpose.msra.mxu0 0
      %1304 = vmatprep.subr.bf16.mxu0 0
      %1305 = vmatpush1.bf16.xpose.msra.mxu0 0
      %1306 = vmatprep.subr.bf16.mxu0 0
      %1307 = vmatpush1.bf16.xpose.msra.mxu0 0
      %1308 = vmatprep.subr.bf16.mxu0 0
      %1309 = vmatpush1.bf16.xpose.msra.mxu0 0
      %1310 = vmatprep.subr.bf16.mxu0 0
      %1311 = vmatpush1.bf16.xpose.msra.mxu0 0
      %1312 = vmatprep.subr.bf16.mxu0 0
      %1313 = vmatpush1.bf16.xpose.msra.mxu0 0
      %1314 = vmatprep.subr.bf16.mxu0 0
      %1315 = vmatpush1.bf16.xpose.msra.mxu0 0
      %1316 = vmatprep.subr.bf16.mxu0 0
      %1317 = vmatpush1.bf16.xpose.msra.mxu0 0
      %1318 = vmatprep.subr.bf16.mxu0 0
      %1319 = vmatpush1.bf16.xpose.msra.mxu0 0
      %1320 = vmatprep.subr.bf16.mxu0 0
      %1321 = vmatpush1.bf16.xpose.msra.mxu0 0
      %1322 = vmatprep.subr.bf16.mxu0 0
      %1323 = vmatpush1.bf16.xpose.msra.mxu0 0
      %1324 = vmatprep.subr.bf16.mxu0 0
      %1325 = vmatpush1.bf16.xpose.msra.mxu0 0
      %1326 = vmatprep.subr.bf16.mxu0 0
      %1327 = vmatpush1.bf16.xpose.msra.mxu0 0
      %1328 = vmatprep.subr.bf16.mxu0 0
      %1329 = vmatpush1.bf16.xpose.msra.mxu0 0
      %1330 = vmatprep.mubr.bf16.mxu0 0
      %1331 = vmatmul.mubr.bf16.gmra.mrb[0].mxu0 %v1293
      %v1332 = vpop.f32.mrb[0].mxu0
      %v1333 = vadd.f32 0.0, %v1332
      %v1334 = vpop.f32.mrb[0].mxu0
      %v1335 = vpop.f32.mrb[0].mxu0
      %v1336 = vpop.f32.mrb[0].mxu0
      %1337 = vdwg.mxu0
      %1338 = vrot.lane.b32.xlu0 %v829, 112
      %v1339 = vpop.permute.xlu0 %1338
      %1340 = vrot.lane.b32.xlu0 %v829, 80
      %v1341 = vpop.permute.xlu0 %1340
      %v1343 = vsel %vm833, %v1339, 0
      %v1346 = vsel %vm833, %v1341, 0
      %1348 = vmatprep.subr.bf16.mxu0 0
      %1349 = vmatpush1.bf16.xpose.msra.mxu0 %v1346
      %1350 = vmatprep.subr.bf16.mxu0 0
      %1351 = vmatpush1.bf16.xpose.msra.mxu0 0
      %1352 = vmatprep.subr.bf16.mxu0 0
      %1353 = vmatpush1.bf16.xpose.msra.mxu0 0
      %1354 = vmatprep.subr.bf16.mxu0 0
      %1355 = vmatpush1.bf16.xpose.msra.mxu0 0
      %1356 = vmatprep.subr.bf16.mxu0 0
      %1357 = vmatpush1.bf16.xpose.msra.mxu0 0
      %1358 = vmatprep.subr.bf16.mxu0 0
      %1359 = vmatpush1.bf16.xpose.msra.mxu0 0
      %1360 = vmatprep.subr.bf16.mxu0 0
      %1361 = vmatpush1.bf16.xpose.msra.mxu0 0
      %1362 = vmatprep.subr.bf16.mxu0 0
      %1363 = vmatpush1.bf16.xpose.msra.mxu0 0
      %1364 = vmatprep.subr.bf16.mxu0 0
      %1365 = vmatpush1.bf16.xpose.msra.mxu0 0
      %1366 = vmatprep.subr.bf16.mxu0 0
      %1367 = vmatpush1.bf16.xpose.msra.mxu0 0
      %1368 = vmatprep.subr.bf16.mxu0 0
      %1369 = vmatpush1.bf16.xpose.msra.mxu0 0
      %1370 = vmatprep.subr.bf16.mxu0 0
      %1371 = vmatpush1.bf16.xpose.msra.mxu0 0
      %1372 = vmatprep.subr.bf16.mxu0 0
      %1373 = vmatpush1.bf16.xpose.msra.mxu0 0
      %1374 = vmatprep.subr.bf16.mxu0 0
      %1375 = vmatpush1.bf16.xpose.msra.mxu0 0
      %1376 = vmatprep.subr.bf16.mxu0 0
      %1377 = vmatpush1.bf16.xpose.msra.mxu0 0
      %1378 = vmatprep.subr.bf16.mxu0 0
      %1379 = vmatpush1.bf16.xpose.msra.mxu0 0
      %1380 = vmatprep.mubr.bf16.mxu0 0
      %1381 = vmatmul.mubr.bf16.gmra.mrb[0].mxu0 %v1343
      %v1382 = vpop.f32.mrb[0].mxu0
      %v1383 = vadd.f32 0.0, %v1382
      %v1384 = vpop.f32.mrb[0].mxu0
      %v1385 = vpop.f32.mrb[0].mxu0
      %v1386 = vpop.f32.mrb[0].mxu0
      %1387 = vdwg.mxu0
      %v1388 = vmul.f32 %v1333, 0.35355338
      %v1389 = vmul.f32 %v1383, 0.35355338
      %v1390 = vadd.f32 %v1388, %v934
      %v1391 = vadd.f32 %v1389, %v938
      %v1392 = vsel %vm833, %v1390, -inf
      %1393 = vmax.xlane.f32.xlu0 %v1392
      %v1394 = vpop.xlane.xlu0 %1393
      %v1395 = vsel %vm833, %v1391, -inf
      %1396 = vmax.xlane.f32.xlu0 %v1395
      %v1397 = vpop.xlane.xlu0 %1396
      %v1398 = vsub.f32 %v1390, %v1394
      %v1399 = vsub.f32 %v1391, %v1397
      %v1400 = vmul.f32 %v1398, 1.442695
      %v1401 = vpow.pop %v1400
      %v1402 = vmul.f32 %v1399, 1.442695
      %v1403 = vpow.pop %v1402
      %v1404 = vsel %vm833, %v1401, 0.0
      %1405 = vadd.xlane.f32.xlu0 %v1404
      %v1406 = vpop.xlane.xlu0 %1405
      %v1407 = vsel %vm833, %v1403, 0.0
      %1408 = vadd.xlane.f32.xlu0 %v1407
      %v1409 = vpop.xlane.xlu0 %1408
      %v1410 = vrcp.pop %v1406
      %v1411 = vmul.f32 %v1401, %v1410
      %v1412 = vrcp.pop %v1409
      %v1413 = vmul.f32 %v1403, %v1412
      %v1414 = vpack.c.bf16 %v1411, %v1411
      %v1415 = vpack.c.bf16 %v1413, %v1413
      %1416 = vrot.lane.b32.xlu0 %v828, 48
      %v1417 = vpop.permute.xlu0 %1416
      %v1419 = vsel %vm833, %v1414, 0
      %v1422 = vsel %vm972, %v1417, 0
      %1424 = vmatprep.subr.bf16.mxu0 0
      %1425 = vmatpush1.bf16.msra.mxu0 %v1422
      %1426 = vmatprep.subr.bf16.mxu0 0
      %1427 = vmatpush1.bf16.msra.mxu0 0
      %1428 = vmatprep.subr.bf16.mxu0 0
      %1429 = vmatpush1.bf16.msra.mxu0 0
      %1430 = vmatprep.subr.bf16.mxu0 0
      %1431 = vmatpush1.bf16.msra.mxu0 0
      %1432 = vmatprep.subr.bf16.mxu0 0
      %1433 = vmatpush1.bf16.msra.mxu0 0
      %1434 = vmatprep.subr.bf16.mxu0 0
      %1435 = vmatpush1.bf16.msra.mxu0 0
      %1436 = vmatprep.subr.bf16.mxu0 0
      %1437 = vmatpush1.bf16.msra.mxu0 0
      %1438 = vmatprep.subr.bf16.mxu0 0
      %1439 = vmatpush1.bf16.msra.mxu0 0
      %1440 = vmatprep.subr.bf16.mxu0 0
      %1441 = vmatpush1.bf16.msra.mxu0 0
      %1442 = vmatprep.subr.bf16.mxu0 0
      %1443 = vmatpush1.bf16.msra.mxu0 0
      %1444 = vmatprep.subr.bf16.mxu0 0
      %1445 = vmatpush1.bf16.msra.mxu0 0
      %1446 = vmatprep.subr.bf16.mxu0 0
      %1447 = vmatpush1.bf16.msra.mxu0 0
      %1448 = vmatprep.subr.bf16.mxu0 0
      %1449 = vmatpush1.bf16.msra.mxu0 0
      %1450 = vmatprep.subr.bf16.mxu0 0
      %1451 = vmatpush1.bf16.msra.mxu0 0
      %1452 = vmatprep.subr.bf16.mxu0 0
      %1453 = vmatpush1.bf16.msra.mxu0 0
      %1454 = vmatprep.subr.bf16.mxu0 0
      %1455 = vmatpush1.bf16.msra.mxu0 0
      %1456 = vmatprep.mubr.bf16.mxu0 0
      %1457 = vmatmul.mubr.bf16.gmra.mrb[0].mxu0 %v1419
      %v1458 = vpop.f32.mrb[0].mxu0
      %v1459 = vadd.f32 0.0, %v1458
      %v1460 = vpop.f32.mrb[0].mxu0
      %v1461 = vpop.f32.mrb[0].mxu0
      %v1462 = vpop.f32.mrb[0].mxu0
      %1463 = vdwg.mxu0
      %1464 = vrot.lane.b32.xlu0 %v829, 48
      %v1465 = vpop.permute.xlu0 %1464
      %v1467 = vsel %vm833, %v1415, 0
      %v1470 = vsel %vm972, %v1465, 0
      %1472 = vmatprep.subr.bf16.mxu0 0
      %1473 = vmatpush1.bf16.msra.mxu0 %v1470
      %1474 = vmatprep.subr.bf16.mxu0 0
      %1475 = vmatpush1.bf16.msra.mxu0 0
      %1476 = vmatprep.subr.bf16.mxu0 0
      %1477 = vmatpush1.bf16.msra.mxu0 0
      %1478 = vmatprep.subr.bf16.mxu0 0
      %1479 = vmatpush1.bf16.msra.mxu0 0
      %1480 = vmatprep.subr.bf16.mxu0 0
      %1481 = vmatpush1.bf16.msra.mxu0 0
      %1482 = vmatprep.subr.bf16.mxu0 0
      %1483 = vmatpush1.bf16.msra.mxu0 0
      %1484 = vmatprep.subr.bf16.mxu0 0
      %1485 = vmatpush1.bf16.msra.mxu0 0
      %1486 = vmatprep.subr.bf16.mxu0 0
      %1487 = vmatpush1.bf16.msra.mxu0 0
      %1488 = vmatprep.subr.bf16.mxu0 0
      %1489 = vmatpush1.bf16.msra.mxu0 0
      %1490 = vmatprep.subr.bf16.mxu0 0
      %1491 = vmatpush1.bf16.msra.mxu0 0
      %1492 = vmatprep.subr.bf16.mxu0 0
      %1493 = vmatpush1.bf16.msra.mxu0 0
      %1494 = vmatprep.subr.bf16.mxu0 0
      %1495 = vmatpush1.bf16.msra.mxu0 0
      %1496 = vmatprep.subr.bf16.mxu0 0
      %1497 = vmatpush1.bf16.msra.mxu0 0
      %1498 = vmatprep.subr.bf16.mxu0 0
      %1499 = vmatpush1.bf16.msra.mxu0 0
      %1500 = vmatprep.subr.bf16.mxu0 0
      %1501 = vmatpush1.bf16.msra.mxu0 0
      %1502 = vmatprep.subr.bf16.mxu0 0
      %1503 = vmatpush1.bf16.msra.mxu0 0
      %1504 = vmatprep.mubr.bf16.mxu0 0
      %1505 = vmatmul.mubr.bf16.gmra.mrb[0].mxu0 %v1467
      %v1506 = vpop.f32.mrb[0].mxu0
      %v1507 = vadd.f32 0.0, %v1506
      %v1508 = vpop.f32.mrb[0].mxu0
      %v1509 = vpop.f32.mrb[0].mxu0
      %v1510 = vpop.f32.mrb[0].mxu0
      %1511 = vdwg.mxu0
      %1512 = vrot.lane.b32.xlu0 %v828, 104
      %v1513 = vpop.permute.xlu0 %1512
      %1514 = vrot.lane.b32.xlu0 %v828, 72
      %v1515 = vpop.permute.xlu0 %1514
      %v1517 = vsel %vm833, %v1513, 0
      %v1520 = vsel %vm833, %v1515, 0
      %1522 = vmatprep.subr.bf16.mxu0 0
      %1523 = vmatpush1.bf16.xpose.msra.mxu0 %v1520
      %1524 = vmatprep.subr.bf16.mxu0 0
      %1525 = vmatpush1.bf16.xpose.msra.mxu0 0
      %1526 = vmatprep.subr.bf16.mxu0 0
      %1527 = vmatpush1.bf16.xpose.msra.mxu0 0
      %1528 = vmatprep.subr.bf16.mxu0 0
      %1529 = vmatpush1.bf16.xpose.msra.mxu0 0
      %1530 = vmatprep.subr.bf16.mxu0 0
      %1531 = vmatpush1.bf16.xpose.msra.mxu0 0
      %1532 = vmatprep.subr.bf16.mxu0 0
      %1533 = vmatpush1.bf16.xpose.msra.mxu0 0
      %1534 = vmatprep.subr.bf16.mxu0 0
      %1535 = vmatpush1.bf16.xpose.msra.mxu0 0
      %1536 = vmatprep.subr.bf16.mxu0 0
      %1537 = vmatpush1.bf16.xpose.msra.mxu0 0
      %1538 = vmatprep.subr.bf16.mxu0 0
      %1539 = vmatpush1.bf16.xpose.msra.mxu0 0
      %1540 = vmatprep.subr.bf16.mxu0 0
      %1541 = vmatpush1.bf16.xpose.msra.mxu0 0
      %1542 = vmatprep.subr.bf16.mxu0 0
      %1543 = vmatpush1.bf16.xpose.msra.mxu0 0
      %1544 = vmatprep.subr.bf16.mxu0 0
      %1545 = vmatpush1.bf16.xpose.msra.mxu0 0
      %1546 = vmatprep.subr.bf16.mxu0 0
      %1547 = vmatpush1.bf16.xpose.msra.mxu0 0
      %1548 = vmatprep.subr.bf16.mxu0 0
      %1549 = vmatpush1.bf16.xpose.msra.mxu0 0
      %1550 = vmatprep.subr.bf16.mxu0 0
      %1551 = vmatpush1.bf16.xpose.msra.mxu0 0
      %1552 = vmatprep.subr.bf16.mxu0 0
      %1553 = vmatpush1.bf16.xpose.msra.mxu0 0
      %1554 = vmatprep.mubr.bf16.mxu0 0
      %1555 = vmatmul.mubr.bf16.gmra.mrb[0].mxu0 %v1517
      %v1556 = vpop.f32.mrb[0].mxu0
      %v1557 = vadd.f32 0.0, %v1556
      %v1558 = vpop.f32.mrb[0].mxu0
      %v1559 = vpop.f32.mrb[0].mxu0
      %v1560 = vpop.f32.mrb[0].mxu0
      %1561 = vdwg.mxu0
      %1562 = vrot.lane.b32.xlu0 %v829, 104
      %v1563 = vpop.permute.xlu0 %1562
      %1564 = vrot.lane.b32.xlu0 %v829, 72
      %v1565 = vpop.permute.xlu0 %1564
      %v1567 = vsel %vm833, %v1563, 0
      %v1570 = vsel %vm833, %v1565, 0
      %1572 = vmatprep.subr.bf16.mxu0 0
      %1573 = vmatpush1.bf16.xpose.msra.mxu0 %v1570
      %1574 = vmatprep.subr.bf16.mxu0 0
      %1575 = vmatpush1.bf16.xpose.msra.mxu0 0
      %1576 = vmatprep.subr.bf16.mxu0 0
      %1577 = vmatpush1.bf16.xpose.msra.mxu0 0
      %1578 = vmatprep.subr.bf16.mxu0 0
      %1579 = vmatpush1.bf16.xpose.msra.mxu0 0
      %1580 = vmatprep.subr.bf16.mxu0 0
      %1581 = vmatpush1.bf16.xpose.msra.mxu0 0
      %1582 = vmatprep.subr.bf16.mxu0 0
      %1583 = vmatpush1.bf16.xpose.msra.mxu0 0
      %1584 = vmatprep.subr.bf16.mxu0 0
      %1585 = vmatpush1.bf16.xpose.msra.mxu0 0
      %1586 = vmatprep.subr.bf16.mxu0 0
      %1587 = vmatpush1.bf16.xpose.msra.mxu0 0
      %1588 = vmatprep.subr.bf16.mxu0 0
      %1589 = vmatpush1.bf16.xpose.msra.mxu0 0
      %1590 = vmatprep.subr.bf16.mxu0 0
      %1591 = vmatpush1.bf16.xpose.msra.mxu0 0
      %1592 = vmatprep.subr.bf16.mxu0 0
      %1593 = vmatpush1.bf16.xpose.msra.mxu0 0
      %1594 = vmatprep.subr.bf16.mxu0 0
      %1595 = vmatpush1.bf16.xpose.msra.mxu0 0
      %1596 = vmatprep.subr.bf16.mxu0 0
      %1597 = vmatpush1.bf16.xpose.msra.mxu0 0
      %1598 = vmatprep.subr.bf16.mxu0 0
      %1599 = vmatpush1.bf16.xpose.msra.mxu0 0
      %1600 = vmatprep.subr.bf16.mxu0 0
      %1601 = vmatpush1.bf16.xpose.msra.mxu0 0
      %1602 = vmatprep.subr.bf16.mxu0 0
      %1603 = vmatpush1.bf16.xpose.msra.mxu0 0
      %1604 = vmatprep.mubr.bf16.mxu0 0
      %1605 = vmatmul.mubr.bf16.gmra.mrb[0].mxu0 %v1567
      %v1606 = vpop.f32.mrb[0].mxu0
      %v1607 = vadd.f32 0.0, %v1606
      %v1608 = vpop.f32.mrb[0].mxu0
      %v1609 = vpop.f32.mrb[0].mxu0
      %v1610 = vpop.f32.mrb[0].mxu0
      %1611 = vdwg.mxu0
      %v1612 = vmul.f32 %v1557, 0.35355338
      %v1613 = vmul.f32 %v1607, 0.35355338
      %v1614 = vadd.f32 %v1612, %v934
      %v1615 = vadd.f32 %v1613, %v938
      %v1616 = vsel %vm833, %v1614, -inf
      %1617 = vmax.xlane.f32.xlu0 %v1616
      %v1618 = vpop.xlane.xlu0 %1617
      %v1619 = vsel %vm833, %v1615, -inf
      %1620 = vmax.xlane.f32.xlu0 %v1619
      %v1621 = vpop.xlane.xlu0 %1620
      %v1622 = vsub.f32 %v1614, %v1618
      %v1623 = vsub.f32 %v1615, %v1621
      %v1624 = vmul.f32 %v1622, 1.442695
      %v1625 = vpow.pop %v1624
      %v1626 = vmul.f32 %v1623, 1.442695
      %v1627 = vpow.pop %v1626
      %v1628 = vsel %vm833, %v1625, 0.0
      %1629 = vadd.xlane.f32.xlu0 %v1628
      %v1630 = vpop.xlane.xlu0 %1629
      %v1631 = vsel %vm833, %v1627, 0.0
      %1632 = vadd.xlane.f32.xlu0 %v1631
      %v1633 = vpop.xlane.xlu0 %1632
      %v1634 = vrcp.pop %v1630
      %v1635 = vmul.f32 %v1625, %v1634
      %v1636 = vrcp.pop %v1633
      %v1637 = vmul.f32 %v1627, %v1636
      %v1638 = vpack.c.bf16 %v1635, %v1635
      %v1639 = vpack.c.bf16 %v1637, %v1637
      %1640 = vrot.lane.b32.xlu0 %v828, 40
      %v1641 = vpop.permute.xlu0 %1640
      %v1643 = vsel %vm833, %v1638, 0
      %v1646 = vsel %vm972, %v1641, 0
      %1648 = vmatprep.subr.bf16.mxu0 0
      %1649 = vmatpush1.bf16.msra.mxu0 %v1646
      %1650 = vmatprep.subr.bf16.mxu0 0
      %1651 = vmatpush1.bf16.msra.mxu0 0
      %1652 = vmatprep.subr.bf16.mxu0 0
      %1653 = vmatpush1.bf16.msra.mxu0 0
      %1654 = vmatprep.subr.bf16.mxu0 0
      %1655 = vmatpush1.bf16.msra.mxu0 0
      %1656 = vmatprep.subr.bf16.mxu0 0
      %1657 = vmatpush1.bf16.msra.mxu0 0
      %1658 = vmatprep.subr.bf16.mxu0 0
      %1659 = vmatpush1.bf16.msra.mxu0 0
      %1660 = vmatprep.subr.bf16.mxu0 0
      %1661 = vmatpush1.bf16.msra.mxu0 0
      %1662 = vmatprep.subr.bf16.mxu0 0
      %1663 = vmatpush1.bf16.msra.mxu0 0
      %1664 = vmatprep.subr.bf16.mxu0 0
      %1665 = vmatpush1.bf16.msra.mxu0 0
      %1666 = vmatprep.subr.bf16.mxu0 0
      %1667 = vmatpush1.bf16.msra.mxu0 0
      %1668 = vmatprep.subr.bf16.mxu0 0
      %1669 = vmatpush1.bf16.msra.mxu0 0
      %1670 = vmatprep.subr.bf16.mxu0 0
      %1671 = vmatpush1.bf16.msra.mxu0 0
      %1672 = vmatprep.subr.bf16.mxu0 0
      %1673 = vmatpush1.bf16.msra.mxu0 0
      %1674 = vmatprep.subr.bf16.mxu0 0
      %1675 = vmatpush1.bf16.msra.mxu0 0
      %1676 = vmatprep.subr.bf16.mxu0 0
      %1677 = vmatpush1.bf16.msra.mxu0 0
      %1678 = vmatprep.subr.bf16.mxu0 0
      %1679 = vmatpush1.bf16.msra.mxu0 0
      %1680 = vmatprep.mubr.bf16.mxu0 0
      %1681 = vmatmul.mubr.bf16.gmra.mrb[0].mxu0 %v1643
      %v1682 = vpop.f32.mrb[0].mxu0
      %v1683 = vadd.f32 0.0, %v1682
      %v1684 = vpop.f32.mrb[0].mxu0
      %v1685 = vpop.f32.mrb[0].mxu0
      %v1686 = vpop.f32.mrb[0].mxu0
      %1687 = vdwg.mxu0
      %1688 = vrot.lane.b32.xlu0 %v829, 40
      %v1689 = vpop.permute.xlu0 %1688
      %v1691 = vsel %vm833, %v1639, 0
      %v1694 = vsel %vm972, %v1689, 0
      %1696 = vmatprep.subr.bf16.mxu0 0
      %1697 = vmatpush1.bf16.msra.mxu0 %v1694
      %1698 = vmatprep.subr.bf16.mxu0 0
      %1699 = vmatpush1.bf16.msra.mxu0 0
      %1700 = vmatprep.subr.bf16.mxu0 0
      %1701 = vmatpush1.bf16.msra.mxu0 0
      %1702 = vmatprep.subr.bf16.mxu0 0
      %1703 = vmatpush1.bf16.msra.mxu0 0
      %1704 = vmatprep.subr.bf16.mxu0 0
      %1705 = vmatpush1.bf16.msra.mxu0 0
      %1706 = vmatprep.subr.bf16.mxu0 0
      %1707 = vmatpush1.bf16.msra.mxu0 0
      %1708 = vmatprep.subr.bf16.mxu0 0
      %1709 = vmatpush1.bf16.msra.mxu0 0
      %1710 = vmatprep.subr.bf16.mxu0 0
      %1711 = vmatpush1.bf16.msra.mxu0 0
      %1712 = vmatprep.subr.bf16.mxu0 0
      %1713 = vmatpush1.bf16.msra.mxu0 0
      %1714 = vmatprep.subr.bf16.mxu0 0
      %1715 = vmatpush1.bf16.msra.mxu0 0
      %1716 = vmatprep.subr.bf16.mxu0 0
      %1717 = vmatpush1.bf16.msra.mxu0 0
      %1718 = vmatprep.subr.bf16.mxu0 0
      %1719 = vmatpush1.bf16.msra.mxu0 0
      %1720 = vmatprep.subr.bf16.mxu0 0
      %1721 = vmatpush1.bf16.msra.mxu0 0
      %1722 = vmatprep.subr.bf16.mxu0 0
      %1723 = vmatpush1.bf16.msra.mxu0 0
      %1724 = vmatprep.subr.bf16.mxu0 0
      %1725 = vmatpush1.bf16.msra.mxu0 0
      %1726 = vmatprep.subr.bf16.mxu0 0
      %1727 = vmatpush1.bf16.msra.mxu0 0
      %1728 = vmatprep.mubr.bf16.mxu0 0
      %1729 = vmatmul.mubr.bf16.gmra.mrb[0].mxu0 %v1691
      %v1730 = vpop.f32.mrb[0].mxu0
      %v1731 = vadd.f32 0.0, %v1730
      %v1732 = vpop.f32.mrb[0].mxu0
      %v1733 = vpop.f32.mrb[0].mxu0
      %v1734 = vpop.f32.mrb[0].mxu0
      %1735 = vdwg.mxu0
      %1738 = vrot.lane.b32.xlu0 %v1235, 8
      %v1739 = vpop.permute.xlu0 %1738
      %1740 = vrot.lane.b32.xlu0 %v1283, 8
      %v1741 = vpop.permute.xlu0 %1740
      %1746 = vrot.lane.b32.xlu0 %v1459, 16
      %v1747 = vpop.permute.xlu0 %1746
      %1748 = vrot.lane.b32.xlu0 %v1507, 16
      %v1749 = vpop.permute.xlu0 %1748
      %1754 = vrot.lane.b32.xlu0 %v1683, 24
      %v1755 = vpop.permute.xlu0 %1754
      %1756 = vrot.lane.b32.xlu0 %v1731, 24
      %v1757 = vpop.permute.xlu0 %1756
      %v1760 = vsel %vm833, %v1011, %v1739
      %v1761 = vsel %vm833, %v1059, %v1741
      %vm1762 = vcmask 130048
      %v1763 = vsel %vm1762, %v1760, %v1747
      %v1764 = vsel %vm1762, %v1761, %v1749
      %vm1765 = vcmask 195584
      %v1766 = vsel %vm1765, %v1763, %v1755
      %v1767 = vsel %vm1765, %v1764, %v1757
      %v1768 = vld [vmem:[%s6] sm:$0xf]
      %v1769 = vld [vmem:[%s6 + $0x4] sm:$0xf]
      %v1770 = vld [vmem:[%s6 + $0x8] sm:$0xf]
      %v1771 = vld [vmem:[%s6 + $0xc] sm:$0xf]
      %v1772 = vpack.c.bf16 %v1767, %v1766
      %v1773 = vld [vmem:[%s7] sm:$0x1]
      %v1775 = vlaneseq
      %v1776 = vshrl.u32 %v1775, 7
      %v1777 = vsub.s32 0, %v1776
      %v1778 = vrot.slane %v1773, %v1777
      %v1784 = vunpack.c.l.b16 %v1768
      %v1785 = vunpack.c.l.b16 %v1769
      %v1786 = vunpack.c.l.b16 %v1770
      %v1787 = vunpack.c.l.b16 %v1771
      %v1788 = vpack.c.b16 %v1785, %v1784
      %v1789 = vpack.c.b16 %v1787, %v1786
      %v1793 = vsel %vm690, %v1772, 0
      %1795 = vmatprep.subr.bf16.mxu0 0
      %1796 = vmatpush1.bf16.msra.mxu0 %v1788
      %1797 = vmatprep.subr.bf16.mxu0 0
      %1798 = vmatpush1.bf16.msra.mxu0 %v1789
      %1799 = vmatprep.subr.bf16.mxu0 0
      %1800 = vmatpush1.bf16.msra.mxu0 0
      %1801 = vmatprep.subr.bf16.mxu0 0
      %1802 = vmatpush1.bf16.msra.mxu0 0
      %1803 = vmatprep.subr.bf16.mxu0 0
      %1804 = vmatpush1.bf16.msra.mxu0 0
      %1805 = vmatprep.subr.bf16.mxu0 0
      %1806 = vmatpush1.bf16.msra.mxu0 0
      %1807 = vmatprep.subr.bf16.mxu0 0
      %1808 = vmatpush1.bf16.msra.mxu0 0
      %1809 = vmatprep.subr.bf16.mxu0 0
      %1810 = vmatpush1.bf16.msra.mxu0 0
      %1811 = vmatprep.subr.bf16.mxu0 0
      %1812 = vmatpush1.bf16.msra.mxu0 0
      %1813 = vmatprep.subr.bf16.mxu0 0
      %1814 = vmatpush1.bf16.msra.mxu0 0
      %1815 = vmatprep.subr.bf16.mxu0 0
      %1816 = vmatpush1.bf16.msra.mxu0 0
      %1817 = vmatprep.subr.bf16.mxu0 0
      %1818 = vmatpush1.bf16.msra.mxu0 0
      %1819 = vmatprep.subr.bf16.mxu0 0
      %1820 = vmatpush1.bf16.msra.mxu0 0
      %1821 = vmatprep.subr.bf16.mxu0 0
      %1822 = vmatpush1.bf16.msra.mxu0 0
      %1823 = vmatprep.subr.bf16.mxu0 0
      %1824 = vmatpush1.bf16.msra.mxu0 0
      %1825 = vmatprep.subr.bf16.mxu0 0
      %1826 = vmatpush1.bf16.msra.mxu0 0
      %1827 = vmatprep.mubr.bf16.mxu0 0
      %1828 = vmatmul.mubr.bf16.gmra.mrb[0].mxu0 %v1793
      %v1829 = vpop.f32.mrb[0].mxu0
      %v1830 = vadd.f32 %v1778, %v1829
      %v1831 = vpop.f32.mrb[0].mxu0
      %v1832 = vpop.f32.mrb[0].mxu0
      %v1833 = vadd.f32 %v1778, %v1832
      %v1834 = vpop.f32.mrb[0].mxu0
      %1835 = vdwg.mxu0
      %v1836 = vadd.f32 %v1830, %v732
      %v1837 = vadd.f32 %v1833, %v733
      %v1838 = vld [vmem:[%s8] sm:$0x1]
      %v1839 = vld [vmem:[%s9] sm:$0x1]
      %v1840 = vsel %vm690, %v1836, 0.0
      %1841 = vadd.xlane.f32.xlu0 %v1840
      %v1842 = vpop.xlane.xlu0 %1841
      %v1843 = vsel %vm690, %v1837, 0.0
      %1844 = vadd.xlane.f32.xlu0 %v1843
      %v1845 = vpop.xlane.xlu0 %1844
      %v1846 = vmul.f32 %v1842, %v697
      %v1847 = vmul.f32 %v1845, %v697
      %v1848 = vsub.f32 %v1836, %v1846
      %v1849 = vsub.f32 %v1837, %v1847
      %v1850 = vmul.f32 %v1848, %v1848
      %v1851 = vmul.f32 %v1849, %v1849
      %v1852 = vsel %vm690, %v1850, 0.0
      %1853 = vadd.xlane.f32.xlu0 %v1852
      %v1854 = vpop.xlane.xlu0 %1853
      %v1855 = vsel %vm690, %v1851, 0.0
      %1856 = vadd.xlane.f32.xlu0 %v1855
      %v1857 = vpop.xlane.xlu0 %1856
      %v1858 = vmul.f32 %v1854, %v697
      %v1859 = vmul.f32 %v1857, %v697
      %v1860 = vadd.f32 %v1858, 1e-12
      %v1861 = vadd.f32 %v1859, 1e-12
      %v1862 = vrsqrt.pop %v1860
      %v1863 = vrsqrt.pop %v1861
      %v1864 = vmul.f32 %v1848, %v1862
      %v1865 = vmul.f32 %v1849, %v1863
      %v1867 = vlaneseq
      %v1868 = vshrl.u32 %v1867, 7
      %v1869 = vsub.s32 0, %v1868
      %v1870 = vrot.slane %v1838, %v1869
      %v1872 = vmul.f32 %v1864, %v1870
      %v1873 = vmul.f32 %v1865, %v1870
      %v1875 = vlaneseq
      %v1876 = vshrl.u32 %v1875, 7
      %v1877 = vsub.s32 0, %v1876
      %v1878 = vrot.slane %v1839, %v1877
      %v1880 = vadd.f32 %v1872, %v1878
      %v1881 = vadd.f32 %v1873, %v1878
      %v1882 = vld [vmem:[%s10] sm:$0xf]
      %v1883 = vld [vmem:[%s10 + $0x4] sm:$0xf]
      %v1884 = vld [vmem:[%s10 + $0x8] sm:$0xf]
      %v1885 = vld [vmem:[%s10 + $0xc] sm:$0xf]
      %v1886 = vpack.c.bf16 %v1881, %v1880
      %v1887 = vld [vmem:[%s11] sm:$0x1]
      %v1889 = vlaneseq
      %v1890 = vshrl.u32 %v1889, 7
      %v1891 = vsub.s32 0, %v1890
      %v1892 = vrot.slane %v1887, %v1891
      %v1898 = vunpack.c.l.b16 %v1882
      %v1899 = vunpack.c.l.b16 %v1883
      %v1900 = vunpack.c.l.b16 %v1884
      %v1901 = vunpack.c.l.b16 %v1885
      %v1902 = vpack.c.b16 %v1899, %v1898
      %v1903 = vpack.c.b16 %v1901, %v1900
      %v1907 = vsel %vm690, %v1886, 0
      %1909 = vmatprep.subr.bf16.mxu0 0
      %1910 = vmatpush1.bf16.msra.mxu0 %v1902
      %1911 = vmatprep.subr.bf16.mxu0 0
      %1912 = vmatpush1.bf16.msra.mxu0 %v1903
      %1913 = vmatprep.subr.bf16.mxu0 0
      %1914 = vmatpush1.bf16.msra.mxu0 0
      %1915 = vmatprep.subr.bf16.mxu0 0
      %1916 = vmatpush1.bf16.msra.mxu0 0
      %1917 = vmatprep.subr.bf16.mxu0 0
      %1918 = vmatpush1.bf16.msra.mxu0 0
      %1919 = vmatprep.subr.bf16.mxu0 0
      %1920 = vmatpush1.bf16.msra.mxu0 0
      %1921 = vmatprep.subr.bf16.mxu0 0
      %1922 = vmatpush1.bf16.msra.mxu0 0
      %1923 = vmatprep.subr.bf16.mxu0 0
      %1924 = vmatpush1.bf16.msra.mxu0 0
      %1925 = vmatprep.subr.bf16.mxu0 0
      %1926 = vmatpush1.bf16.msra.mxu0 0
      %1927 = vmatprep.subr.bf16.mxu0 0
      %1928 = vmatpush1.bf16.msra.mxu0 0
      %1929 = vmatprep.subr.bf16.mxu0 0
      %1930 = vmatpush1.bf16.msra.mxu0 0
      %1931 = vmatprep.subr.bf16.mxu0 0
      %1932 = vmatpush1.bf16.msra.mxu0 0
      %1933 = vmatprep.subr.bf16.mxu0 0
      %1934 = vmatpush1.bf16.msra.mxu0 0
      %1935 = vmatprep.subr.bf16.mxu0 0
      %1936 = vmatpush1.bf16.msra.mxu0 0
      %1937 = vmatprep.subr.bf16.mxu0 0
      %1938 = vmatpush1.bf16.msra.mxu0 0
      %1939 = vmatprep.subr.bf16.mxu0 0
      %1940 = vmatpush1.bf16.msra.mxu0 0
      %1941 = vmatprep.mubr.bf16.mxu0 0
      %1942 = vmatmul.mubr.bf16.gmra.mrb[0].mxu0 %v1907
      %v1943 = vpop.f32.mrb[0].mxu0
      %v1944 = vadd.f32 %v1892, %v1943
      %v1945 = vpop.f32.mrb[0].mxu0
      %v1946 = vpop.f32.mrb[0].mxu0
      %v1947 = vadd.f32 %v1892, %v1946
      %v1948 = vpop.f32.mrb[0].mxu0
      %1949 = vdwg.mxu0
      %v1950 = vmul.f32 %v1944, %v1944
      %v1951 = vmul.f32 %v1947, %v1947
      %v1952 = vmul.f32 %v1944, %v1950
      %v1953 = vmul.f32 %v1947, %v1951
      %v1954 = vmul.f32 %v1952, 0.044715
      %v1955 = vmul.f32 %v1953, 0.044715
      %v1956 = vadd.f32 %v1944, %v1954
      %v1957 = vadd.f32 %v1947, %v1955
      %v1958 = vmul.f32 %v1956, 0.7978846
      %v1959 = vmul.f32 %v1957, 0.7978846
      %v1960 = vtanh.pop %v1958
      %v1961 = vtanh.pop %v1959
      %v1962 = vadd.f32 %v1960, 1.0
      %v1963 = vadd.f32 %v1961, 1.0
      %v1964 = vmul.f32 %v1962, 0.5
      %v1965 = vmul.f32 %v1963, 0.5
      %v1966 = vmul.f32 %v1944, %v1964
      %v1967 = vmul.f32 %v1947, %v1965
      %v1968 = vld [vmem:[%s12] sm:$0xf]
      %v1969 = vld [vmem:[%s12 + $0x4] sm:$0xf]
      %v1970 = vld [vmem:[%s12 + $0x8] sm:$0xf]
      %v1971 = vld [vmem:[%s12 + $0xc] sm:$0xf]
      %v1972 = vld [vmem:[%s12 + $0x10] sm:$0xf]
      %v1973 = vld [vmem:[%s12 + $0x14] sm:$0xf]
      %v1974 = vld [vmem:[%s12 + $0x18] sm:$0xf]
      %v1975 = vld [vmem:[%s12 + $0x1c] sm:$0xf]
      %v1976 = vpack.c.bf16 %v1967, %v1966
      %v1977 = vld [vmem:[%s13] sm:$0x1]
      %v1979 = vlaneseq
      %v1980 = vshrl.u32 %v1979, 7
      %v1981 = vsub.s32 0, %v1980
      %v1982 = vrot.slane %v1977, %v1981
      %v1992 = vunpack.c.l.b16 %v1968
      %v1993 = vunpack.c.l.b16 %v1969
      %v1994 = vunpack.c.l.b16 %v1970
      %v1995 = vunpack.c.l.b16 %v1971
      %v1996 = vunpack.c.l.b16 %v1972
      %v1997 = vunpack.c.l.b16 %v1973
      %v1998 = vunpack.c.l.b16 %v1974
      %v1999 = vunpack.c.l.b16 %v1975
      %v2000 = vpack.c.b16 %v1993, %v1992
      %v2001 = vpack.c.b16 %v1995, %v1994
      %v2002 = vpack.c.b16 %v1997, %v1996
      %v2003 = vpack.c.b16 %v1999, %v1998
      %vm2008 = vcmask 523264
      %v2010 = vsel %vm2008, %v1976, 0
      %2012 = vmatprep.subr.bf16.mxu0 0
      %2013 = vmatpush1.bf16.msra.mxu0 %v2000
      %2014 = vmatprep.subr.bf16.mxu0 0
      %2015 = vmatpush1.bf16.msra.mxu0 %v2001
      %2016 = vmatprep.subr.bf16.mxu0 0
      %2017 = vmatpush1.bf16.msra.mxu0 %v2002
      %2018 = vmatprep.subr.bf16.mxu0 0
      %2019 = vmatpush1.bf16.msra.mxu0 %v2003
      %2020 = vmatprep.subr.bf16.mxu0 0
      %2021 = vmatpush1.bf16.msra.mxu0 0
      %2022 = vmatprep.subr.bf16.mxu0 0
      %2023 = vmatpush1.bf16.msra.mxu0 0
      %2024 = vmatprep.subr.bf16.mxu0 0
      %2025 = vmatpush1.bf16.msra.mxu0 0
      %2026 = vmatprep.subr.bf16.mxu0 0
      %2027 = vmatpush1.bf16.msra.mxu0 0
      %2028 = vmatprep.subr.bf16.mxu0 0
      %2029 = vmatpush1.bf16.msra.mxu0 0
      %2030 = vmatprep.subr.bf16.mxu0 0
      %2031 = vmatpush1.bf16.msra.mxu0 0
      %2032 = vmatprep.subr.bf16.mxu0 0
      %2033 = vmatpush1.bf16.msra.mxu0 0
      %2034 = vmatprep.subr.bf16.mxu0 0
      %2035 = vmatpush1.bf16.msra.mxu0 0
      %2036 = vmatprep.subr.bf16.mxu0 0
      %2037 = vmatpush1.bf16.msra.mxu0 0
      %2038 = vmatprep.subr.bf16.mxu0 0
      %2039 = vmatpush1.bf16.msra.mxu0 0
      %2040 = vmatprep.subr.bf16.mxu0 0
      %2041 = vmatpush1.bf16.msra.mxu0 0
      %2042 = vmatprep.subr.bf16.mxu0 0
      %2043 = vmatpush1.bf16.msra.mxu0 0
      %2044 = vmatprep.mubr.bf16.mxu0 0
      %2045 = vmatmul.mubr.bf16.gmra.mrb[0].mxu0 %v2010
      %v2046 = vpop.f32.mrb[0].mxu0
      %v2047 = vadd.f32 %v1982, %v2046
      %v2048 = vpop.f32.mrb[0].mxu0
      %v2049 = vpop.f32.mrb[0].mxu0
      %v2050 = vadd.f32 %v1982, %v2049
      %v2051 = vpop.f32.mrb[0].mxu0
      %2052 = vdwg.mxu0
      %v2053 = vadd.f32 %v2047, %v1880
      %v2054 = vadd.f32 %v2050, %v1881
      %v2055 = vld [vmem:[%s14] sm:$0x1]
      %v2056 = vld [vmem:[%s15] sm:$0x1]
      %v2057 = vsel %vm690, %v2053, 0.0
      %2058 = vadd.xlane.f32.xlu0 %v2057
      %v2059 = vpop.xlane.xlu0 %2058
      %v2060 = vsel %vm690, %v2054, 0.0
      %2061 = vadd.xlane.f32.xlu0 %v2060
      %v2062 = vpop.xlane.xlu0 %2061
      %v2063 = vmul.f32 %v2059, %v697
      %v2064 = vmul.f32 %v2062, %v697
      %v2065 = vsub.f32 %v2053, %v2063
      %v2066 = vsub.f32 %v2054, %v2064
      %v2067 = vmul.f32 %v2065, %v2065
      %v2068 = vmul.f32 %v2066, %v2066
      %v2069 = vsel %vm690, %v2067, 0.0
      %2070 = vadd.xlane.f32.xlu0 %v2069
      %v2071 = vpop.xlane.xlu0 %2070
      %v2072 = vsel %vm690, %v2068, 0.0
      %2073 = vadd.xlane.f32.xlu0 %v2072
      %v2074 = vpop.xlane.xlu0 %2073
      %v2075 = vmul.f32 %v2071, %v697
      %v2076 = vmul.f32 %v2074, %v697
      %v2077 = vadd.f32 %v2075, 1e-12
      %v2078 = vadd.f32 %v2076, 1e-12
      %v2079 = vrsqrt.pop %v2077
      %v2080 = vrsqrt.pop %v2078
      %v2081 = vmul.f32 %v2065, %v2079
      %v2082 = vmul.f32 %v2066, %v2080
      %v2084 = vlaneseq
      %v2085 = vshrl.u32 %v2084, 7
      %v2086 = vsub.s32 0, %v2085
      %v2087 = vrot.slane %v2055, %v2086
      %v2089 = vmul.f32 %v2081, %v2087
      %v2090 = vmul.f32 %v2082, %v2087
      %v2092 = vlaneseq
      %v2093 = vshrl.u32 %v2092, 7
      %v2094 = vsub.s32 0, %v2093
      %v2095 = vrot.slane %v2056, %v2094
      %v2097 = vadd.f32 %v2089, %v2095
      %v2098 = vadd.f32 %v2090, %v2095
      %s2099 = scalar_lea.vmem %s4, 16
      %v2100 = vld [vmem:[%s2099] sm:$0xf]
      %v2101 = vld [vmem:[%s2099 + $0x4] sm:$0xf]
      %v2102 = vld [vmem:[%s2099 + $0x8] sm:$0xf]
      %v2103 = vld [vmem:[%s2099 + $0xc] sm:$0xf]
      %v2104 = vpack.c.bf16 %v2098, %v2097
      %s2105 = scalar_lea.vmem %s5, 1
      %v2106 = vld [vmem:[%s2105] sm:$0x1]
      %v2108 = vlaneseq
      %v2109 = vshrl.u32 %v2108, 7
      %v2110 = vsub.s32 0, %v2109
      %v2111 = vrot.slane %v2106, %v2110
      %v2117 = vunpack.c.l.b16 %v2100
      %v2118 = vunpack.c.l.b16 %v2101
      %v2119 = vunpack.c.l.b16 %v2102
      %v2120 = vunpack.c.l.b16 %v2103
      %v2121 = vpack.c.b16 %v2118, %v2117
      %v2122 = vpack.c.b16 %v2120, %v2119
      %v2126 = vsel %vm690, %v2104, 0
      %2128 = vmatprep.subr.bf16.mxu0 0
      %2129 = vmatpush1.bf16.msra.mxu0 %v2121
      %2130 = vmatprep.subr.bf16.mxu0 0
      %2131 = vmatpush1.bf16.msra.mxu0 %v2122
      %2132 = vmatprep.subr.bf16.mxu0 0
      %2133 = vmatpush1.bf16.msra.mxu0 0
      %2134 = vmatprep.subr.bf16.mxu0 0
      %2135 = vmatpush1.bf16.msra.mxu0 0
      %2136 = vmatprep.subr.bf16.mxu0 0
      %2137 = vmatpush1.bf16.msra.mxu0 0
      %2138 = vmatprep.subr.bf16.mxu0 0
      %2139 = vmatpush1.bf16.msra.mxu0 0
      %2140 = vmatprep.subr.bf16.mxu0 0
      %2141 = vmatpush1.bf16.msra.mxu0 0
      %2142 = vmatprep.subr.bf16.mxu0 0
      %2143 = vmatpush1.bf16.msra.mxu0 0
      %2144 = vmatprep.subr.bf16.mxu0 0
      %2145 = vmatpush1.bf16.msra.mxu0 0
      %2146 = vmatprep.subr.bf16.mxu0 0
      %2147 = vmatpush1.bf16.msra.mxu0 0
      %2148 = vmatprep.subr.bf16.mxu0 0
      %2149 = vmatpush1.bf16.msra.mxu0 0
      %2150 = vmatprep.subr.bf16.mxu0 0
      %2151 = vmatpush1.bf16.msra.mxu0 0
      %2152 = vmatprep.subr.bf16.mxu0 0
      %2153 = vmatpush1.bf16.msra.mxu0 0
      %2154 = vmatprep.subr.bf16.mxu0 0
      %2155 = vmatpush1.bf16.msra.mxu0 0
      %2156 = vmatprep.subr.bf16.mxu0 0
      %2157 = vmatpush1.bf16.msra.mxu0 0
      %2158 = vmatprep.subr.bf16.mxu0 0
      %2159 = vmatpush1.bf16.msra.mxu0 0
      %2160 = vmatprep.mubr.bf16.mxu0 0
      %2161 = vmatmul.mubr.bf16.gmra.mrb[0].mxu0 %v2126
      %v2162 = vpop.f32.mrb[0].mxu0
      %v2163 = vadd.f32 %v2111, %v2162
      %v2164 = vpop.f32.mrb[0].mxu0
      %v2165 = vpop.f32.mrb[0].mxu0
      %v2166 = vadd.f32 %v2111, %v2165
      %v2167 = vpop.f32.mrb[0].mxu0
      %2168 = vdwg.mxu0
      %v2169 = vpack.c.bf16 %v2163, %v2163
      %v2170 = vpack.c.bf16 %v2166, %v2166
      %2172 = vrot.lane.b32.xlu0 %v2169, 96
      %v2173 = vpop.permute.xlu0 %2172
      %v2175 = vsel %vm833, %v2169, 0
      %v2178 = vsel %vm833, %v2173, 0
      %2180 = vmatprep.subr.bf16.mxu0 0
      %2181 = vmatpush1.bf16.xpose.msra.mxu0 %v2178
      %2182 = vmatprep.subr.bf16.mxu0 0
      %2183 = vmatpush1.bf16.xpose.msra.mxu0 0
      %2184 = vmatprep.subr.bf16.mxu0 0
      %2185 = vmatpush1.bf16.xpose.msra.mxu0 0
      %2186 = vmatprep.subr.bf16.mxu0 0
      %2187 = vmatpush1.bf16.xpose.msra.mxu0 0
      %2188 = vmatprep.subr.bf16.mxu0 0
      %2189 = vmatpush1.bf16.xpose.msra.mxu0 0
      %2190 = vmatprep.subr.bf16.mxu0 0
      %2191 = vmatpush1.bf16.xpose.msra.mxu0 0
      %2192 = vmatprep.subr.bf16.mxu0 0
      %2193 = vmatpush1.bf16.xpose.msra.mxu0 0
      %2194 = vmatprep.subr.bf16.mxu0 0
      %2195 = vmatpush1.bf16.xpose.msra.mxu0 0
      %2196 = vmatprep.subr.bf16.mxu0 0
      %2197 = vmatpush1.bf16.xpose.msra.mxu0 0
      %2198 = vmatprep.subr.bf16.mxu0 0
      %2199 = vmatpush1.bf16.xpose.msra.mxu0 0
      %2200 = vmatprep.subr.bf16.mxu0 0
      %2201 = vmatpush1.bf16.xpose.msra.mxu0 0
      %2202 = vmatprep.subr.bf16.mxu0 0
      %2203 = vmatpush1.bf16.xpose.msra.mxu0 0
      %2204 = vmatprep.subr.bf16.mxu0 0
      %2205 = vmatpush1.bf16.xpose.msra.mxu0 0
      %2206 = vmatprep.subr.bf16.mxu0 0
      %2207 = vmatpush1.bf16.xpose.msra.mxu0 0
      %2208 = vmatprep.subr.bf16.mxu0 0
      %2209 = vmatpush1.bf16.xpose.msra.mxu0 0
      %2210 = vmatprep.subr.bf16.mxu0 0
      %2211 = vmatpush1.bf16.xpose.msra.mxu0 0
      %2212 = vmatprep.mubr.bf16.mxu0 0
      %2213 = vmatmul.mubr.bf16.gmra.mrb[0].mxu0 %v2175
      %v2214 = vpop.f32.mrb[0].mxu0
      %v2215 = vadd.f32 0.0, %v2214
      %v2216 = vpop.f32.mrb[0].mxu0
      %v2217 = vpop.f32.mrb[0].mxu0
      %v2218 = vpop.f32.mrb[0].mxu0
      %2219 = vdwg.mxu0
      %2221 = vrot.lane.b32.xlu0 %v2170, 96
      %v2222 = vpop.permute.xlu0 %2221
      %v2224 = vsel %vm833, %v2170, 0
      %v2227 = vsel %vm833, %v2222, 0
      %2229 = vmatprep.subr.bf16.mxu0 0
      %2230 = vmatpush1.bf16.xpose.msra.mxu0 %v2227
      %2231 = vmatprep.subr.bf16.mxu0 0
      %2232 = vmatpush1.bf16.xpose.msra.mxu0 0
      %2233 = vmatprep.subr.bf16.mxu0 0
      %2234 = vmatpush1.bf16.xpose.msra.mxu0 0
      %2235 = vmatprep.subr.bf16.mxu0 0
      %2236 = vmatpush1.bf16.xpose.msra.mxu0 0
      %2237 = vmatprep.subr.bf16.mxu0 0
      %2238 = vmatpush1.bf16.xpose.msra.mxu0 0
      %2239 = vmatprep.subr.bf16.mxu0 0
      %2240 = vmatpush1.bf16.xpose.msra.mxu0 0
      %2241 = vmatprep.subr.bf16.mxu0 0
      %2242 = vmatpush1.bf16.xpose.msra.mxu0 0
      %2243 = vmatprep.subr.bf16.mxu0 0
      %2244 = vmatpush1.bf16.xpose.msra.mxu0 0
      %2245 = vmatprep.subr.bf16.mxu0 0
      %2246 = vmatpush1.bf16.xpose.msra.mxu0 0
      %2247 = vmatprep.subr.bf16.mxu0 0
      %2248 = vmatpush1.bf16.xpose.msra.mxu0 0
      %2249 = vmatprep.subr.bf16.mxu0 0
      %2250 = vmatpush1.bf16.xpose.msra.mxu0 0
      %2251 = vmatprep.subr.bf16.mxu0 0
      %2252 = vmatpush1.bf16.xpose.msra.mxu0 0
      %2253 = vmatprep.subr.bf16.mxu0 0
      %2254 = vmatpush1.bf16.xpose.msra.mxu0 0
      %2255 = vmatprep.subr.bf16.mxu0 0
      %2256 = vmatpush1.bf16.xpose.msra.mxu0 0
      %2257 = vmatprep.subr.bf16.mxu0 0
      %2258 = vmatpush1.bf16.xpose.msra.mxu0 0
      %2259 = vmatprep.subr.bf16.mxu0 0
      %2260 = vmatpush1.bf16.xpose.msra.mxu0 0
      %2261 = vmatprep.mubr.bf16.mxu0 0
      %2262 = vmatmul.mubr.bf16.gmra.mrb[0].mxu0 %v2224
      %v2263 = vpop.f32.mrb[0].mxu0
      %v2264 = vadd.f32 0.0, %v2263
      %v2265 = vpop.f32.mrb[0].mxu0
      %v2266 = vpop.f32.mrb[0].mxu0
      %v2267 = vpop.f32.mrb[0].mxu0
      %2268 = vdwg.mxu0
      %v2269 = vmul.f32 %v2215, 0.35355338
      %v2270 = vmul.f32 %v2264, 0.35355338
      %v2271 = vadd.f32 %v2269, %v934
      %v2272 = vadd.f32 %v2270, %v938
      %v2273 = vsel %vm833, %v2271, -inf
      %2274 = vmax.xlane.f32.xlu0 %v2273
      %v2275 = vpop.xlane.xlu0 %2274
      %v2276 = vsel %vm833, %v2272, -inf
      %2277 = vmax.xlane.f32.xlu0 %v2276
      %v2278 = vpop.xlane.xlu0 %2277
      %v2279 = vsub.f32 %v2271, %v2275
      %v2280 = vsub.f32 %v2272, %v2278
      %v2281 = vmul.f32 %v2279, 1.442695
      %v2282 = vpow.pop %v2281
      %v2283 = vmul.f32 %v2280, 1.442695
      %v2284 = vpow.pop %v2283
      %v2285 = vsel %vm833, %v2282, 0.0
      %2286 = vadd.xlane.f32.xlu0 %v2285
      %v2287 = vpop.xlane.xlu0 %2286
      %v2288 = vsel %vm833, %v2284, 0.0
      %2289 = vadd.xlane.f32.xlu0 %v2288
      %v2290 = vpop.xlane.xlu0 %2289
      %v2291 = vrcp.pop %v2287
      %v2292 = vmul.f32 %v2282, %v2291
      %v2293 = vrcp.pop %v2290
      %v2294 = vmul.f32 %v2284, %v2293
      %v2295 = vpack.c.bf16 %v2292, %v2292
      %v2296 = vpack.c.bf16 %v2294, %v2294
      %2297 = vrot.lane.b32.xlu0 %v2169, 64
      %v2298 = vpop.permute.xlu0 %2297
      %v2300 = vsel %vm833, %v2295, 0
      %v2303 = vsel %vm972, %v2298, 0
      %2305 = vmatprep.subr.bf16.mxu0 0
      %2306 = vmatpush1.bf16.msra.mxu0 %v2303
      %2307 = vmatprep.subr.bf16.mxu0 0
      %2308 = vmatpush1.bf16.msra.mxu0 0
      %2309 = vmatprep.subr.bf16.mxu0 0
      %2310 = vmatpush1.bf16.msra.mxu0 0
      %2311 = vmatprep.subr.bf16.mxu0 0
      %2312 = vmatpush1.bf16.msra.mxu0 0
      %2313 = vmatprep.subr.bf16.mxu0 0
      %2314 = vmatpush1.bf16.msra.mxu0 0
      %2315 = vmatprep.subr.bf16.mxu0 0
      %2316 = vmatpush1.bf16.msra.mxu0 0
      %2317 = vmatprep.subr.bf16.mxu0 0
      %2318 = vmatpush1.bf16.msra.mxu0 0
      %2319 = vmatprep.subr.bf16.mxu0 0
      %2320 = vmatpush1.bf16.msra.mxu0 0
      %2321 = vmatprep.subr.bf16.mxu0 0
      %2322 = vmatpush1.bf16.msra.mxu0 0
      %2323 = vmatprep.subr.bf16.mxu0 0
      %2324 = vmatpush1.bf16.msra.mxu0 0
      %2325 = vmatprep.subr.bf16.mxu0 0
      %2326 = vmatpush1.bf16.msra.mxu0 0
      %2327 = vmatprep.subr.bf16.mxu0 0
      %2328 = vmatpush1.bf16.msra.mxu0 0
      %2329 = vmatprep.subr.bf16.mxu0 0
      %2330 = vmatpush1.bf16.msra.mxu0 0
      %2331 = vmatprep.subr.bf16.mxu0 0
      %2332 = vmatpush1.bf16.msra.mxu0 0
      %2333 = vmatprep.subr.bf16.mxu0 0
      %2334 = vmatpush1.bf16.msra.mxu0 0
      %2335 = vmatprep.subr.bf16.mxu0 0
      %2336 = vmatpush1.bf16.msra.mxu0 0
      %2337 = vmatprep.mubr.bf16.mxu0 0
      %2338 = vmatmul.mubr.bf16.gmra.mrb[0].mxu0 %v2300
      %v2339 = vpop.f32.mrb[0].mxu0
      %v2340 = vadd.f32 0.0, %v2339
      %v2341 = vpop.f32.mrb[0].mxu0
      %v2342 = vpop.f32.mrb[0].mxu0
      %v2343 = vpop.f32.mrb[0].mxu0
      %2344 = vdwg.mxu0
      %2345 = vrot.lane.b32.xlu0 %v2170, 64
      %v2346 = vpop.permute.xlu0 %2345
      %v2348 = vsel %vm833, %v2296, 0
      %v2351 = vsel %vm972, %v2346, 0
      %2353 = vmatprep.subr.bf16.mxu0 0
      %2354 = vmatpush1.bf16.msra.mxu0 %v2351
      %2355 = vmatprep.subr.bf16.mxu0 0
      %2356 = vmatpush1.bf16.msra.mxu0 0
      %2357 = vmatprep.subr.bf16.mxu0 0
      %2358 = vmatpush1.bf16.msra.mxu0 0
      %2359 = vmatprep.subr.bf16.mxu0 0
      %2360 = vmatpush1.bf16.msra.mxu0 0
      %2361 = vmatprep.subr.bf16.mxu0 0
      %2362 = vmatpush1.bf16.msra.mxu0 0
      %2363 = vmatprep.subr.bf16.mxu0 0
      %2364 = vmatpush1.bf16.msra.mxu0 0
      %2365 = vmatprep.subr.bf16.mxu0 0
      %2366 = vmatpush1.bf16.msra.mxu0 0
      %2367 = vmatprep.subr.bf16.mxu0 0
      %2368 = vmatpush1.bf16.msra.mxu0 0
      %2369 = vmatprep.subr.bf16.mxu0 0
      %2370 = vmatpush1.bf16.msra.mxu0 0
      %2371 = vmatprep.subr.bf16.mxu0 0
      %2372 = vmatpush1.bf16.msra.mxu0 0
      %2373 = vmatprep.subr.bf16.mxu0 0
      %2374 = vmatpush1.bf16.msra.mxu0 0
      %2375 = vmatprep.subr.bf16.mxu0 0
      %2376 = vmatpush1.bf16.msra.mxu0 0
      %2377 = vmatprep.subr.bf16.mxu0 0
      %2378 = vmatpush1.bf16.msra.mxu0 0
      %2379 = vmatprep.subr.bf16.mxu0 0
      %2380 = vmatpush1.bf16.msra.mxu0 0
      %2381 = vmatprep.subr.bf16.mxu0 0
      %2382 = vmatpush1.bf16.msra.mxu0 0
      %2383 = vmatprep.subr.bf16.mxu0 0
      %2384 = vmatpush1.bf16.msra.mxu0 0
      %2385 = vmatprep.mubr.bf16.mxu0 0
      %2386 = vmatmul.mubr.bf16.gmra.mrb[0].mxu0 %v2348
      %v2387 = vpop.f32.mrb[0].mxu0
      %v2388 = vadd.f32 0.0, %v2387
      %v2389 = vpop.f32.mrb[0].mxu0
      %v2390 = vpop.f32.mrb[0].mxu0
      %v2391 = vpop.f32.mrb[0].mxu0
      %2392 = vdwg.mxu0
      %2393 = vrot.lane.b32.xlu0 %v2169, 120
      %v2394 = vpop.permute.xlu0 %2393
      %2395 = vrot.lane.b32.xlu0 %v2169, 88
      %v2396 = vpop.permute.xlu0 %2395
      %v2398 = vsel %vm833, %v2394, 0
      %v2401 = vsel %vm833, %v2396, 0
      %2403 = vmatprep.subr.bf16.mxu0 0
      %2404 = vmatpush1.bf16.xpose.msra.mxu0 %v2401
      %2405 = vmatprep.subr.bf16.mxu0 0
      %2406 = vmatpush1.bf16.xpose.msra.mxu0 0
      %2407 = vmatprep.subr.bf16.mxu0 0
      %2408 = vmatpush1.bf16.xpose.msra.mxu0 0
      %2409 = vmatprep.subr.bf16.mxu0 0
      %2410 = vmatpush1.bf16.xpose.msra.mxu0 0
      %2411 = vmatprep.subr.bf16.mxu0 0
      %2412 = vmatpush1.bf16.xpose.msra.mxu0 0
      %2413 = vmatprep.subr.bf16.mxu0 0
      %2414 = vmatpush1.bf16.xpose.msra.mxu0 0
      %2415 = vmatprep.subr.bf16.mxu0 0
      %2416 = vmatpush1.bf16.xpose.msra.mxu0 0
      %2417 = vmatprep.subr.bf16.mxu0 0
      %2418 = vmatpush1.bf16.xpose.msra.mxu0 0
      %2419 = vmatprep.subr.bf16.mxu0 0
      %2420 = vmatpush1.bf16.xpose.msra.mxu0 0
      %2421 = vmatprep.subr.bf16.mxu0 0
      %2422 = vmatpush1.bf16.xpose.msra.mxu0 0
      %2423 = vmatprep.subr.bf16.mxu0 0
      %2424 = vmatpush1.bf16.xpose.msra.mxu0 0
      %2425 = vmatprep.subr.bf16.mxu0 0
      %2426 = vmatpush1.bf16.xpose.msra.mxu0 0
      %2427 = vmatprep.subr.bf16.mxu0 0
      %2428 = vmatpush1.bf16.xpose.msra.mxu0 0
      %2429 = vmatprep.subr.bf16.mxu0 0
      %2430 = vmatpush1.bf16.xpose.msra.mxu0 0
      %2431 = vmatprep.subr.bf16.mxu0 0
      %2432 = vmatpush1.bf16.xpose.msra.mxu0 0
      %2433 = vmatprep.subr.bf16.mxu0 0
      %2434 = vmatpush1.bf16.xpose.msra.mxu0 0
      %2435 = vmatprep.mubr.bf16.mxu0 0
      %2436 = vmatmul.mubr.bf16.gmra.mrb[0].mxu0 %v2398
      %v2437 = vpop.f32.mrb[0].mxu0
      %v2438 = vadd.f32 0.0, %v2437
      %v2439 = vpop.f32.mrb[0].mxu0
      %v2440 = vpop.f32.mrb[0].mxu0
      %v2441 = vpop.f32.mrb[0].mxu0
      %2442 = vdwg.mxu0
      %2443 = vrot.lane.b32.xlu0 %v2170, 120
      %v2444 = vpop.permute.xlu0 %2443
      %2445 = vrot.lane.b32.xlu0 %v2170, 88
      %v2446 = vpop.permute.xlu0 %2445
      %v2448 = vsel %vm833, %v2444, 0
      %v2451 = vsel %vm833, %v2446, 0
      %2453 = vmatprep.subr.bf16.mxu0 0
      %2454 = vmatpush1.bf16.xpose.msra.mxu0 %v2451
      %2455 = vmatprep.subr.bf16.mxu0 0
      %2456 = vmatpush1.bf16.xpose.msra.mxu0 0
      %2457 = vmatprep.subr.bf16.mxu0 0
      %2458 = vmatpush1.bf16.xpose.msra.mxu0 0
      %2459 = vmatprep.subr.bf16.mxu0 0
      %2460 = vmatpush1.bf16.xpose.msra.mxu0 0
      %2461 = vmatprep.subr.bf16.mxu0 0
      %2462 = vmatpush1.bf16.xpose.msra.mxu0 0
      %2463 = vmatprep.subr.bf16.mxu0 0
      %2464 = vmatpush1.bf16.xpose.msra.mxu0 0
      %2465 = vmatprep.subr.bf16.mxu0 0
      %2466 = vmatpush1.bf16.xpose.msra.mxu0 0
      %2467 = vmatprep.subr.bf16.mxu0 0
      %2468 = vmatpush1.bf16.xpose.msra.mxu0 0
      %2469 = vmatprep.subr.bf16.mxu0 0
      %2470 = vmatpush1.bf16.xpose.msra.mxu0 0
      %2471 = vmatprep.subr.bf16.mxu0 0
      %2472 = vmatpush1.bf16.xpose.msra.mxu0 0
      %2473 = vmatprep.subr.bf16.mxu0 0
      %2474 = vmatpush1.bf16.xpose.msra.mxu0 0
      %2475 = vmatprep.subr.bf16.mxu0 0
      %2476 = vmatpush1.bf16.xpose.msra.mxu0 0
      %2477 = vmatprep.subr.bf16.mxu0 0
      %2478 = vmatpush1.bf16.xpose.msra.mxu0 0
      %2479 = vmatprep.subr.bf16.mxu0 0
      %2480 = vmatpush1.bf16.xpose.msra.mxu0 0
      %2481 = vmatprep.subr.bf16.mxu0 0
      %2482 = vmatpush1.bf16.xpose.msra.mxu0 0
      %2483 = vmatprep.subr.bf16.mxu0 0
      %2484 = vmatpush1.bf16.xpose.msra.mxu0 0
      %2485 = vmatprep.mubr.bf16.mxu0 0
      %2486 = vmatmul.mubr.bf16.gmra.mrb[0].mxu0 %v2448
      %v2487 = vpop.f32.mrb[0].mxu0
      %v2488 = vadd.f32 0.0, %v2487
      %v2489 = vpop.f32.mrb[0].mxu0
      %v2490 = vpop.f32.mrb[0].mxu0
      %v2491 = vpop.f32.mrb[0].mxu0
      %2492 = vdwg.mxu0
      %v2493 = vmul.f32 %v2438, 0.35355338
      %v2494 = vmul.f32 %v2488, 0.35355338
      %v2495 = vadd.f32 %v2493, %v934
      %v2496 = vadd.f32 %v2494, %v938
      %v2497 = vsel %vm833, %v2495, -inf
      %2498 = vmax.xlane.f32.xlu0 %v2497
      %v2499 = vpop.xlane.xlu0 %2498
      %v2500 = vsel %vm833, %v2496, -inf
      %2501 = vmax.xlane.f32.xlu0 %v2500
      %v2502 = vpop.xlane.xlu0 %2501
      %v2503 = vsub.f32 %v2495, %v2499
      %v2504 = vsub.f32 %v2496, %v2502
      %v2505 = vmul.f32 %v2503, 1.442695
      %v2506 = vpow.pop %v2505
      %v2507 = vmul.f32 %v2504, 1.442695
      %v2508 = vpow.pop %v2507
      %v2509 = vsel %vm833, %v2506, 0.0
      %2510 = vadd.xlane.f32.xlu0 %v2509
      %v2511 = vpop.xlane.xlu0 %2510
      %v2512 = vsel %vm833, %v2508, 0.0
      %2513 = vadd.xlane.f32.xlu0 %v2512
      %v2514 = vpop.xlane.xlu0 %2513
      %v2515 = vrcp.pop %v2511
      %v2516 = vmul.f32 %v2506, %v2515
      %v2517 = vrcp.pop %v2514
      %v2518 = vmul.f32 %v2508, %v2517
      %v2519 = vpack.c.bf16 %v2516, %v2516
      %v2520 = vpack.c.bf16 %v2518, %v2518
      %2521 = vrot.lane.b32.xlu0 %v2169, 56
      %v2522 = vpop.permute.xlu0 %2521
      %v2524 = vsel %vm833, %v2519, 0
      %v2527 = vsel %vm972, %v2522, 0
      %2529 = vmatprep.subr.bf16.mxu0 0
      %2530 = vmatpush1.bf16.msra.mxu0 %v2527
      %2531 = vmatprep.subr.bf16.mxu0 0
      %2532 = vmatpush1.bf16.msra.mxu0 0
      %2533 = vmatprep.subr.bf16.mxu0 0
      %2534 = vmatpush1.bf16.msra.mxu0 0
      %2535 = vmatprep.subr.bf16.mxu0 0
      %2536 = vmatpush1.bf16.msra.mxu0 0
      %2537 = vmatprep.subr.bf16.mxu0 0
      %2538 = vmatpush1.bf16.msra.mxu0 0
      %2539 = vmatprep.subr.bf16.mxu0 0
      %2540 = vmatpush1.bf16.msra.mxu0 0
      %2541 = vmatprep.subr.bf16.mxu0 0
      %2542 = vmatpush1.bf16.msra.mxu0 0
      %2543 = vmatprep.subr.bf16.mxu0 0
      %2544 = vmatpush1.bf16.msra.mxu0 0
      %2545 = vmatprep.subr.bf16.mxu0 0
      %2546 = vmatpush1.bf16.msra.mxu0 0
      %2547 = vmatprep.subr.bf16.mxu0 0
      %2548 = vmatpush1.bf16.msra.mxu0 0
      %2549 = vmatprep.subr.bf16.mxu0 0
      %2550 = vmatpush1.bf16.msra.mxu0 0
      %2551 = vmatprep.subr.bf16.mxu0 0
      %2552 = vmatpush1.bf16.msra.mxu0 0
      %2553 = vmatprep.subr.bf16.mxu0 0
      %2554 = vmatpush1.bf16.msra.mxu0 0
      %2555 = vmatprep.subr.bf16.mxu0 0
      %2556 = vmatpush1.bf16.msra.mxu0 0
      %2557 = vmatprep.subr.bf16.mxu0 0
      %2558 = vmatpush1.bf16.msra.mxu0 0
      %2559 = vmatprep.subr.bf16.mxu0 0
      %2560 = vmatpush1.bf16.msra.mxu0 0
      %2561 = vmatprep.mubr.bf16.mxu0 0
      %2562 = vmatmul.mubr.bf16.gmra.mrb[0].mxu0 %v2524
      %v2563 = vpop.f32.mrb[0].mxu0
      %v2564 = vadd.f32 0.0, %v2563
      %v2565 = vpop.f32.mrb[0].mxu0
      %v2566 = vpop.f32.mrb[0].mxu0
      %v2567 = vpop.f32.mrb[0].mxu0
      %2568 = vdwg.mxu0
      %2569 = vrot.lane.b32.xlu0 %v2170, 56
      %v2570 = vpop.permute.xlu0 %2569
      %v2572 = vsel %vm833, %v2520, 0
      %v2575 = vsel %vm972, %v2570, 0
      %2577 = vmatprep.subr.bf16.mxu0 0
      %2578 = vmatpush1.bf16.msra.mxu0 %v2575
      %2579 = vmatprep.subr.bf16.mxu0 0
      %2580 = vmatpush1.bf16.msra.mxu0 0
      %2581 = vmatprep.subr.bf16.mxu0 0
      %2582 = vmatpush1.bf16.msra.mxu0 0
      %2583 = vmatprep.subr.bf16.mxu0 0
      %2584 = vmatpush1.bf16.msra.mxu0 0
      %2585 = vmatprep.subr.bf16.mxu0 0
      %2586 = vmatpush1.bf16.msra.mxu0 0
      %2587 = vmatprep.subr.bf16.mxu0 0
      %2588 = vmatpush1.bf16.msra.mxu0 0
      %2589 = vmatprep.subr.bf16.mxu0 0
      %2590 = vmatpush1.bf16.msra.mxu0 0
      %2591 = vmatprep.subr.bf16.mxu0 0
      %2592 = vmatpush1.bf16.msra.mxu0 0
      %2593 = vmatprep.subr.bf16.mxu0 0
      %2594 = vmatpush1.bf16.msra.mxu0 0
      %2595 = vmatprep.subr.bf16.mxu0 0
      %2596 = vmatpush1.bf16.msra.mxu0 0
      %2597 = vmatprep.subr.bf16.mxu0 0
      %2598 = vmatpush1.bf16.msra.mxu0 0
      %2599 = vmatprep.subr.bf16.mxu0 0
      %2600 = vmatpush1.bf16.msra.mxu0 0
      %2601 = vmatprep.subr.bf16.mxu0 0
      %2602 = vmatpush1.bf16.msra.mxu0 0
      %2603 = vmatprep.subr.bf16.mxu0 0
      %2604 = vmatpush1.bf16.msra.mxu0 0
      %2605 = vmatprep.subr.bf16.mxu0 0
      %2606 = vmatpush1.bf16.msra.mxu0 0
      %2607 = vmatprep.subr.bf16.mxu0 0
      %2608 = vmatpush1.bf16.msra.mxu0 0
      %2609 = vmatprep.mubr.bf16.mxu0 0
      %2610 = vmatmul.mubr.bf16.gmra.mrb[0].mxu0 %v2572
      %v2611 = vpop.f32.mrb[0].mxu0
      %v2612 = vadd.f32 0.0, %v2611
      %v2613 = vpop.f32.mrb[0].mxu0
      %v2614 = vpop.f32.mrb[0].mxu0
      %v2615 = vpop.f32.mrb[0].mxu0
      %2616 = vdwg.mxu0
      %2617 = vrot.lane.b32.xlu0 %v2169, 112
      %v2618 = vpop.permute.xlu0 %2617
      %2619 = vrot.lane.b32.xlu0 %v2169, 80
      %v2620 = vpop.permute.xlu0 %2619
      %v2622 = vsel %vm833, %v2618, 0
      %v2625 = vsel %vm833, %v2620, 0
      %2627 = vmatprep.subr.bf16.mxu0 0
      %2628 = vmatpush1.bf16.xpose.msra.mxu0 %v2625
      %2629 = vmatprep.subr.bf16.mxu0 0
      %2630 = vmatpush1.bf16.xpose.msra.mxu0 0
      %2631 = vmatprep.subr.bf16.mxu0 0
      %2632 = vmatpush1.bf16.xpose.msra.mxu0 0
      %2633 = vmatprep.subr.bf16.mxu0 0
      %2634 = vmatpush1.bf16.xpose.msra.mxu0 0
      %2635 = vmatprep.subr.bf16.mxu0 0
      %2636 = vmatpush1.bf16.xpose.msra.mxu0 0
      %2637 = vmatprep.subr.bf16.mxu0 0
      %2638 = vmatpush1.bf16.xpose.msra.mxu0 0
      %2639 = vmatprep.subr.bf16.mxu0 0
      %2640 = vmatpush1.bf16.xpose.msra.mxu0 0
      %2641 = vmatprep.subr.bf16.mxu0 0
      %2642 = vmatpush1.bf16.xpose.msra.mxu0 0
      %2643 = vmatprep.subr.bf16.mxu0 0
      %2644 = vmatpush1.bf16.xpose.msra.mxu0 0
      %2645 = vmatprep.subr.bf16.mxu0 0
      %2646 = vmatpush1.bf16.xpose.msra.mxu0 0
      %2647 = vmatprep.subr.bf16.mxu0 0
      %2648 = vmatpush1.bf16.xpose.msra.mxu0 0
      %2649 = vmatprep.subr.bf16.mxu0 0
      %2650 = vmatpush1.bf16.xpose.msra.mxu0 0
      %2651 = vmatprep.subr.bf16.mxu0 0
      %2652 = vmatpush1.bf16.xpose.msra.mxu0 0
      %2653 = vmatprep.subr.bf16.mxu0 0
      %2654 = vmatpush1.bf16.xpose.msra.mxu0 0
      %2655 = vmatprep.subr.bf16.mxu0 0
      %2656 = vmatpush1.bf16.xpose.msra.mxu0 0
      %2657 = vmatprep.subr.bf16.mxu0 0
      %2658 = vmatpush1.bf16.xpose.msra.mxu0 0
      %2659 = vmatprep.mubr.bf16.mxu0 0
      %2660 = vmatmul.mubr.bf16.gmra.mrb[0].mxu0 %v2622
      %v2661 = vpop.f32.mrb[0].mxu0
      %v2662 = vadd.f32 0.0, %v2661
      %v2663 = vpop.f32.mrb[0].mxu0
      %v2664 = vpop.f32.mrb[0].mxu0
      %v2665 = vpop.f32.mrb[0].mxu0
      %2666 = vdwg.mxu0
      %2667 = vrot.lane.b32.xlu0 %v2170, 112
      %v2668 = vpop.permute.xlu0 %2667
      %2669 = vrot.lane.b32.xlu0 %v2170, 80
      %v2670 = vpop.permute.xlu0 %2669
      %v2672 = vsel %vm833, %v2668, 0
      %v2675 = vsel %vm833, %v2670, 0
      %2677 = vmatprep.subr.bf16.mxu0 0
      %2678 = vmatpush1.bf16.xpose.msra.mxu0 %v2675
      %2679 = vmatprep.subr.bf16.mxu0 0
      %2680 = vmatpush1.bf16.xpose.msra.mxu0 0
      %2681 = vmatprep.subr.bf16.mxu0 0
      %2682 = vmatpush1.bf16.xpose.msra.mxu0 0
      %2683 = vmatprep.subr.bf16.mxu0 0
      %2684 = vmatpush1.bf16.xpose.msra.mxu0 0
      %2685 = vmatprep.subr.bf16.mxu0 0
      %2686 = vmatpush1.bf16.xpose.msra.mxu0 0
      %2687 = vmatprep.subr.bf16.mxu0 0
      %2688 = vmatpush1.bf16.xpose.msra.mxu0 0
      %2689 = vmatprep.subr.bf16.mxu0 0
      %2690 = vmatpush1.bf16.xpose.msra.mxu0 0
      %2691 = vmatprep.subr.bf16.mxu0 0
      %2692 = vmatpush1.bf16.xpose.msra.mxu0 0
      %2693 = vmatprep.subr.bf16.mxu0 0
      %2694 = vmatpush1.bf16.xpose.msra.mxu0 0
      %2695 = vmatprep.subr.bf16.mxu0 0
      %2696 = vmatpush1.bf16.xpose.msra.mxu0 0
      %2697 = vmatprep.subr.bf16.mxu0 0
      %2698 = vmatpush1.bf16.xpose.msra.mxu0 0
      %2699 = vmatprep.subr.bf16.mxu0 0
      %2700 = vmatpush1.bf16.xpose.msra.mxu0 0
      %2701 = vmatprep.subr.bf16.mxu0 0
      %2702 = vmatpush1.bf16.xpose.msra.mxu0 0
      %2703 = vmatprep.subr.bf16.mxu0 0
      %2704 = vmatpush1.bf16.xpose.msra.mxu0 0
      %2705 = vmatprep.subr.bf16.mxu0 0
      %2706 = vmatpush1.bf16.xpose.msra.mxu0 0
      %2707 = vmatprep.subr.bf16.mxu0 0
      %2708 = vmatpush1.bf16.xpose.msra.mxu0 0
      %2709 = vmatprep.mubr.bf16.mxu0 0
      %2710 = vmatmul.mubr.bf16.gmra.mrb[0].mxu0 %v2672
      %v2711 = vpop.f32.mrb[0].mxu0
      %v2712 = vadd.f32 0.0, %v2711
      %v2713 = vpop.f32.mrb[0].mxu0
      %v2714 = vpop.f32.mrb[0].mxu0
      %v2715 = vpop.f32.mrb[0].mxu0
      %2716 = vdwg.mxu0
      %v2717 = vmul.f32 %v2662, 0.35355338
      %v2718 = vmul.f32 %v2712, 0.35355338
      %v2719 = vadd.f32 %v2717, %v934
      %v2720 = vadd.f32 %v2718, %v938
      %v2721 = vsel %vm833, %v2719, -inf
      %2722 = vmax.xlane.f32.xlu0 %v2721
      %v2723 = vpop.xlane.xlu0 %2722
      %v2724 = vsel %vm833, %v2720, -inf
      %2725 = vmax.xlane.f32.xlu0 %v2724
      %v2726 = vpop.xlane.xlu0 %2725
      %v2727 = vsub.f32 %v2719, %v2723
      %v2728 = vsub.f32 %v2720, %v2726
      %v2729 = vmul.f32 %v2727, 1.442695
      %v2730 = vpow.pop %v2729
      %v2731 = vmul.f32 %v2728, 1.442695
      %v2732 = vpow.pop %v2731
      %v2733 = vsel %vm833, %v2730, 0.0
      %2734 = vadd.xlane.f32.xlu0 %v2733
      %v2735 = vpop.xlane.xlu0 %2734
      %v2736 = vsel %vm833, %v2732, 0.0
      %2737 = vadd.xlane.f32.xlu0 %v2736
      %v2738 = vpop.xlane.xlu0 %2737
      %v2739 = vrcp.pop %v2735
      %v2740 = vmul.f32 %v2730, %v2739
      %v2741 = vrcp.pop %v2738
      %v2742 = vmul.f32 %v2732, %v2741
      %v2743 = vpack.c.bf16 %v2740, %v2740
      %v2744 = vpack.c.bf16 %v2742, %v2742
      %2745 = vrot.lane.b32.xlu0 %v2169, 48
      %v2746 = vpop.permute.xlu0 %2745
      %v2748 = vsel %vm833, %v2743, 0
      %v2751 = vsel %vm972, %v2746, 0
      %2753 = vmatprep.subr.bf16.mxu0 0
      %2754 = vmatpush1.bf16.msra.mxu0 %v2751
      %2755 = vmatprep.subr.bf16.mxu0 0
      %2756 = vmatpush1.bf16.msra.mxu0 0
      %2757 = vmatprep.subr.bf16.mxu0 0
      %2758 = vmatpush1.bf16.msra.mxu0 0
      %2759 = vmatprep.subr.bf16.mxu0 0
      %2760 = vmatpush1.bf16.msra.mxu0 0
      %2761 = vmatprep.subr.bf16.mxu0 0
      %2762 = vmatpush1.bf16.msra.mxu0 0
      %2763 = vmatprep.subr.bf16.mxu0 0
      %2764 = vmatpush1.bf16.msra.mxu0 0
      %2765 = vmatprep.subr.bf16.mxu0 0
      %2766 = vmatpush1.bf16.msra.mxu0 0
      %2767 = vmatprep.subr.bf16.mxu0 0
      %2768 = vmatpush1.bf16.msra.mxu0 0
      %2769 = vmatprep.subr.bf16.mxu0 0
      %2770 = vmatpush1.bf16.msra.mxu0 0
      %2771 = vmatprep.subr.bf16.mxu0 0
      %2772 = vmatpush1.bf16.msra.mxu0 0
      %2773 = vmatprep.subr.bf16.mxu0 0
      %2774 = vmatpush1.bf16.msra.mxu0 0
      %2775 = vmatprep.subr.bf16.mxu0 0
      %2776 = vmatpush1.bf16.msra.mxu0 0
      %2777 = vmatprep.subr.bf16.mxu0 0
      %2778 = vmatpush1.bf16.msra.mxu0 0
      %2779 = vmatprep.subr.bf16.mxu0 0
      %2780 = vmatpush1.bf16.msra.mxu0 0
      %2781 = vmatprep.subr.bf16.mxu0 0
      %2782 = vmatpush1.bf16.msra.mxu0 0
      %2783 = vmatprep.subr.bf16.mxu0 0
      %2784 = vmatpush1.bf16.msra.mxu0 0
      %2785 = vmatprep.mubr.bf16.mxu0 0
      %2786 = vmatmul.mubr.bf16.gmra.mrb[0].mxu0 %v2748
      %v2787 = vpop.f32.mrb[0].mxu0
      %v2788 = vadd.f32 0.0, %v2787
      %v2789 = vpop.f32.mrb[0].mxu0
      %v2790 = vpop.f32.mrb[0].mxu0
      %v2791 = vpop.f32.mrb[0].mxu0
      %2792 = vdwg.mxu0
      %2793 = vrot.lane.b32.xlu0 %v2170, 48
      %v2794 = vpop.permute.xlu0 %2793
      %v2796 = vsel %vm833, %v2744, 0
      %v2799 = vsel %vm972, %v2794, 0
      %2801 = vmatprep.subr.bf16.mxu0 0
      %2802 = vmatpush1.bf16.msra.mxu0 %v2799
      %2803 = vmatprep.subr.bf16.mxu0 0
      %2804 = vmatpush1.bf16.msra.mxu0 0
      %2805 = vmatprep.subr.bf16.mxu0 0
      %2806 = vmatpush1.bf16.msra.mxu0 0
      %2807 = vmatprep.subr.bf16.mxu0 0
      %2808 = vmatpush1.bf16.msra.mxu0 0
      %2809 = vmatprep.subr.bf16.mxu0 0
      %2810 = vmatpush1.bf16.msra.mxu0 0
      %2811 = vmatprep.subr.bf16.mxu0 0
      %2812 = vmatpush1.bf16.msra.mxu0 0
      %2813 = vmatprep.subr.bf16.mxu0 0
      %2814 = vmatpush1.bf16.msra.mxu0 0
      %2815 = vmatprep.subr.bf16.mxu0 0
      %2816 = vmatpush1.bf16.msra.mxu0 0
      %2817 = vmatprep.subr.bf16.mxu0 0
      %2818 = vmatpush1.bf16.msra.mxu0 0
      %2819 = vmatprep.subr.bf16.mxu0 0
      %2820 = vmatpush1.bf16.msra.mxu0 0
      %2821 = vmatprep.subr.bf16.mxu0 0
      %2822 = vmatpush1.bf16.msra.mxu0 0
      %2823 = vmatprep.subr.bf16.mxu0 0
      %2824 = vmatpush1.bf16.msra.mxu0 0
      %2825 = vmatprep.subr.bf16.mxu0 0
      %2826 = vmatpush1.bf16.msra.mxu0 0
      %2827 = vmatprep.subr.bf16.mxu0 0
      %2828 = vmatpush1.bf16.msra.mxu0 0
      %2829 = vmatprep.subr.bf16.mxu0 0
      %2830 = vmatpush1.bf16.msra.mxu0 0
      %2831 = vmatprep.subr.bf16.mxu0 0
      %2832 = vmatpush1.bf16.msra.mxu0 0
      %2833 = vmatprep.mubr.bf16.mxu0 0
      %2834 = vmatmul.mubr.bf16.gmra.mrb[0].mxu0 %v2796
      %v2835 = vpop.f32.mrb[0].mxu0
      %v2836 = vadd.f32 0.0, %v2835
      %v2837 = vpop.f32.mrb[0].mxu0
      %v2838 = vpop.f32.mrb[0].mxu0
      %v2839 = vpop.f32.mrb[0].mxu0
      %2840 = vdwg.mxu0
      %2841 = vrot.lane.b32.xlu0 %v2169, 104
      %v2842 = vpop.permute.xlu0 %2841
      %2843 = vrot.lane.b32.xlu0 %v2169, 72
      %v2844 = vpop.permute.xlu0 %2843
      %v2846 = vsel %vm833, %v2842, 0
      %v2849 = vsel %vm833, %v2844, 0
      %2851 = vmatprep.subr.bf16.mxu0 0
      %2852 = vmatpush1.bf16.xpose.msra.mxu0 %v2849
      %2853 = vmatprep.subr.bf16.mxu0 0
      %2854 = vmatpush1.bf16.xpose.msra.mxu0 0
      %2855 = vmatprep.subr.bf16.mxu0 0
      %2856 = vmatpush1.bf16.xpose.msra.mxu0 0
      %2857 = vmatprep.subr.bf16.mxu0 0
      %2858 = vmatpush1.bf16.xpose.msra.mxu0 0
      %2859 = vmatprep.subr.bf16.mxu0 0
      %2860 = vmatpush1.bf16.xpose.msra.mxu0 0
      %2861 = vmatprep.subr.bf16.mxu0 0
      %2862 = vmatpush1.bf16.xpose.msra.mxu0 0
      %2863 = vmatprep.subr.bf16.mxu0 0
      %2864 = vmatpush1.bf16.xpose.msra.mxu0 0
      %2865 = vmatprep.subr.bf16.mxu0 0
      %2866 = vmatpush1.bf16.xpose.msra.mxu0 0
      %2867 = vmatprep.subr.bf16.mxu0 0
      %2868 = vmatpush1.bf16.xpose.msra.mxu0 0
      %2869 = vmatprep.subr.bf16.mxu0 0
      %2870 = vmatpush1.bf16.xpose.msra.mxu0 0
      %2871 = vmatprep.subr.bf16.mxu0 0
      %2872 = vmatpush1.bf16.xpose.msra.mxu0 0
      %2873 = vmatprep.subr.bf16.mxu0 0
      %2874 = vmatpush1.bf16.xpose.msra.mxu0 0
      %2875 = vmatprep.subr.bf16.mxu0 0
      %2876 = vmatpush1.bf16.xpose.msra.mxu0 0
      %2877 = vmatprep.subr.bf16.mxu0 0
      %2878 = vmatpush1.bf16.xpose.msra.mxu0 0
      %2879 = vmatprep.subr.bf16.mxu0 0
      %2880 = vmatpush1.bf16.xpose.msra.mxu0 0
      %2881 = vmatprep.subr.bf16.mxu0 0
      %2882 = vmatpush1.bf16.xpose.msra.mxu0 0
      %2883 = vmatprep.mubr.bf16.mxu0 0
      %2884 = vmatmul.mubr.bf16.gmra.mrb[0].mxu0 %v2846
      %v2885 = vpop.f32.mrb[0].mxu0
      %v2886 = vadd.f32 0.0, %v2885
      %v2887 = vpop.f32.mrb[0].mxu0
      %v2888 = vpop.f32.mrb[0].mxu0
      %v2889 = vpop.f32.mrb[0].mxu0
      %2890 = vdwg.mxu0
      %2891 = vrot.lane.b32.xlu0 %v2170, 104
      %v2892 = vpop.permute.xlu0 %2891
      %2893 = vrot.lane.b32.xlu0 %v2170, 72
      %v2894 = vpop.permute.xlu0 %2893
      %v2896 = vsel %vm833, %v2892, 0
      %v2899 = vsel %vm833, %v2894, 0
      %2901 = vmatprep.subr.bf16.mxu0 0
      %2902 = vmatpush1.bf16.xpose.msra.mxu0 %v2899
      %2903 = vmatprep.subr.bf16.mxu0 0
      %2904 = vmatpush1.bf16.xpose.msra.mxu0 0
      %2905 = vmatprep.subr.bf16.mxu0 0
      %2906 = vmatpush1.bf16.xpose.msra.mxu0 0
      %2907 = vmatprep.subr.bf16.mxu0 0
      %2908 = vmatpush1.bf16.xpose.msra.mxu0 0
      %2909 = vmatprep.subr.bf16.mxu0 0
      %2910 = vmatpush1.bf16.xpose.msra.mxu0 0
      %2911 = vmatprep.subr.bf16.mxu0 0
      %2912 = vmatpush1.bf16.xpose.msra.mxu0 0
      %2913 = vmatprep.subr.bf16.mxu0 0
      %2914 = vmatpush1.bf16.xpose.msra.mxu0 0
      %2915 = vmatprep.subr.bf16.mxu0 0
      %2916 = vmatpush1.bf16.xpose.msra.mxu0 0
      %2917 = vmatprep.subr.bf16.mxu0 0
      %2918 = vmatpush1.bf16.xpose.msra.mxu0 0
      %2919 = vmatprep.subr.bf16.mxu0 0
      %2920 = vmatpush1.bf16.xpose.msra.mxu0 0
      %2921 = vmatprep.subr.bf16.mxu0 0
      %2922 = vmatpush1.bf16.xpose.msra.mxu0 0
      %2923 = vmatprep.subr.bf16.mxu0 0
      %2924 = vmatpush1.bf16.xpose.msra.mxu0 0
      %2925 = vmatprep.subr.bf16.mxu0 0
      %2926 = vmatpush1.bf16.xpose.msra.mxu0 0
      %2927 = vmatprep.subr.bf16.mxu0 0
      %2928 = vmatpush1.bf16.xpose.msra.mxu0 0
      %2929 = vmatprep.subr.bf16.mxu0 0
      %2930 = vmatpush1.bf16.xpose.msra.mxu0 0
      %2931 = vmatprep.subr.bf16.mxu0 0
      %2932 = vmatpush1.bf16.xpose.msra.mxu0 0
      %2933 = vmatprep.mubr.bf16.mxu0 0
      %2934 = vmatmul.mubr.bf16.gmra.mrb[0].mxu0 %v2896
      %v2935 = vpop.f32.mrb[0].mxu0
      %v2936 = vadd.f32 0.0, %v2935
      %v2937 = vpop.f32.mrb[0].mxu0
      %v2938 = vpop.f32.mrb[0].mxu0
      %v2939 = vpop.f32.mrb[0].mxu0
      %2940 = vdwg.mxu0
      %v2941 = vmul.f32 %v2886, 0.35355338
      %v2942 = vmul.f32 %v2936, 0.35355338
      %v2943 = vadd.f32 %v2941, %v934
      %v2944 = vadd.f32 %v2942, %v938
      %v2945 = vsel %vm833, %v2943, -inf
      %2946 = vmax.xlane.f32.xlu0 %v2945
      %v2947 = vpop.xlane.xlu0 %2946
      %v2948 = vsel %vm833, %v2944, -inf
      %2949 = vmax.xlane.f32.xlu0 %v2948
      %v2950 = vpop.xlane.xlu0 %2949
      %v2951 = vsub.f32 %v2943, %v2947
      %v2952 = vsub.f32 %v2944, %v2950
      %v2953 = vmul.f32 %v2951, 1.442695
      %v2954 = vpow.pop %v2953
      %v2955 = vmul.f32 %v2952, 1.442695
      %v2956 = vpow.pop %v2955
      %v2957 = vsel %vm833, %v2954, 0.0
      %2958 = vadd.xlane.f32.xlu0 %v2957
      %v2959 = vpop.xlane.xlu0 %2958
      %v2960 = vsel %vm833, %v2956, 0.0
      %2961 = vadd.xlane.f32.xlu0 %v2960
      %v2962 = vpop.xlane.xlu0 %2961
      %v2963 = vrcp.pop %v2959
      %v2964 = vmul.f32 %v2954, %v2963
      %v2965 = vrcp.pop %v2962
      %v2966 = vmul.f32 %v2956, %v2965
      %v2967 = vpack.c.bf16 %v2964, %v2964
      %v2968 = vpack.c.bf16 %v2966, %v2966
      %2969 = vrot.lane.b32.xlu0 %v2169, 40
      %v2970 = vpop.permute.xlu0 %2969
      %v2972 = vsel %vm833, %v2967, 0
      %v2975 = vsel %vm972, %v2970, 0
      %2977 = vmatprep.subr.bf16.mxu0 0
      %2978 = vmatpush1.bf16.msra.mxu0 %v2975
      %2979 = vmatprep.subr.bf16.mxu0 0
      %2980 = vmatpush1.bf16.msra.mxu0 0
      %2981 = vmatprep.subr.bf16.mxu0 0
      %2982 = vmatpush1.bf16.msra.mxu0 0
      %2983 = vmatprep.subr.bf16.mxu0 0
      %2984 = vmatpush1.bf16.msra.mxu0 0
      %2985 = vmatprep.subr.bf16.mxu0 0
      %2986 = vmatpush1.bf16.msra.mxu0 0
      %2987 = vmatprep.subr.bf16.mxu0 0
      %2988 = vmatpush1.bf16.msra.mxu0 0
      %2989 = vmatprep.subr.bf16.mxu0 0
      %2990 = vmatpush1.bf16.msra.mxu0 0
      %2991 = vmatprep.subr.bf16.mxu0 0
      %2992 = vmatpush1.bf16.msra.mxu0 0
      %2993 = vmatprep.subr.bf16.mxu0 0
      %2994 = vmatpush1.bf16.msra.mxu0 0
      %2995 = vmatprep.subr.bf16.mxu0 0
      %2996 = vmatpush1.bf16.msra.mxu0 0
      %2997 = vmatprep.subr.bf16.mxu0 0
      %2998 = vmatpush1.bf16.msra.mxu0 0
      %2999 = vmatprep.subr.bf16.mxu0 0
      %3000 = vmatpush1.bf16.msra.mxu0 0
      %3001 = vmatprep.subr.bf16.mxu0 0
      %3002 = vmatpush1.bf16.msra.mxu0 0
      %3003 = vmatprep.subr.bf16.mxu0 0
      %3004 = vmatpush1.bf16.msra.mxu0 0
      %3005 = vmatprep.subr.bf16.mxu0 0
      %3006 = vmatpush1.bf16.msra.mxu0 0
      %3007 = vmatprep.subr.bf16.mxu0 0
      %3008 = vmatpush1.bf16.msra.mxu0 0
      %3009 = vmatprep.mubr.bf16.mxu0 0
      %3010 = vmatmul.mubr.bf16.gmra.mrb[0].mxu0 %v2972
      %v3011 = vpop.f32.mrb[0].mxu0
      %v3012 = vadd.f32 0.0, %v3011
      %v3013 = vpop.f32.mrb[0].mxu0
      %v3014 = vpop.f32.mrb[0].mxu0
      %v3015 = vpop.f32.mrb[0].mxu0
      %3016 = vdwg.mxu0
      %3017 = vrot.lane.b32.xlu0 %v2170, 40
      %v3018 = vpop.permute.xlu0 %3017
      %v3020 = vsel %vm833, %v2968, 0
      %v3023 = vsel %vm972, %v3018, 0
      %3025 = vmatprep.subr.bf16.mxu0 0
      %3026 = vmatpush1.bf16.msra.mxu0 %v3023
      %3027 = vmatprep.subr.bf16.mxu0 0
      %3028 = vmatpush1.bf16.msra.mxu0 0
      %3029 = vmatprep.subr.bf16.mxu0 0
      %3030 = vmatpush1.bf16.msra.mxu0 0
      %3031 = vmatprep.subr.bf16.mxu0 0
      %3032 = vmatpush1.bf16.msra.mxu0 0
      %3033 = vmatprep.subr.bf16.mxu0 0
      %3034 = vmatpush1.bf16.msra.mxu0 0
      %3035 = vmatprep.subr.bf16.mxu0 0
      %3036 = vmatpush1.bf16.msra.mxu0 0
      %3037 = vmatprep.subr.bf16.mxu0 0
      %3038 = vmatpush1.bf16.msra.mxu0 0
      %3039 = vmatprep.subr.bf16.mxu0 0
      %3040 = vmatpush1.bf16.msra.mxu0 0
      %3041 = vmatprep.subr.bf16.mxu0 0
      %3042 = vmatpush1.bf16.msra.mxu0 0
      %3043 = vmatprep.subr.bf16.mxu0 0
      %3044 = vmatpush1.bf16.msra.mxu0 0
      %3045 = vmatprep.subr.bf16.mxu0 0
      %3046 = vmatpush1.bf16.msra.mxu0 0
      %3047 = vmatprep.subr.bf16.mxu0 0
      %3048 = vmatpush1.bf16.msra.mxu0 0
      %3049 = vmatprep.subr.bf16.mxu0 0
      %3050 = vmatpush1.bf16.msra.mxu0 0
      %3051 = vmatprep.subr.bf16.mxu0 0
      %3052 = vmatpush1.bf16.msra.mxu0 0
      %3053 = vmatprep.subr.bf16.mxu0 0
      %3054 = vmatpush1.bf16.msra.mxu0 0
      %3055 = vmatprep.subr.bf16.mxu0 0
      %3056 = vmatpush1.bf16.msra.mxu0 0
      %3057 = vmatprep.mubr.bf16.mxu0 0
      %3058 = vmatmul.mubr.bf16.gmra.mrb[0].mxu0 %v3020
      %v3059 = vpop.f32.mrb[0].mxu0
      %v3060 = vadd.f32 0.0, %v3059
      %v3061 = vpop.f32.mrb[0].mxu0
      %v3062 = vpop.f32.mrb[0].mxu0
      %v3063 = vpop.f32.mrb[0].mxu0
      %3064 = vdwg.mxu0
      %3067 = vrot.lane.b32.xlu0 %v2564, 8
      %v3068 = vpop.permute.xlu0 %3067
      %3069 = vrot.lane.b32.xlu0 %v2612, 8
      %v3070 = vpop.permute.xlu0 %3069
      %3075 = vrot.lane.b32.xlu0 %v2788, 16
      %v3076 = vpop.permute.xlu0 %3075
      %3077 = vrot.lane.b32.xlu0 %v2836, 16
      %v3078 = vpop.permute.xlu0 %3077
      %3083 = vrot.lane.b32.xlu0 %v3012, 24
      %v3084 = vpop.permute.xlu0 %3083
      %3085 = vrot.lane.b32.xlu0 %v3060, 24
      %v3086 = vpop.permute.xlu0 %3085
      %v3089 = vsel %vm833, %v2340, %v3068
      %v3090 = vsel %vm833, %v2388, %v3070
      %v3091 = vsel %vm1762, %v3089, %v3076
      %v3092 = vsel %vm1762, %v3090, %v3078
      %v3093 = vsel %vm1765, %v3091, %v3084
      %v3094 = vsel %vm1765, %v3092, %v3086
      %s3095 = scalar_lea.vmem %s6, 16
      %v3096 = vld [vmem:[%s3095] sm:$0xf]
      %v3097 = vld [vmem:[%s3095 + $0x4] sm:$0xf]
      %v3098 = vld [vmem:[%s3095 + $0x8] sm:$0xf]
      %v3099 = vld [vmem:[%s3095 + $0xc] sm:$0xf]
      %v3100 = vpack.c.bf16 %v3094, %v3093
      %s3101 = scalar_lea.vmem %s7, 1
      %v3102 = vld [vmem:[%s3101] sm:$0x1]
      %v3104 = vlaneseq
      %v3105 = vshrl.u32 %v3104, 7
      %v3106 = vsub.s32 0, %v3105
      %v3107 = vrot.slane %v3102, %v3106
      %v3113 = vunpack.c.l.b16 %v3096
      %v3114 = vunpack.c.l.b16 %v3097
      %v3115 = vunpack.c.l.b16 %v3098
      %v3116 = vunpack.c.l.b16 %v3099
      %v3117 = vpack.c.b16 %v3114, %v3113
      %v3118 = vpack.c.b16 %v3116, %v3115
      %v3122 = vsel %vm690, %v3100, 0
      %3124 = vmatprep.subr.bf16.mxu0 0
      %3125 = vmatpush1.bf16.msra.mxu0 %v3117
      %3126 = vmatprep.subr.bf16.mxu0 0
      %3127 = vmatpush1.bf16.msra.mxu0 %v3118
      %3128 = vmatprep.subr.bf16.mxu0 0
      %3129 = vmatpush1.bf16.msra.mxu0 0
      %3130 = vmatprep.subr.bf16.mxu0 0
      %3131 = vmatpush1.bf16.msra.mxu0 0
      %3132 = vmatprep.subr.bf16.mxu0 0
      %3133 = vmatpush1.bf16.msra.mxu0 0
      %3134 = vmatprep.subr.bf16.mxu0 0
      %3135 = vmatpush1.bf16.msra.mxu0 0
      %3136 = vmatprep.subr.bf16.mxu0 0
      %3137 = vmatpush1.bf16.msra.mxu0 0
      %3138 = vmatprep.subr.bf16.mxu0 0
      %3139 = vmatpush1.bf16.msra.mxu0 0
      %3140 = vmatprep.subr.bf16.mxu0 0
      %3141 = vmatpush1.bf16.msra.mxu0 0
      %3142 = vmatprep.subr.bf16.mxu0 0
      %3143 = vmatpush1.bf16.msra.mxu0 0
      %3144 = vmatprep.subr.bf16.mxu0 0
      %3145 = vmatpush1.bf16.msra.mxu0 0
      %3146 = vmatprep.subr.bf16.mxu0 0
      %3147 = vmatpush1.bf16.msra.mxu0 0
      %3148 = vmatprep.subr.bf16.mxu0 0
      %3149 = vmatpush1.bf16.msra.mxu0 0
      %3150 = vmatprep.subr.bf16.mxu0 0
      %3151 = vmatpush1.bf16.msra.mxu0 0
      %3152 = vmatprep.subr.bf16.mxu0 0
      %3153 = vmatpush1.bf16.msra.mxu0 0
      %3154 = vmatprep.subr.bf16.mxu0 0
      %3155 = vmatpush1.bf16.msra.mxu0 0
      %3156 = vmatprep.mubr.bf16.mxu0 0
      %3157 = vmatmul.mubr.bf16.gmra.mrb[0].mxu0 %v3122
      %v3158 = vpop.f32.mrb[0].mxu0
      %v3159 = vadd.f32 %v3107, %v3158
      %v3160 = vpop.f32.mrb[0].mxu0
      %v3161 = vpop.f32.mrb[0].mxu0
      %v3162 = vadd.f32 %v3107, %v3161
      %v3163 = vpop.f32.mrb[0].mxu0
      %3164 = vdwg.mxu0
      %v3165 = vadd.f32 %v3159, %v2097
      %v3166 = vadd.f32 %v3162, %v2098
      %s3167 = scalar_lea.vmem %s8, 1
      %v3168 = vld [vmem:[%s3167] sm:$0x1]
      %s3169 = scalar_lea.vmem %s9, 1
      %v3170 = vld [vmem:[%s3169] sm:$0x1]
      %v3171 = vsel %vm690, %v3165, 0.0
      %3172 = vadd.xlane.f32.xlu0 %v3171
      %v3173 = vpop.xlane.xlu0 %3172
      %v3174 = vsel %vm690, %v3166, 0.0
      %3175 = vadd.xlane.f32.xlu0 %v3174
      %v3176 = vpop.xlane.xlu0 %3175
      %v3177 = vmul.f32 %v3173, %v697
      %v3178 = vmul.f32 %v3176, %v697
      %v3179 = vsub.f32 %v3165, %v3177
      %v3180 = vsub.f32 %v3166, %v3178
      %v3181 = vmul.f32 %v3179, %v3179
      %v3182 = vmul.f32 %v3180, %v3180
      %v3183 = vsel %vm690, %v3181, 0.0
      %3184 = vadd.xlane.f32.xlu0 %v3183
      %v3185 = vpop.xlane.xlu0 %3184
      %v3186 = vsel %vm690, %v3182, 0.0
      %3187 = vadd.xlane.f32.xlu0 %v3186
      %v3188 = vpop.xlane.xlu0 %3187
      %v3189 = vmul.f32 %v3185, %v697
      %v3190 = vmul.f32 %v3188, %v697
      %v3191 = vadd.f32 %v3189, 1e-12
      %v3192 = vadd.f32 %v3190, 1e-12
      %v3193 = vrsqrt.pop %v3191
      %v3194 = vrsqrt.pop %v3192
      %v3195 = vmul.f32 %v3179, %v3193
      %v3196 = vmul.f32 %v3180, %v3194
      %v3198 = vlaneseq
      %v3199 = vshrl.u32 %v3198, 7
      %v3200 = vsub.s32 0, %v3199
      %v3201 = vrot.slane %v3168, %v3200
      %v3203 = vmul.f32 %v3195, %v3201
      %v3204 = vmul.f32 %v3196, %v3201
      %v3206 = vlaneseq
      %v3207 = vshrl.u32 %v3206, 7
      %v3208 = vsub.s32 0, %v3207
      %v3209 = vrot.slane %v3170, %v3208
      %v3211 = vadd.f32 %v3203, %v3209
      %v3212 = vadd.f32 %v3204, %v3209
      %s3213 = scalar_lea.vmem %s10, 16
      %v3214 = vld [vmem:[%s3213] sm:$0xf]
      %v3215 = vld [vmem:[%s3213 + $0x4] sm:$0xf]
      %v3216 = vld [vmem:[%s3213 + $0x8] sm:$0xf]
      %v3217 = vld [vmem:[%s3213 + $0xc] sm:$0xf]
      %v3218 = vpack.c.bf16 %v3212, %v3211
      %s3219 = scalar_lea.vmem %s11, 1
      %v3220 = vld [vmem:[%s3219] sm:$0x1]
      %v3222 = vlaneseq
      %v3223 = vshrl.u32 %v3222, 7
      %v3224 = vsub.s32 0, %v3223
      %v3225 = vrot.slane %v3220, %v3224
      %v3231 = vunpack.c.l.b16 %v3214
      %v3232 = vunpack.c.l.b16 %v3215
      %v3233 = vunpack.c.l.b16 %v3216
      %v3234 = vunpack.c.l.b16 %v3217
      %v3235 = vpack.c.b16 %v3232, %v3231
      %v3236 = vpack.c.b16 %v3234, %v3233
      %v3240 = vsel %vm690, %v3218, 0
      %3242 = vmatprep.subr.bf16.mxu0 0
      %3243 = vmatpush1.bf16.msra.mxu0 %v3235
      %3244 = vmatprep.subr.bf16.mxu0 0
      %3245 = vmatpush1.bf16.msra.mxu0 %v3236
      %3246 = vmatprep.subr.bf16.mxu0 0
      %3247 = vmatpush1.bf16.msra.mxu0 0
      %3248 = vmatprep.subr.bf16.mxu0 0
      %3249 = vmatpush1.bf16.msra.mxu0 0
      %3250 = vmatprep.subr.bf16.mxu0 0
      %3251 = vmatpush1.bf16.msra.mxu0 0
      %3252 = vmatprep.subr.bf16.mxu0 0
      %3253 = vmatpush1.bf16.msra.mxu0 0
      %3254 = vmatprep.subr.bf16.mxu0 0
      %3255 = vmatpush1.bf16.msra.mxu0 0
      %3256 = vmatprep.subr.bf16.mxu0 0
      %3257 = vmatpush1.bf16.msra.mxu0 0
      %3258 = vmatprep.subr.bf16.mxu0 0
      %3259 = vmatpush1.bf16.msra.mxu0 0
      %3260 = vmatprep.subr.bf16.mxu0 0
      %3261 = vmatpush1.bf16.msra.mxu0 0
      %3262 = vmatprep.subr.bf16.mxu0 0
      %3263 = vmatpush1.bf16.msra.mxu0 0
      %3264 = vmatprep.subr.bf16.mxu0 0
      %3265 = vmatpush1.bf16.msra.mxu0 0
      %3266 = vmatprep.subr.bf16.mxu0 0
      %3267 = vmatpush1.bf16.msra.mxu0 0
      %3268 = vmatprep.subr.bf16.mxu0 0
      %3269 = vmatpush1.bf16.msra.mxu0 0
      %3270 = vmatprep.subr.bf16.mxu0 0
      %3271 = vmatpush1.bf16.msra.mxu0 0
      %3272 = vmatprep.subr.bf16.mxu0 0
      %3273 = vmatpush1.bf16.msra.mxu0 0
      %3274 = vmatprep.mubr.bf16.mxu0 0
      %3275 = vmatmul.mubr.bf16.gmra.mrb[0].mxu0 %v3240
      %v3276 = vpop.f32.mrb[0].mxu0
      %v3277 = vadd.f32 %v3225, %v3276
      %v3278 = vpop.f32.mrb[0].mxu0
      %v3279 = vpop.f32.mrb[0].mxu0
      %v3280 = vadd.f32 %v3225, %v3279
      %v3281 = vpop.f32.mrb[0].mxu0
      %3282 = vdwg.mxu0
      %v3283 = vmul.f32 %v3277, %v3277
      %v3284 = vmul.f32 %v3280, %v3280
      %v3285 = vmul.f32 %v3277, %v3283
      %v3286 = vmul.f32 %v3280, %v3284
      %v3287 = vmul.f32 %v3285, 0.044715
      %v3288 = vmul.f32 %v3286, 0.044715
      %v3289 = vadd.f32 %v3277, %v3287
      %v3290 = vadd.f32 %v3280, %v3288
      %v3291 = vmul.f32 %v3289, 0.7978846
      %v3292 = vmul.f32 %v3290, 0.7978846
      %v3293 = vtanh.pop %v3291
      %v3294 = vtanh.pop %v3292
      %v3295 = vadd.f32 %v3293, 1.0
      %v3296 = vadd.f32 %v3294, 1.0
      %v3297 = vmul.f32 %v3295, 0.5
      %v3298 = vmul.f32 %v3296, 0.5
      %v3299 = vmul.f32 %v3277, %v3297
      %v3300 = vmul.f32 %v3280, %v3298
      %s3301 = scalar_lea.vmem %s12, 32
      %v3302 = vld [vmem:[%s3301] sm:$0xf]
      %v3303 = vld [vmem:[%s3301 + $0x4] sm:$0xf]
      %v3304 = vld [vmem:[%s3301 + $0x8] sm:$0xf]
      %v3305 = vld [vmem:[%s3301 + $0xc] sm:$0xf]
      %v3306 = vld [vmem:[%s3301 + $0x10] sm:$0xf]
      %v3307 = vld [vmem:[%s3301 + $0x14] sm:$0xf]
      %v3308 = vld [vmem:[%s3301 + $0x18] sm:$0xf]
      %v3309 = vld [vmem:[%s3301 + $0x1c] sm:$0xf]
      %v3310 = vpack.c.bf16 %v3300, %v3299
      %s3311 = scalar_lea.vmem %s13, 1
      %v3312 = vld [vmem:[%s3311] sm:$0x1]
      %v3314 = vlaneseq
      %v3315 = vshrl.u32 %v3314, 7
      %v3316 = vsub.s32 0, %v3315
      %v3317 = vrot.slane %v3312, %v3316
      %v3327 = vunpack.c.l.b16 %v3302
      %v3328 = vunpack.c.l.b16 %v3303
      %v3329 = vunpack.c.l.b16 %v3304
      %v3330 = vunpack.c.l.b16 %v3305
      %v3331 = vunpack.c.l.b16 %v3306
      %v3332 = vunpack.c.l.b16 %v3307
      %v3333 = vunpack.c.l.b16 %v3308
      %v3334 = vunpack.c.l.b16 %v3309
      %v3335 = vpack.c.b16 %v3328, %v3327
      %v3336 = vpack.c.b16 %v3330, %v3329
      %v3337 = vpack.c.b16 %v3332, %v3331
      %v3338 = vpack.c.b16 %v3334, %v3333
      %v3344 = vsel %vm2008, %v3310, 0
      %3346 = vmatprep.subr.bf16.mxu0 0
      %3347 = vmatpush1.bf16.msra.mxu0 %v3335
      %3348 = vmatprep.subr.bf16.mxu0 0
      %3349 = vmatpush1.bf16.msra.mxu0 %v3336
      %3350 = vmatprep.subr.bf16.mxu0 0
      %3351 = vmatpush1.bf16.msra.mxu0 %v3337
      %3352 = vmatprep.subr.bf16.mxu0 0
      %3353 = vmatpush1.bf16.msra.mxu0 %v3338
      %3354 = vmatprep.subr.bf16.mxu0 0
      %3355 = vmatpush1.bf16.msra.mxu0 0
      %3356 = vmatprep.subr.bf16.mxu0 0
      %3357 = vmatpush1.bf16.msra.mxu0 0
      %3358 = vmatprep.subr.bf16.mxu0 0
      %3359 = vmatpush1.bf16.msra.mxu0 0
      %3360 = vmatprep.subr.bf16.mxu0 0
      %3361 = vmatpush1.bf16.msra.mxu0 0
      %3362 = vmatprep.subr.bf16.mxu0 0
      %3363 = vmatpush1.bf16.msra.mxu0 0
      %3364 = vmatprep.subr.bf16.mxu0 0
      %3365 = vmatpush1.bf16.msra.mxu0 0
      %3366 = vmatprep.subr.bf16.mxu0 0
      %3367 = vmatpush1.bf16.msra.mxu0 0
      %3368 = vmatprep.subr.bf16.mxu0 0
      %3369 = vmatpush1.bf16.msra.mxu0 0
      %3370 = vmatprep.subr.bf16.mxu0 0
      %3371 = vmatpush1.bf16.msra.mxu0 0
      %3372 = vmatprep.subr.bf16.mxu0 0
      %3373 = vmatpush1.bf16.msra.mxu0 0
      %3374 = vmatprep.subr.bf16.mxu0 0
      %3375 = vmatpush1.bf16.msra.mxu0 0
      %3376 = vmatprep.subr.bf16.mxu0 0
      %3377 = vmatpush1.bf16.msra.mxu0 0
      %3378 = vmatprep.mubr.bf16.mxu0 0
      %3379 = vmatmul.mubr.bf16.gmra.mrb[0].mxu0 %v3344
      %v3380 = vpop.f32.mrb[0].mxu0
      %v3381 = vadd.f32 %v3317, %v3380
      %v3382 = vpop.f32.mrb[0].mxu0
      %v3383 = vpop.f32.mrb[0].mxu0
      %v3384 = vadd.f32 %v3317, %v3383
      %v3385 = vpop.f32.mrb[0].mxu0
      %3386 = vdwg.mxu0
      %v3387 = vadd.f32 %v3381, %v3211
      %v3388 = vadd.f32 %v3384, %v3212
      %s3389 = scalar_lea.vmem %s14, 1
      %v3390 = vld [vmem:[%s3389] sm:$0x1]
      %s3391 = scalar_lea.vmem %s15, 1
      %v3392 = vld [vmem:[%s3391] sm:$0x1]
      %v3393 = vsel %vm690, %v3387, 0.0
      %3394 = vadd.xlane.f32.xlu0 %v3393
      %v3395 = vpop.xlane.xlu0 %3394
      %v3396 = vsel %vm690, %v3388, 0.0
      %3397 = vadd.xlane.f32.xlu0 %v3396
      %v3398 = vpop.xlane.xlu0 %3397
      %v3399 = vmul.f32 %v3395, %v697
      %v3400 = vmul.f32 %v3398, %v697
      %v3401 = vsub.f32 %v3387, %v3399
      %v3402 = vsub.f32 %v3388, %v3400
      %v3403 = vmul.f32 %v3401, %v3401
      %v3404 = vmul.f32 %v3402, %v3402
      %v3405 = vsel %vm690, %v3403, 0.0
      %3406 = vadd.xlane.f32.xlu0 %v3405
      %v3407 = vpop.xlane.xlu0 %3406
      %v3408 = vsel %vm690, %v3404, 0.0
      %3409 = vadd.xlane.f32.xlu0 %v3408
      %v3410 = vpop.xlane.xlu0 %3409
      %v3411 = vmul.f32 %v3407, %v697
      %v3412 = vmul.f32 %v3410, %v697
      %v3413 = vadd.f32 %v3411, 1e-12
      %v3414 = vadd.f32 %v3412, 1e-12
      %v3415 = vrsqrt.pop %v3413
      %v3416 = vrsqrt.pop %v3414
      %v3417 = vmul.f32 %v3401, %v3415
      %v3418 = vmul.f32 %v3402, %v3416
      %v3420 = vlaneseq
      %v3421 = vshrl.u32 %v3420, 7
      %v3422 = vsub.s32 0, %v3421
      %v3423 = vrot.slane %v3390, %v3422
      %v3425 = vmul.f32 %v3417, %v3423
      %v3426 = vmul.f32 %v3418, %v3423
      %v3428 = vlaneseq
      %v3429 = vshrl.u32 %v3428, 7
      %v3430 = vsub.s32 0, %v3429
      %v3431 = vrot.slane %v3392, %v3430
      %v3433 = vadd.f32 %v3425, %v3431
      %v3434 = vadd.f32 %v3426, %v3431
      %v3435 = vld [vmem:[%s16] sm:$0xf]
      %v3436 = vld [vmem:[%s16 + $0x4] sm:$0xf]
      %v3437 = vld [vmem:[%s16 + $0x8] sm:$0xf]
      %v3438 = vld [vmem:[%s16 + $0xc] sm:$0xf]
      %v3439 = vpack.c.bf16 %v3433, %v3433
      %v3440 = vpack.c.bf16 %v3434, %v3434
      %v3441 = vld [vmem:[%s17] sm:$0x1]
      %v3443 = vlaneseq
      %v3444 = vshrl.u32 %v3443, 7
      %v3445 = vsub.s32 0, %v3444
      %v3446 = vrot.slane %v3441, %v3445
      %v3450 = vunpack.c.l.b16 %v3439
      %v3451 = vunpack.c.l.b16 %v3440
      %v3452 = vrot.slane %v3451, 7
      %vm3453 = vcmask 1041409
      %v3454 = vsel %vm3453, %v3452, %v3450
      %v3455 = vpack.c.b16 %v3454, %v3454
      %v3460 = vunpack.c.l.b16 %v3435
      %v3461 = vunpack.c.l.b16 %v3436
      %v3462 = vunpack.c.l.b16 %v3437
      %v3463 = vunpack.c.l.b16 %v3438
      %v3464 = vpack.c.b16 %v3461, %v3460
      %v3465 = vpack.c.b16 %v3463, %v3462
      %v3469 = vsel %vm690, %v3455, 0
      %3471 = vmatprep.subr.bf16.mxu0 0
      %3472 = vmatpush1.bf16.msra.mxu0 %v3464
      %3473 = vmatprep.subr.bf16.mxu0 0
      %3474 = vmatpush1.bf16.msra.mxu0 %v3465
      %3475 = vmatprep.subr.bf16.mxu0 0
      %3476 = vmatpush1.bf16.msra.mxu0 0
      %3477 = vmatprep.subr.bf16.mxu0 0
      %3478 = vmatpush1.bf16.msra.mxu0 0
      %3479 = vmatprep.subr.bf16.mxu0 0
      %3480 = vmatpush1.bf16.msra.mxu0 0
      %3481 = vmatprep.subr.bf16.mxu0 0
      %3482 = vmatpush1.bf16.msra.mxu0 0
      %3483 = vmatprep.subr.bf16.mxu0 0
      %3484 = vmatpush1.bf16.msra.mxu0 0
      %3485 = vmatprep.subr.bf16.mxu0 0
      %3486 = vmatpush1.bf16.msra.mxu0 0
      %3487 = vmatprep.subr.bf16.mxu0 0
      %3488 = vmatpush1.bf16.msra.mxu0 0
      %3489 = vmatprep.subr.bf16.mxu0 0
      %3490 = vmatpush1.bf16.msra.mxu0 0
      %3491 = vmatprep.subr.bf16.mxu0 0
      %3492 = vmatpush1.bf16.msra.mxu0 0
      %3493 = vmatprep.subr.bf16.mxu0 0
      %3494 = vmatpush1.bf16.msra.mxu0 0
      %3495 = vmatprep.subr.bf16.mxu0 0
      %3496 = vmatpush1.bf16.msra.mxu0 0
      %3497 = vmatprep.subr.bf16.mxu0 0
      %3498 = vmatpush1.bf16.msra.mxu0 0
      %3499 = vmatprep.subr.bf16.mxu0 0
      %3500 = vmatpush1.bf16.msra.mxu0 0
      %3501 = vmatprep.subr.bf16.mxu0 0
      %3502 = vmatpush1.bf16.msra.mxu0 0
      %3503 = vmatprep.mubr.bf16.mxu0 0
      %3504 = vmatmul.mubr.bf16.gmra.mrb[0].mxu0 %v3469
      %v3505 = vpop.f32.mrb[0].mxu0
      %v3506 = vadd.f32 %v3446, %v3505
      %v3507 = vpop.f32.mrb[0].mxu0
      %v3508 = vpop.f32.mrb[0].mxu0
      %v3509 = vpop.f32.mrb[0].mxu0
      %3510 = vdwg.mxu0
      %v3511 = vtanh.pop %v3506
      %v3512 = vld [vmem:[%s18] sm:$0xf]
      %v3513 = vld [vmem:[%s18 + $0x4] sm:$0xf]
      %v3514 = vld [vmem:[%s18 + $0x8] sm:$0xf]
      %v3515 = vld [vmem:[%s18 + $0xc] sm:$0xf]
      %v3516 = vpack.c.bf16 %v3511, %v3511
      %v3517 = vld [vmem:[#allocation2] sm:$0x1]
      %v3519 = vlaneseq
      %v3520 = vshrl.u32 %v3519, 7
      %v3521 = vsub.s32 0, %v3520
      %v3522 = vrot.slane %v3517, %v3521
      %v3528 = vunpack.c.l.b16 %v3512
      %v3529 = vunpack.c.l.b16 %v3513
      %v3530 = vunpack.c.l.b16 %v3514
      %v3531 = vunpack.c.l.b16 %v3515
      %v3532 = vpack.c.b16 %v3529, %v3528
      %v3533 = vpack.c.b16 %v3531, %v3530
      %v3537 = vsel %vm690, %v3516, 0
      %3539 = vmatprep.subr.bf16.mxu0 0
      %3540 = vmatpush1.bf16.msra.mxu0 %v3532
      %3541 = vmatprep.subr.bf16.mxu0 0
      %3542 = vmatpush1.bf16.msra.mxu0 %v3533
      %3543 = vmatprep.subr.bf16.mxu0 0
      %3544 = vmatpush1.bf16.msra.mxu0 0
      %3545 = vmatprep.subr.bf16.mxu0 0
      %3546 = vmatpush1.bf16.msra.mxu0 0
      %3547 = vmatprep.subr.bf16.mxu0 0
      %3548 = vmatpush1.bf16.msra.mxu0 0
      %3549 = vmatprep.subr.bf16.mxu0 0
      %3550 = vmatpush1.bf16.msra.mxu0 0
      %3551 = vmatprep.subr.bf16.mxu0 0
      %3552 = vmatpush1.bf16.msra.mxu0 0
      %3553 = vmatprep.subr.bf16.mxu0 0
      %3554 = vmatpush1.bf16.msra.mxu0 0
      %3555 = vmatprep.subr.bf16.mxu0 0
      %3556 = vmatpush1.bf16.msra.mxu0 0
      %3557 = vmatprep.subr.bf16.mxu0 0
      %3558 = vmatpush1.bf16.msra.mxu0 0
      %3559 = vmatprep.subr.bf16.mxu0 0
      %3560 = vmatpush1.bf16.msra.mxu0 0
      %3561 = vmatprep.subr.bf16.mxu0 0
      %3562 = vmatpush1.bf16.msra.mxu0 0
      %3563 = vmatprep.subr.bf16.mxu0 0
      %3564 = vmatpush1.bf16.msra.mxu0 0
      %3565 = vmatprep.subr.bf16.mxu0 0
      %3566 = vmatpush1.bf16.msra.mxu0 0
      %3567 = vmatprep.subr.bf16.mxu0 0
      %3568 = vmatpush1.bf16.msra.mxu0 0
      %3569 = vmatprep.subr.bf16.mxu0 0
      %3570 = vmatpush1.bf16.msra.mxu0 0
      %3571 = vmatprep.mubr.bf16.mxu0 0
      %3572 = vmatmul.mubr.bf16.gmra.mrb[0].mxu0 %v3537
      %v3573 = vpop.f32.mrb[0].mxu0
      %v3574 = vadd.f32 %v3522, %v3573
      %v3575 = vpop.f32.mrb[0].mxu0
      %v3576 = vpop.f32.mrb[0].mxu0
      %v3577 = vpop.f32.mrb[0].mxu0
      %3578 = vdwg.mxu0
      %vm3579 = vcmask 1024
      %3580 = vst.msk [vmem:[%s681] sm:$0x3] %vm3579, %v3574
      %v3582 = vrot.slane %v3574, 1
      %v3584 = vmax.f32 %v3574, %v3582
      %v3585 = vsub.f32 %v3574, %v3584
      %v3586 = vmul.f32 %v3585, 1.442695
      %v3587 = vpow.pop %v3586
      %v3589 = vrot.slane %v3584, 7
      %v3591 = vsub.f32 %v3574, %v3589
      %v3592 = vmul.f32 %v3591, 1.442695
      %v3593 = vpow.pop %v3592
      %v3595 = vrot.slane %v3593, 1
      %v3597 = vadd.f32 %v3587, %v3595
      %v3598 = vlog2.pop %v3597
      %v3599 = vmul.f32 %v3598, 0.6931472
      %v3600 = vadd.f32 %v3584, %v3599
      %v3601 = vsub.f32 %v3600, %v3574
      %vm3602 = vcmask 0
      %3603 = vst.msk [vmem:[%s684] sm:$0x1] %vm3602, %v3601
      %p3604 = scmp.lt.s32.totalorder %s35, 1
      %s3605 = scalar_select %p3604, %s35, 1
      %s3606 = smul.addr %s3605, 2
      %s3607 = scalar_lea.vmem %s20, %s3606
      %p3608 = scmp.lt.s32.totalorder %s35, 1
      %s3609 = scalar_select %p3608, %s35, 1
      %s3610 = scalar_lea.vmem %s21, %s3609
      // Predicated region
      $region101: #{reranker_forward.1} parent=99 // pred_check
        %p3611 = pneg %p483
      $region102: #{reranker_forward.1} parent=99 // pred_check_branch
        %3613 = sbr.rel (%p3611) target = $region104
      $region103: #{reranker_forward.1} parent=99 // pred_region
        _
      $region104: #{reranker_forward.1} parent=99 // pred_fallthru
        _
      // Predicated region
      $region105: #{reranker_forward.1} parent=99 // pred_check
        %p3614 = pneg %p509
      $region106: #{reranker_forward.1} parent=99 // pred_check_branch
        %3616 = sbr.rel (%p3614) target = $region108
      $region107: #{reranker_forward.1} parent=99 // pred_region
        _
      $region108: #{reranker_forward.1} parent=99 // pred_fallthru
        _
    $region100: #{reranker_forward.1} parent=5 // pred_fallthru
      _
    %p3617 = scmp.le.s32.totalorder 2, %s30
    // Predicated region
    $region109: #{reranker_forward.1} parent=5 // pred_check
      %p3618 = pneg %p3617
    $region110: #{reranker_forward.1} parent=5 // pred_check_branch
      %3620 = sbr.rel (%p3618) target = $region112
    $region111: #{reranker_forward.1} parent=5 // pred_region
      %s3621 = ssub.s32 %s30, 2
      // Predicated region
      $region113: #{reranker_forward.1} parent=111 // pred_check
        %p3622 = pneg %p489
      $region114: #{reranker_forward.1} parent=111 // pred_check_branch
        %3624 = sbr.rel (%p3622) target = $region116
      $region115: #{reranker_forward.1} parent=111 // pred_region
        %p3625 = scmp.lt.s32.totalorder %s36, 1
        %s3626 = scalar_select %p3625, %s36, 1
        %s3627 = smul.addr %s3626, 2
        %s3628 = scalar_lea.vmem %s20, %s3627
      $region116: #{reranker_forward.1} parent=111 // pred_fallthru
        _
      // Predicated region
      $region117: #{reranker_forward.1} parent=111 // pred_check
        %p3629 = pneg %p515
      $region118: #{reranker_forward.1} parent=111 // pred_check_branch
        %3631 = sbr.rel (%p3629) target = $region120
      $region119: #{reranker_forward.1} parent=111 // pred_region
        %p3632 = scmp.lt.s32.totalorder %s36, 1
        %s3633 = scalar_select %p3632, %s36, 1
        %s3634 = scalar_lea.vmem %s21, %s3633
      $region120: #{reranker_forward.1} parent=111 // pred_fallthru
        _
    $region112: #{reranker_forward.1} parent=5 // pred_fallthru
      _
  $region6: #{reranker_forward.1} parent=0 // loop_footer
    %s34 = sadd.s32 1, %s30
  $region7: #{reranker_forward.1} parent=0 // loop_footer_branch
    %29 = sbr.rel target = $region3
  $region8: #{reranker_forward.1} parent=0 // loop_exit
    _

</llo_original>
